<compile_context>
chip_gen: v7x
topology: tpu7x:2x2x1
jax: 0.10.0
libtpu: 0.0.40
codegen_flags: <defaults>
</compile_context>

<pallas_src>
import functools

import jax
import jax.numpy as jnp
from jax import lax
from jax.experimental import pallas as pl
from jax.experimental.pallas import tpu as pltpu

FEAT = 20                    # feature width of the module (Linear(20, 20))
ROWS_PER_X = 2               # each instance is a (2, 20) input
PACK = ROWS_PER_X * FEAT     # 40: one instance flattened to a single lane row

# Packed parameter slab layout (all sections start on 8-row boundaries).
ROW_M1 = 0                   # rows [0, 40)  : blockdiag(W.T @ rw, W.T @ rw)
ROW_W2 = 40                  # rows [40, 80) : blockdiag(W.T, W.T)
ROW_C1 = 80                  # row  80       : [b @ rw + 1, b @ rw + 1]
ROW_B2 = 88                  # row  88       : [b, b]
SLAB_ROWS = 96

DEFAULT_TILE = 1024          # instances per grid step (multiple of 8)


def fixed_hidden_mlp_kernel(x_ref, p_ref, out_ref):
    # x_ref: (TM, 40) -- TM flattened instances;  p_ref: (96, 40) packed params.
    x = x_ref[...]
    m1 = p_ref[ROW_M1:ROW_M1 + PACK, :]       # (40, 40) blockdiag(W.T @ rw)
    w2 = p_ref[ROW_W2:ROW_W2 + PACK, :]       # (40, 40) blockdiag(W.T)
    c1 = p_ref[ROW_C1:ROW_C1 + 1, :]          # (1, 40)  [b @ rw + 1] tiled
    b2 = p_ref[ROW_B2:ROW_B2 + 1, :]          # (1, 40)  [b] tiled

    # Fused layers 1+2 (per 20-chunk): relu((x @ W.T + b) @ rw + 1) == relu(x @ m1 + c1)
    h = jnp.maximum(jnp.dot(x, m1, preferred_element_type=jnp.float32) + c1, 0.0)
    # Shared linear applied again.
    f = jnp.dot(h, w2, preferred_element_type=jnp.float32) + b2       # (TM, 40)

    # Per-instance reductions: one instance == one row, so plain lane-sums.
    abs_sum = jnp.sum(jnp.abs(f), axis=1, keepdims=True)              # (TM, 1), >= 0
    total = jnp.sum(f, axis=1, keepdims=True)                         # (TM, 1)

    # while abs_sum > 1: halve  ->  closed form.  Halving is an exact exponent
    # decrement, so n = smallest n >= 0 with abs_sum <= 2**n, and scaling the
    # pre-computed sum by 2**-n is bit-exact vs. halving the array in a loop
    # (no subnormals at these magnitudes).  Assumes finite abs_sum < 2**126
    # (clamped); the module itself would never terminate on inf/nan.
    bits = pltpu.bitcast(abs_sum, jnp.int32)
    exp = (bits >> 23) & 0xFF                      # biased f32 exponent
    frac = bits & 0x7FFFFF
    n = jnp.where(frac == 0, exp - 127, exp - 126) # exact at 2**k boundaries
    n = jnp.clip(n, 0, 126)
    scale = pltpu.bitcast((127 - n) << 23, jnp.float32)   # exactly 2**-n
    out_ref[...] = total * scale                   # (TM, 1) per-instance results


def _round_up(v, m):
    return ((v + m - 1) // m) * m


@functools.partial(jax.jit, static_argnames=("tile",))
def fixed_hidden_mlp_batched(xs, w, b, rand_weight, *, tile=DEFAULT_TILE):
    """xs: (N, 2, 20) -> (N,) ; one FixedHiddenMLP.forward() per instance."""
    n, rows, feat = xs.shape
    assert rows == ROWS_PER_X and feat == FEAT

    wt = jnp.asarray(w, jnp.float32).T
    rw = jnp.asarray(rand_weight, jnp.float32)
    bf = jnp.asarray(b, jnp.float32)
    m1 = wt @ rw                                    # fuse linear -> rand_weight matmul
    c1 = bf @ rw + 1.0
    z = jnp.zeros((feat, feat), jnp.float32)
    m1p = jnp.block([[m1, z], [z, m1]])             # (40, 40) block-diagonal
    w2p = jnp.block([[wt, z], [z, wt]])

    slab = jnp.zeros((SLAB_ROWS, PACK), jnp.float32)
    slab = slab.at[ROW_M1:ROW_M1 + PACK].set(m1p)
    slab = slab.at[ROW_W2:ROW_W2 + PACK].set(w2p)
    slab = slab.at[ROW_C1].set(jnp.concatenate([c1, c1]))
    slab = slab.at[ROW_B2].set(jnp.concatenate([bf, bf]))

    # Flatten each (2, 20) instance into one 40-wide row (free, contiguous
    # reshape) and pad the instance count to a multiple of the tile.
    tm = int(tile)
    if n < tm:
        tm = max(8, _round_up(n, 8))                # shrink tile for tiny batches
    n_pad = _round_up(n, tm)
    x2d = jnp.reshape(jnp.asarray(xs, jnp.float32), (n, PACK))
    if n_pad != n:
        x2d = jnp.pad(x2d, ((0, n_pad - n), (0, 0)))

    out = pl.pallas_call(
        fixed_hidden_mlp_kernel,
        out_shape=jax.ShapeDtypeStruct((n_pad, 1), jnp.float32),
        grid_spec=pltpu.PrefetchScalarGridSpec(
            num_scalar_prefetch=0,
            grid=(n_pad // tm,),
            in_specs=[
                pl.BlockSpec((tm, PACK), lambda i: (i, 0)),
                pl.BlockSpec((SLAB_ROWS, PACK), lambda i: (0, 0)),  # resident slab
            ],
            out_specs=pl.BlockSpec((tm, 1), lambda i: (i, 0)),
        ),
        compiler_params=pltpu.CompilerParams(
            dimension_semantics=("parallel",)),     # >=2 blocks -> both TCs on v7x
    )(x2d, slab)
    return out[:n, 0]


def fixed_hidden_mlp(x, w, b, rand_weight):
    """Single-instance forward, identical to the PyTorch module's forward()."""
    return fixed_hidden_mlp_batched(x[None], w, b, rand_weight)[0]


def reference_single(x, w, b, rand_weight):
    """Pure-JAX reference following the original module op order exactly."""
    h = x @ w.T + b
    h = jnp.maximum(h @ rand_weight + 1.0, 0.0)
    h = h @ w.T + b
    h = lax.while_loop(lambda a: jnp.sum(jnp.abs(a)) > 1.0, lambda a: a / 2.0, h)
    return jnp.sum(h)


if __name__ == "__main__":
    key = jax.random.PRNGKey(0)
    k_x, k_rw, k_w, k_b = jax.random.split(key, 4)

    n_problems = 2000                       # pads to 2048 -> grid of 2 tiles
    # A batch of independent inputs, each like torch.rand(2, 20).
    xs = jax.random.uniform(k_x, (n_problems, ROWS_PER_X, FEAT), dtype=jnp.float32)
    # Fixed rand_weight: torch.rand((20, 20)).
    rand_weight = jax.random.uniform(k_rw, (FEAT, FEAT), dtype=jnp.float32)
    # nn.Linear(20, 20): weight (out, in), bias (out,), U(-1/sqrt(20), 1/sqrt(20)).
    bound = 1.0 / jnp.sqrt(jnp.float32(FEAT))
    w = jax.random.uniform(k_w, (FEAT, FEAT), jnp.float32, -bound, bound)
    b = jax.random.uniform(k_b, (FEAT,), jnp.float32, -bound, bound)

    out = jax.block_until_ready(fixed_hidden_mlp_batched(xs, w, b, rand_weight))
    ref_fn = jax.jit(jax.vmap(reference_single, in_axes=(0, None, None, None)))
    ref = jax.block_until_ready(ref_fn(xs, w, b, rand_weight))

    assert out.shape == (n_problems,)
    # The fused (W.T @ rw) accumulation order differs from the module's op order
    # by ~1e-6 relative; if an instance's abs-sum sits exactly on a power-of-two
    # boundary that can flip the halving count, so allow an exact factor-of-2
    # mismatch for those (expected: none) cases and require >=98% exact matches.
    exact = jnp.isclose(out, ref, rtol=1e-4, atol=1e-5)
    pow2 = (jnp.isclose(out, 2.0 * ref, rtol=1e-4, atol=1e-5)
            | jnp.isclose(out, 0.5 * ref, rtol=1e-4, atol=1e-5))
    assert bool(jnp.all(exact | pow2)), "kernel does not match reference"
    assert float(jnp.mean(exact)) > 0.98, "too many boundary mismatches"

    # Also exercise the single-instance (tile-shrink) path.
    single = jax.block_until_ready(fixed_hidden_mlp(xs[0], w, b, rand_weight))
    assert bool(jnp.isclose(single, out[0], rtol=1e-6, atol=1e-6))

    print("KERNEL_OK")
</pallas_src>

<mosaic_0001>
module attributes {stable_mosaic.version = 11 : i64} {
  func.func @fixed_hidden_mlp_kernel(%arg0: i32, %arg1: memref<1024x40xf32, #tpu.memory_space<vmem>>, %arg2: memref<96x40xf32, #tpu.memory_space<vmem>>, %arg3: memref<1024x1xf32, #tpu.memory_space<vmem>>) attributes {dimension_semantics = [#tpu.dimension_semantics<parallel>], iteration_bounds = array<i64: 2>, scalar_prefetch = 0 : i64, scratch_operands = 0 : i64, tpu.core_type = #tpu.core_type<tc>, window_params = [{transform_indices = @transform_0, window_bounds = array<i64: 1024, 40>}, {pipeline_mode = #tpu.pipeline_mode<synchronous>, transform_indices = @transform_1, window_bounds = array<i64: 96, 40>}, {transform_indices = @transform_2, window_bounds = array<i64: 1024, 1>}]} {
    %c0 = arith.constant 0 : index
    %c0_0 = arith.constant 0 : index
    %0 = vector.load %arg1[%c0, %c0_0] : memref<1024x40xf32, #tpu.memory_space<vmem>>, vector<1024x40xf32>
    %c0_1 = arith.constant 0 : index
    %c0_2 = arith.constant 0 : index
    %1 = vector.load %arg2[%c0_1, %c0_2] : memref<96x40xf32, #tpu.memory_space<vmem>>, vector<40x40xf32>
    %c40 = arith.constant 40 : index
    %c0_3 = arith.constant 0 : index
    %2 = vector.load %arg2[%c40, %c0_3] : memref<96x40xf32, #tpu.memory_space<vmem>>, vector<40x40xf32>
    %c80 = arith.constant 80 : index
    %c0_4 = arith.constant 0 : index
    %3 = vector.load %arg2[%c80, %c0_4] : memref<96x40xf32, #tpu.memory_space<vmem>>, vector<1x40xf32>
    %c88 = arith.constant 88 : index
    %c0_5 = arith.constant 0 : index
    %4 = vector.load %arg2[%c88, %c0_5] : memref<96x40xf32, #tpu.memory_space<vmem>>, vector<1x40xf32>
    %cst = arith.constant dense<0.000000e+00> : vector<1024x40xf32>
    %5 = tpu.matmul %0, %1, %cst {dimension_numbers = #tpu.dot_dimension_numbers<[1], [0], [0], [1], [0, 0, 1, 1], [], []>} : vector<1024x40xf32>, vector<40x40xf32>, vector<1024x40xf32> -> vector<1024x40xf32>
    %6 = vector.broadcast %3 : vector<1x40xf32> to vector<1024x40xf32>
    %7 = arith.addf %5, %6 : vector<1024x40xf32>
    %cst_6 = arith.constant 0.000000e+00 : f32
    %8 = vector.broadcast %cst_6 : f32 to vector<1024x40xf32>
    %9 = arith.maximumf %7, %8 : vector<1024x40xf32>
    %cst_7 = arith.constant dense<0.000000e+00> : vector<1024x40xf32>
    %10 = tpu.matmul %9, %2, %cst_7 {dimension_numbers = #tpu.dot_dimension_numbers<[1], [0], [0], [1], [0, 0, 1, 1], [], []>} : vector<1024x40xf32>, vector<40x40xf32>, vector<1024x40xf32> -> vector<1024x40xf32>
    %11 = vector.broadcast %4 : vector<1x40xf32> to vector<1024x40xf32>
    %12 = arith.addf %10, %11 : vector<1024x40xf32>
    %13 = math.absf %12 : vector<1024x40xf32>
    %cst_8 = arith.constant dense<0.000000e+00> : vector<1024xf32>
    %14 = vector.multi_reduction <add>, %13, %cst_8 [1] : vector<1024x40xf32> to vector<1024xf32>
    %15 = vector.shape_cast %14 : vector<1024xf32> to vector<1024x1xf32>
    %cst_9 = arith.constant dense<0.000000e+00> : vector<1024xf32>
    %16 = vector.multi_reduction <add>, %12, %cst_9 [1] : vector<1024x40xf32> to vector<1024xf32>
    %17 = vector.shape_cast %16 : vector<1024xf32> to vector<1024x1xf32>
    %18 = tpu.bitcast %15 : vector<1024x1xf32> -> vector<1024x1xi32>
    %c23_i32 = arith.constant 23 : i32
    %19 = vector.broadcast %c23_i32 : i32 to vector<1024x1xi32>
    %20 = arith.shrsi %18, %19 : vector<1024x1xi32>
    %c255_i32 = arith.constant 255 : i32
    %21 = vector.broadcast %c255_i32 : i32 to vector<1024x1xi32>
    %22 = arith.andi %20, %21 : vector<1024x1xi32>
    %c8388607_i32 = arith.constant 8388607 : i32
    %23 = vector.broadcast %c8388607_i32 : i32 to vector<1024x1xi32>
    %24 = arith.andi %18, %23 : vector<1024x1xi32>
    %c0_i32 = arith.constant 0 : i32
    %25 = vector.broadcast %c0_i32 : i32 to vector<1024x1xi32>
    %26 = arith.cmpi eq, %24, %25 : vector<1024x1xi32>
    %c127_i32 = arith.constant 127 : i32
    %27 = vector.broadcast %c127_i32 : i32 to vector<1024x1xi32>
    %28 = arith.subi %22, %27 : vector<1024x1xi32>
    %c126_i32 = arith.constant 126 : i32
    %29 = vector.broadcast %c126_i32 : i32 to vector<1024x1xi32>
    %30 = arith.subi %22, %29 : vector<1024x1xi32>
    %31 = arith.select %26, %28, %30 : vector<1024x1xi1>, vector<1024x1xi32>
    %c0_i32_10 = arith.constant 0 : i32
    %c126_i32_11 = arith.constant 126 : i32
    %32 = vector.broadcast %c0_i32_10 : i32 to vector<1024x1xi32>
    %33 = arith.maxsi %32, %31 : vector<1024x1xi32>
    %34 = vector.broadcast %c126_i32_11 : i32 to vector<1024x1xi32>
    %35 = arith.minsi %34, %33 : vector<1024x1xi32>
    %c127_i32_12 = arith.constant 127 : i32
    %36 = vector.broadcast %c127_i32_12 : i32 to vector<1024x1xi32>
    %37 = arith.subi %36, %35 : vector<1024x1xi32>
    %c23_i32_13 = arith.constant 23 : i32
    %38 = vector.broadcast %c23_i32_13 : i32 to vector<1024x1xi32>
    %39 = arith.shli %37, %38 : vector<1024x1xi32>
    %40 = tpu.bitcast %39 : vector<1024x1xi32> -> vector<1024x1xf32>
    %41 = arith.mulf %17, %40 : vector<1024x1xf32>
    %c0_14 = arith.constant 0 : index
    %c0_15 = arith.constant 0 : index
    %42 = vector.load %arg3[%c0_14, %c0_15] : memref<1024x1xf32, #tpu.memory_space<vmem>>, vector<1024x1xf32>
    tpu.vector_store %arg3[%c0_14, %c0_15], %41 {strides = array<i32>} : memref<1024x1xf32, #tpu.memory_space<vmem>>, vector<1024x1xf32>,
    return
  }
  func.func @transform_0(%arg0: i32) -> (i32, i32) {
    %c0_i32 = arith.constant 0 : i32
    %c0_i32_0 = arith.constant 0 : i32
    return %arg0, %c0_i32 : i32, i32
  }
  func.func @transform_1(%arg0: i32) -> (i32, i32) {
    %c0_i32 = arith.constant 0 : i32
    %c0_i32_0 = arith.constant 0 : i32
    %c0_i32_1 = arith.constant 0 : i32
    return %c0_i32, %c0_i32_0 : i32, i32
  }
  func.func @transform_2(%arg0: i32) -> (i32, i32) {
    %c0_i32 = arith.constant 0 : i32
    %c0_i32_0 = arith.constant 0 : i32
    return %arg0, %c0_i32 : i32, i32
  }
}

</mosaic_0001>

<llo_original>
// kernel: fixed_hidden_mlp_batched.1
$region0: #{fixed_hidden_mlp_batched.1}
  #allocation0 [shape = 'u32[]', space=smem, size = 0x4, offset = 0x4, fixed_abs, tag = 'smem constant byte address 0x4 - core index']
  #allocation1 [shape = 'u32[144,128]{1,0:T(1,128)}', space=vmem, size = 0x12000, scoped, tag = 'internal scratch']
  %s0 = inlined_call_operand.vmem [shape: f32[2048,40], index: 0, kind: input, shape index: {}]
  %s1 = inlined_call_operand.vmem [shape: f32[96,40], index: 1, kind: input, shape index: {}]
  %s2 = inlined_call_operand.vmem [shape: f32[2048,1], index: 2, kind: output, shape index: {}]
  %s3 = sld [smem:[#allocation0]]
  $region41: #{fixed_hidden_mlp_batched.1} parent=0
    _
  %s5 = ssub.s32 1, %s3
  %s6 = scalar_select 0, %s5, %s3
  loop: start=0, step=1, limit=4
  $region2: #{fixed_hidden_mlp_batched.1} parent=0 // loop_pre_header
    _
  $region3: #{fixed_hidden_mlp_batched.1} parent=0 // loop_header
    %s8 = sphi 0, %s12
    %p9 = scmp.ge.s32.totalorder %s8, 4
    %s18 = sphi 0, %s20
    %s21 = sphi 0, %s18
    %s22 = sphi 0, %s21
    %s38 = sphi 0, %s22
    %s42 = sphi 0, %s42
    %s44 = sphi 0, %s42
    %s45 = sphi 0, %s44
    %s59 = sphi 0, %s45
    %s65 = sphi 0, %s67
    %s68 = sphi 0, %s65
    %s69 = sphi 0, %s68
    %s85 = sphi 0, %s69
  $region4: #{fixed_hidden_mlp_batched.1} parent=0 // loop_header_branch
    %11 = sbr.rel (%p9) target = $region8
  $region5: #{fixed_hidden_mlp_batched.1} parent=0 // loop_body
    %s13 = ssub.s32 %s8, 1
    %s14 = ssub.s32 %s8, 2
    %s15 = sadd.s32 %s8, 1
    %s16 = ssub.s32 %s8, %s15
    %p17 = scmp.eq.s32.totalorder %s16, 0
    %s19 = sadd.s32 %s18, 1
    %s20 = scalar_select %p17, %s18, %s19
    %p23 = pneg %p17
    %p24 = scmp.eq.s32.totalorder %s8, 1
    %p25 = por %p23, %p24
    %p26 = scmp.ne.s32.totalorder %s18, %s21
    %p27 = scmp.eq.s32.totalorder %s8, 0
    %p28 = por %p26, %p27
    %p29 = scmp.ne.s32.totalorder %s18, %s21
    %p30 = scmp.eq.s32.totalorder %s13, 1
    %p31 = por %p29, %p30
    %p32 = scmp.ne.s32.totalorder %s21, %s22
    %p33 = scmp.eq.s32.totalorder %s13, 0
    %p34 = por %p32, %p33
    %p35 = scmp.ne.s32.totalorder %s21, %s22
    %p36 = scmp.eq.s32.totalorder %s14, 1
    %p37 = por %p35, %p36
    %p39 = scmp.ne.s32.totalorder %s22, %s38
    %p40 = scmp.eq.s32.totalorder %s14, 0
    %p41 = por %p39, %p40
    %s43 = sadd.s32 %s42, 1
    %p46 = scmp.eq.s32.totalorder %s8, 1
    %p47 = scmp.ne.s32.totalorder %s42, %s44
    %p48 = scmp.eq.s32.totalorder %s8, 0
    %p49 = por %p47, %p48
    %p50 = scmp.ne.s32.totalorder %s42, %s44
    %p51 = scmp.eq.s32.totalorder %s13, 1
    %p52 = por %p50, %p51
    %p53 = scmp.ne.s32.totalorder %s44, %s45
    %p54 = scmp.eq.s32.totalorder %s13, 0
    %p55 = por %p53, %p54
    %p56 = scmp.ne.s32.totalorder %s44, %s45
    %p57 = scmp.eq.s32.totalorder %s14, 1
    %p58 = por %p56, %p57
    %p60 = scmp.ne.s32.totalorder %s45, %s59
    %p61 = scmp.eq.s32.totalorder %s14, 0
    %p62 = por %p60, %p61
    %s63 = ssub.s32 %s8, %s15
    %p64 = scmp.eq.s32.totalorder %s63, 0
    %s66 = sadd.s32 %s65, 1
    %s67 = scalar_select %p64, %s65, %s66
    %p70 = pneg %p64
    %p71 = scmp.eq.s32.totalorder %s8, 1
    %p72 = por %p70, %p71
    %p73 = scmp.ne.s32.totalorder %s65, %s68
    %p74 = scmp.eq.s32.totalorder %s8, 0
    %p75 = por %p73, %p74
    %p76 = scmp.ne.s32.totalorder %s65, %s68
    %p77 = scmp.eq.s32.totalorder %s13, 1
    %p78 = por %p76, %p77
    %p79 = scmp.ne.s32.totalorder %s68, %s69
    %p80 = scmp.eq.s32.totalorder %s13, 0
    %p81 = por %p79, %p80
    %p82 = scmp.ne.s32.totalorder %s68, %s69
    %p83 = scmp.eq.s32.totalorder %s14, 1
    %p84 = por %p82, %p83
    %p86 = scmp.ne.s32.totalorder %s69, %s85
    %p87 = scmp.eq.s32.totalorder %s14, 0
    %p88 = por %p86, %p87
    %p89 = scmp.le.s32.totalorder 1, %s8
    %p90 = scmp.lt.s32.totalorder %s8, 3
    %p91 = pnand %p89, %p90
    %p92 = pneg %p91
    // Predicated region
    $region9: #{fixed_hidden_mlp_batched.1} parent=5 // pred_check
      _
    $region10: #{fixed_hidden_mlp_batched.1} parent=5 // pred_check_branch
      %94 = sbr.rel (%p91) target = $region12
    $region11: #{fixed_hidden_mlp_batched.1} parent=5 // pred_region
      %s95 = ssub.s32 %s8, 1
      // Predicated region
      $region13: #{fixed_hidden_mlp_batched.1} parent=11 // pred_check
        %p96 = pneg %p55
      $region14: #{fixed_hidden_mlp_batched.1} parent=11 // pred_check_branch
        %98 = sbr.rel (%p96) target = $region16
      $region15: #{fixed_hidden_mlp_batched.1} parent=11 // pred_region
        _
      $region16: #{fixed_hidden_mlp_batched.1} parent=11 // pred_fallthru
        _
    $region12: #{fixed_hidden_mlp_batched.1} parent=5 // pred_fallthru
      _
    %p99 = scmp.lt.s32.totalorder %s8, 2
    // Predicated region
    $region17: #{fixed_hidden_mlp_batched.1} parent=5 // pred_check
      %p100 = pneg %p99
    $region18: #{fixed_hidden_mlp_batched.1} parent=5 // pred_check_branch
      %102 = sbr.rel (%p100) target = $region20
    $region19: #{fixed_hidden_mlp_batched.1} parent=5 // pred_region
      // Predicated region
      $region21: #{fixed_hidden_mlp_batched.1} parent=19 // pred_check
        %p103 = pneg %p28
      $region22: #{fixed_hidden_mlp_batched.1} parent=19 // pred_check_branch
        %105 = sbr.rel (%p103) target = $region24
      $region23: #{fixed_hidden_mlp_batched.1} parent=19 // pred_region
        %s106 = smul.u32 128, %s8
        %p107 = scmp.lt.s32.totalorder %s106, 255
        %s108 = scalar_select %p107, %s106, 255
        %s109 = smul.addr %s108, 8
        %s110 = scalar_lea.vmem %s0, %s109
        %s111 = smul.u32 128, %s8
      $region24: #{fixed_hidden_mlp_batched.1} parent=19 // pred_fallthru
        _
    $region20: #{fixed_hidden_mlp_batched.1} parent=5 // pred_fallthru
      _
    %p112 = scmp.le.s32.totalorder 1, %s8
    %p113 = scmp.lt.s32.totalorder %s8, 3
    %p114 = pnand %p112, %p113
    %p115 = pneg %p114
    // Predicated region
    $region25: #{fixed_hidden_mlp_batched.1} parent=5 // pred_check
      _
    $region26: #{fixed_hidden_mlp_batched.1} parent=5 // pred_check_branch
      %117 = sbr.rel (%p114) target = $region28
    $region27: #{fixed_hidden_mlp_batched.1} parent=5 // pred_region
      %s118 = ssub.s32 %s8, 1
      %s119 = smul.u32 128, %s13
      %p120 = scmp.lt.s32.totalorder %s119, 255
      %s121 = scalar_select %p120, %s119, 255
      %s122 = smul.addr %s121, 8
      %s123 = scalar_lea.vmem %s0, %s122
      %p124 = pneg %p34
      %p125 = pneg %p31
      %p126 = pneg %p55
      %p127 = pneg %p52
      %p128 = pneg %p81
      %p129 = pneg %p78
      %s130 = smul.u32 128, %s13
      %p131 = scmp.lt.s32.totalorder %s130, 255
      %s132 = scalar_select %p131, %s130, 255
      %s133 = smul.addr %s132, 8
      %s134 = scalar_lea.vmem %s2, %s133
      %s135 = smul.u32 128, %s13
      %p136 = scmp.lt.s32.totalorder %s135, 255
      %s137 = scalar_select %p136, %s135, 255
      %s138 = smul.addr %s137, 8
      %s139 = scalar_lea.vmem %s0, %s138
      %s140 = smul.u32 128, %s13
      %s141 = smul.u32 128, %s13
      %p142 = scmp.lt.s32.totalorder %s141, 255
      %s143 = scalar_select %p142, %s141, 255
      %s144 = smul.addr %s143, 8
      %s145 = scalar_lea.vmem %s2, %s144
      %s146 = smul.u32 128, %s13
      %v147 = vld [vmem:[%s139] sm:$0xff]
      %v148 = vld [vmem:[%s139 + $0x8] sm:$0xff]
      %v149 = vld [vmem:[%s139 + $0x10] sm:$0xff]
      %v150 = vld [vmem:[%s139 + $0x18] sm:$0xff]
      %v151 = vld [vmem:[%s139 + $0x20] sm:$0xff]
      %v152 = vld [vmem:[%s139 + $0x28] sm:$0xff]
      %v153 = vld [vmem:[%s139 + $0x30] sm:$0xff]
      %v154 = vld [vmem:[%s139 + $0x38] sm:$0xff]
      %v155 = vld [vmem:[%s139 + $0x40] sm:$0xff]
      %v156 = vld [vmem:[%s139 + $0x48] sm:$0xff]
      %v157 = vld [vmem:[%s139 + $0x50] sm:$0xff]
      %v158 = vld [vmem:[%s139 + $0x58] sm:$0xff]
      %v159 = vld [vmem:[%s139 + $0x60] sm:$0xff]
      %v160 = vld [vmem:[%s139 + $0x68] sm:$0xff]
      %v161 = vld [vmem:[%s139 + $0x70] sm:$0xff]
      %v162 = vld [vmem:[%s139 + $0x78] sm:$0xff]
      %v163 = vld [vmem:[%s139 + $0x80] sm:$0xff]
      %v164 = vld [vmem:[%s139 + $0x88] sm:$0xff]
      %v165 = vld [vmem:[%s139 + $0x90] sm:$0xff]
      %v166 = vld [vmem:[%s139 + $0x98] sm:$0xff]
      %v167 = vld [vmem:[%s139 + $0xa0] sm:$0xff]
      %v168 = vld [vmem:[%s139 + $0xa8] sm:$0xff]
      %v169 = vld [vmem:[%s139 + $0xb0] sm:$0xff]
      %v170 = vld [vmem:[%s139 + $0xb8] sm:$0xff]
      %v171 = vld [vmem:[%s139 + $0xc0] sm:$0xff]
      %v172 = vld [vmem:[%s139 + $0xc8] sm:$0xff]
      %v173 = vld [vmem:[%s139 + $0xd0] sm:$0xff]
      %v174 = vld [vmem:[%s139 + $0xd8] sm:$0xff]
      %v175 = vld [vmem:[%s139 + $0xe0] sm:$0xff]
      %v176 = vld [vmem:[%s139 + $0xe8] sm:$0xff]
      %v177 = vld [vmem:[%s139 + $0xf0] sm:$0xff]
      %v178 = vld [vmem:[%s139 + $0xf8] sm:$0xff]
      %v179 = vld [vmem:[%s139 + $0x100] sm:$0xff]
      %v180 = vld [vmem:[%s139 + $0x108] sm:$0xff]
      %v181 = vld [vmem:[%s139 + $0x110] sm:$0xff]
      %v182 = vld [vmem:[%s139 + $0x118] sm:$0xff]
      %v183 = vld [vmem:[%s139 + $0x120] sm:$0xff]
      %v184 = vld [vmem:[%s139 + $0x128] sm:$0xff]
      %v185 = vld [vmem:[%s139 + $0x130] sm:$0xff]
      %v186 = vld [vmem:[%s139 + $0x138] sm:$0xff]
      %v187 = vld [vmem:[%s139 + $0x140] sm:$0xff]
      %v188 = vld [vmem:[%s139 + $0x148] sm:$0xff]
      %v189 = vld [vmem:[%s139 + $0x150] sm:$0xff]
      %v190 = vld [vmem:[%s139 + $0x158] sm:$0xff]
      %v191 = vld [vmem:[%s139 + $0x160] sm:$0xff]
      %v192 = vld [vmem:[%s139 + $0x168] sm:$0xff]
      %v193 = vld [vmem:[%s139 + $0x170] sm:$0xff]
      %v194 = vld [vmem:[%s139 + $0x178] sm:$0xff]
      %v195 = vld [vmem:[%s139 + $0x180] sm:$0xff]
      %v196 = vld [vmem:[%s139 + $0x188] sm:$0xff]
      %v197 = vld [vmem:[%s139 + $0x190] sm:$0xff]
      %v198 = vld [vmem:[%s139 + $0x198] sm:$0xff]
      %v199 = vld [vmem:[%s139 + $0x1a0] sm:$0xff]
      %v200 = vld [vmem:[%s139 + $0x1a8] sm:$0xff]
      %v201 = vld [vmem:[%s139 + $0x1b0] sm:$0xff]
      %v202 = vld [vmem:[%s139 + $0x1b8] sm:$0xff]
      %v203 = vld [vmem:[%s139 + $0x1c0] sm:$0xff]
      %v204 = vld [vmem:[%s139 + $0x1c8] sm:$0xff]
      %v205 = vld [vmem:[%s139 + $0x1d0] sm:$0xff]
      %v206 = vld [vmem:[%s139 + $0x1d8] sm:$0xff]
      %v207 = vld [vmem:[%s139 + $0x1e0] sm:$0xff]
      %v208 = vld [vmem:[%s139 + $0x1e8] sm:$0xff]
      %v209 = vld [vmem:[%s139 + $0x1f0] sm:$0xff]
      %v210 = vld [vmem:[%s139 + $0x1f8] sm:$0xff]
      %v211 = vld [vmem:[%s139 + $0x200] sm:$0xff]
      %v212 = vld [vmem:[%s139 + $0x208] sm:$0xff]
      %v213 = vld [vmem:[%s139 + $0x210] sm:$0xff]
      %v214 = vld [vmem:[%s139 + $0x218] sm:$0xff]
      %v215 = vld [vmem:[%s139 + $0x220] sm:$0xff]
      %v216 = vld [vmem:[%s139 + $0x228] sm:$0xff]
      %v217 = vld [vmem:[%s139 + $0x230] sm:$0xff]
      %v218 = vld [vmem:[%s139 + $0x238] sm:$0xff]
      %v219 = vld [vmem:[%s139 + $0x240] sm:$0xff]
      %v220 = vld [vmem:[%s139 + $0x248] sm:$0xff]
      %v221 = vld [vmem:[%s139 + $0x250] sm:$0xff]
      %v222 = vld [vmem:[%s139 + $0x258] sm:$0xff]
      %v223 = vld [vmem:[%s139 + $0x260] sm:$0xff]
      %v224 = vld [vmem:[%s139 + $0x268] sm:$0xff]
      %v225 = vld [vmem:[%s139 + $0x270] sm:$0xff]
      %v226 = vld [vmem:[%s139 + $0x278] sm:$0xff]
      %v227 = vld [vmem:[%s139 + $0x280] sm:$0xff]
      %v228 = vld [vmem:[%s139 + $0x288] sm:$0xff]
      %v229 = vld [vmem:[%s139 + $0x290] sm:$0xff]
      %v230 = vld [vmem:[%s139 + $0x298] sm:$0xff]
      %v231 = vld [vmem:[%s139 + $0x2a0] sm:$0xff]
      %v232 = vld [vmem:[%s139 + $0x2a8] sm:$0xff]
      %v233 = vld [vmem:[%s139 + $0x2b0] sm:$0xff]
      %v234 = vld [vmem:[%s139 + $0x2b8] sm:$0xff]
      %v235 = vld [vmem:[%s139 + $0x2c0] sm:$0xff]
      %v236 = vld [vmem:[%s139 + $0x2c8] sm:$0xff]
      %v237 = vld [vmem:[%s139 + $0x2d0] sm:$0xff]
      %v238 = vld [vmem:[%s139 + $0x2d8] sm:$0xff]
      %v239 = vld [vmem:[%s139 + $0x2e0] sm:$0xff]
      %v240 = vld [vmem:[%s139 + $0x2e8] sm:$0xff]
      %v241 = vld [vmem:[%s139 + $0x2f0] sm:$0xff]
      %v242 = vld [vmem:[%s139 + $0x2f8] sm:$0xff]
      %v243 = vld [vmem:[%s139 + $0x300] sm:$0xff]
      %v244 = vld [vmem:[%s139 + $0x308] sm:$0xff]
      %v245 = vld [vmem:[%s139 + $0x310] sm:$0xff]
      %v246 = vld [vmem:[%s139 + $0x318] sm:$0xff]
      %v247 = vld [vmem:[%s139 + $0x320] sm:$0xff]
      %v248 = vld [vmem:[%s139 + $0x328] sm:$0xff]
      %v249 = vld [vmem:[%s139 + $0x330] sm:$0xff]
      %v250 = vld [vmem:[%s139 + $0x338] sm:$0xff]
      %v251 = vld [vmem:[%s139 + $0x340] sm:$0xff]
      %v252 = vld [vmem:[%s139 + $0x348] sm:$0xff]
      %v253 = vld [vmem:[%s139 + $0x350] sm:$0xff]
      %v254 = vld [vmem:[%s139 + $0x358] sm:$0xff]
      %v255 = vld [vmem:[%s139 + $0x360] sm:$0xff]
      %v256 = vld [vmem:[%s139 + $0x368] sm:$0xff]
      %v257 = vld [vmem:[%s139 + $0x370] sm:$0xff]
      %v258 = vld [vmem:[%s139 + $0x378] sm:$0xff]
      %v259 = vld [vmem:[%s139 + $0x380] sm:$0xff]
      %v260 = vld [vmem:[%s139 + $0x388] sm:$0xff]
      %v261 = vld [vmem:[%s139 + $0x390] sm:$0xff]
      %v262 = vld [vmem:[%s139 + $0x398] sm:$0xff]
      %v263 = vld [vmem:[%s139 + $0x3a0] sm:$0xff]
      %v264 = vld [vmem:[%s139 + $0x3a8] sm:$0xff]
      %v265 = vld [vmem:[%s139 + $0x3b0] sm:$0xff]
      %v266 = vld [vmem:[%s139 + $0x3b8] sm:$0xff]
      %v267 = vld [vmem:[%s139 + $0x3c0] sm:$0xff]
      %v268 = vld [vmem:[%s139 + $0x3c8] sm:$0xff]
      %v269 = vld [vmem:[%s139 + $0x3d0] sm:$0xff]
      %v270 = vld [vmem:[%s139 + $0x3d8] sm:$0xff]
      %v271 = vld [vmem:[%s139 + $0x3e0] sm:$0xff]
      %v272 = vld [vmem:[%s139 + $0x3e8] sm:$0xff]
      %v273 = vld [vmem:[%s139 + $0x3f0] sm:$0xff]
      %v274 = vld [vmem:[%s139 + $0x3f8] sm:$0xff]
      %v275 = vld [vmem:[%s1] sm:$0xff]
      %v276 = vld [vmem:[%s1 + $0x8] sm:$0xff]
      %v277 = vld [vmem:[%s1 + $0x10] sm:$0xff]
      %v278 = vld [vmem:[%s1 + $0x18] sm:$0xff]
      %v279 = vld [vmem:[%s1 + $0x20] sm:$0xff]
      %v280 = vld [vmem:[%s1 + $0x28] sm:$0xff]
      %v281 = vld [vmem:[%s1 + $0x30] sm:$0xff]
      %v282 = vld [vmem:[%s1 + $0x38] sm:$0xff]
      %v283 = vld [vmem:[%s1 + $0x40] sm:$0xff]
      %v284 = vld [vmem:[%s1 + $0x48] sm:$0xff]
      %v285 = vld [vmem:[%s1 + $0x50] sm:$0x1]
      %v286 = vld [vmem:[%s1 + $0x58] sm:$0x1]
      %v287 = vlaneseq
      %v288 = vshrl.u32 %v287, 7
      %v289 = vsub.s32 0, %v288
      %v290 = vrot.slane %v285, %v289
      %vm291 = vcmask 326656
      %v293 = vsel %vm291, %v147, 0
      %v296 = vsel %vm291, %v148, 0
      %v299 = vsel %vm291, %v149, 0
      %v302 = vsel %vm291, %v150, 0
      %v305 = vsel %vm291, %v151, 0
      %v308 = vsel %vm291, %v152, 0
      %v311 = vsel %vm291, %v153, 0
      %v314 = vsel %vm291, %v154, 0
      %v317 = vsel %vm291, %v155, 0
      %v320 = vsel %vm291, %v156, 0
      %v323 = vsel %vm291, %v157, 0
      %v326 = vsel %vm291, %v158, 0
      %v329 = vsel %vm291, %v159, 0
      %v332 = vsel %vm291, %v160, 0
      %v335 = vsel %vm291, %v161, 0
      %v338 = vsel %vm291, %v162, 0
      %v341 = vsel %vm291, %v163, 0
      %v344 = vsel %vm291, %v164, 0
      %v347 = vsel %vm291, %v165, 0
      %v350 = vsel %vm291, %v166, 0
      %v353 = vsel %vm291, %v167, 0
      %v356 = vsel %vm291, %v168, 0
      %v359 = vsel %vm291, %v169, 0
      %v362 = vsel %vm291, %v170, 0
      %v365 = vsel %vm291, %v171, 0
      %v368 = vsel %vm291, %v172, 0
      %v371 = vsel %vm291, %v173, 0
      %v374 = vsel %vm291, %v174, 0
      %v377 = vsel %vm291, %v175, 0
      %v380 = vsel %vm291, %v176, 0
      %v383 = vsel %vm291, %v177, 0
      %v386 = vsel %vm291, %v178, 0
      %v389 = vsel %vm291, %v179, 0
      %v392 = vsel %vm291, %v180, 0
      %v395 = vsel %vm291, %v181, 0
      %v398 = vsel %vm291, %v182, 0
      %v401 = vsel %vm291, %v183, 0
      %v404 = vsel %vm291, %v184, 0
      %v407 = vsel %vm291, %v185, 0
      %v410 = vsel %vm291, %v186, 0
      %v413 = vsel %vm291, %v187, 0
      %v416 = vsel %vm291, %v188, 0
      %v419 = vsel %vm291, %v189, 0
      %v422 = vsel %vm291, %v190, 0
      %v425 = vsel %vm291, %v191, 0
      %v428 = vsel %vm291, %v192, 0
      %v431 = vsel %vm291, %v193, 0
      %v434 = vsel %vm291, %v194, 0
      %v437 = vsel %vm291, %v195, 0
      %v440 = vsel %vm291, %v196, 0
      %v443 = vsel %vm291, %v197, 0
      %v446 = vsel %vm291, %v198, 0
      %v449 = vsel %vm291, %v199, 0
      %v452 = vsel %vm291, %v200, 0
      %v455 = vsel %vm291, %v201, 0
      %v458 = vsel %vm291, %v202, 0
      %v461 = vsel %vm291, %v203, 0
      %v464 = vsel %vm291, %v204, 0
      %v467 = vsel %vm291, %v205, 0
      %v470 = vsel %vm291, %v206, 0
      %v473 = vsel %vm291, %v207, 0
      %v476 = vsel %vm291, %v208, 0
      %v479 = vsel %vm291, %v209, 0
      %v482 = vsel %vm291, %v210, 0
      %v485 = vsel %vm291, %v211, 0
      %v488 = vsel %vm291, %v212, 0
      %v491 = vsel %vm291, %v213, 0
      %v494 = vsel %vm291, %v214, 0
      %v497 = vsel %vm291, %v215, 0
      %v500 = vsel %vm291, %v216, 0
      %v503 = vsel %vm291, %v217, 0
      %v506 = vsel %vm291, %v218, 0
      %v509 = vsel %vm291, %v219, 0
      %v512 = vsel %vm291, %v220, 0
      %v515 = vsel %vm291, %v221, 0
      %v518 = vsel %vm291, %v222, 0
      %v521 = vsel %vm291, %v223, 0
      %v524 = vsel %vm291, %v224, 0
      %v527 = vsel %vm291, %v225, 0
      %v530 = vsel %vm291, %v226, 0
      %v533 = vsel %vm291, %v227, 0
      %v536 = vsel %vm291, %v228, 0
      %v539 = vsel %vm291, %v229, 0
      %v542 = vsel %vm291, %v230, 0
      %v545 = vsel %vm291, %v231, 0
      %v548 = vsel %vm291, %v232, 0
      %v551 = vsel %vm291, %v233, 0
      %v554 = vsel %vm291, %v234, 0
      %v557 = vsel %vm291, %v235, 0
      %v560 = vsel %vm291, %v236, 0
      %v563 = vsel %vm291, %v237, 0
      %v566 = vsel %vm291, %v238, 0
      %v569 = vsel %vm291, %v239, 0
      %v572 = vsel %vm291, %v240, 0
      %v575 = vsel %vm291, %v241, 0
      %v578 = vsel %vm291, %v242, 0
      %v581 = vsel %vm291, %v243, 0
      %v584 = vsel %vm291, %v244, 0
      %v587 = vsel %vm291, %v245, 0
      %v590 = vsel %vm291, %v246, 0
      %v593 = vsel %vm291, %v247, 0
      %v596 = vsel %vm291, %v248, 0
      %v599 = vsel %vm291, %v249, 0
      %v602 = vsel %vm291, %v250, 0
      %v605 = vsel %vm291, %v251, 0
      %v608 = vsel %vm291, %v252, 0
      %v611 = vsel %vm291, %v253, 0
      %v614 = vsel %vm291, %v254, 0
      %v617 = vsel %vm291, %v255, 0
      %v620 = vsel %vm291, %v256, 0
      %v623 = vsel %vm291, %v257, 0
      %v626 = vsel %vm291, %v258, 0
      %v629 = vsel %vm291, %v259, 0
      %v632 = vsel %vm291, %v260, 0
      %v635 = vsel %vm291, %v261, 0
      %v638 = vsel %vm291, %v262, 0
      %v641 = vsel %vm291, %v263, 0
      %v644 = vsel %vm291, %v264, 0
      %v647 = vsel %vm291, %v265, 0
      %v650 = vsel %vm291, %v266, 0
      %v653 = vsel %vm291, %v267, 0
      %v656 = vsel %vm291, %v268, 0
      %v659 = vsel %vm291, %v269, 0
      %v662 = vsel %vm291, %v270, 0
      %v665 = vsel %vm291, %v271, 0
      %v668 = vsel %vm291, %v272, 0
      %v671 = vsel %vm291, %v273, 0
      %v674 = vsel %vm291, %v274, 0
      %676 = vmatprep.subr.mxu0 0.0
      %677 = vmatpush1.msra.mxu0 %v275
      %678 = vmatprep.subr.mxu0 0.0
      %679 = vmatpush1.msra.mxu0 %v276
      %680 = vmatprep.subr.mxu0 0.0
      %681 = vmatpush1.msra.mxu0 %v277
      %682 = vmatprep.subr.mxu0 0.0
      %683 = vmatpush1.msra.mxu0 %v278
      %684 = vmatprep.subr.mxu0 0.0
      %685 = vmatpush1.msra.mxu0 %v279
      %686 = vmatprep.subr.mxu0 0.0
      %687 = vmatpush1.msra.mxu0 0.0
      %688 = vmatprep.subr.mxu0 0.0
      %689 = vmatpush1.msra.mxu0 0.0
      %690 = vmatprep.subr.mxu0 0.0
      %691 = vmatpush1.msra.mxu0 0.0
      %692 = vmatprep.subr.mxu0 0.0
      %693 = vmatpush1.msra.mxu0 0.0
      %694 = vmatprep.subr.mxu0 0.0
      %695 = vmatpush1.msra.mxu0 0.0
      %696 = vmatprep.subr.mxu0 0.0
      %697 = vmatpush1.msra.mxu0 0.0
      %698 = vmatprep.subr.mxu0 0.0
      %699 = vmatpush1.msra.mxu0 0.0
      %700 = vmatprep.subr.mxu0 0.0
      %701 = vmatpush1.msra.mxu0 0.0
      %702 = vmatprep.subr.mxu0 0.0
      %703 = vmatpush1.msra.mxu0 0.0
      %704 = vmatprep.subr.mxu0 0.0
      %705 = vmatpush1.msra.mxu0 0.0
      %706 = vmatprep.subr.mxu0 0.0
      %707 = vmatpush1.msra.mxu0 0.0
      %708 = vmatprep.subr.mxu0 0.0
      %709 = vmatpush1.msra.mxu0 0.0
      %710 = vmatprep.subr.mxu0 0.0
      %711 = vmatpush1.msra.mxu0 0.0
      %712 = vmatprep.subr.mxu0 0.0
      %713 = vmatpush1.msra.mxu0 0.0
      %714 = vmatprep.subr.mxu0 0.0
      %715 = vmatpush1.msra.mxu0 0.0
      %716 = vmatprep.subr.mxu0 0.0
      %717 = vmatpush1.msra.mxu0 0.0
      %718 = vmatprep.subr.mxu0 0.0
      %719 = vmatpush1.msra.mxu0 0.0
      %720 = vmatprep.subr.mxu0 0.0
      %721 = vmatpush1.msra.mxu0 0.0
      %722 = vmatprep.subr.mxu0 0.0
      %723 = vmatpush1.msra.mxu0 0.0
      %724 = vmatprep.subr.mxu0 0.0
      %725 = vmatpush1.msra.mxu0 0.0
      %726 = vmatprep.subr.mxu0 0.0
      %727 = vmatpush1.msra.mxu0 0.0
      %728 = vmatprep.subr.mxu0 0.0
      %729 = vmatpush1.msra.mxu0 0.0
      %730 = vmatprep.subr.mxu0 0.0
      %731 = vmatpush1.msra.mxu0 0.0
      %732 = vmatprep.subr.mxu0 0.0
      %733 = vmatpush1.msra.mxu0 0.0
      %734 = vmatprep.subr.mxu0 0.0
      %735 = vmatpush1.msra.mxu0 0.0
      %736 = vmatprep.subr.mxu0 0.0
      %737 = vmatpush1.msra.mxu0 0.0
      %738 = vmatprep.subr.mxu0 0.0
      %739 = vmatpush1.msra.mxu0 0.0
      %740 = vmatprep.mubr.f32.mxu0 0.0
      %741 = vmatmul.mubr.f32.gmra.mrb[0].mxu0 %v293
      %v742 = vpop.f32.mrb[0].mxu0
      %v743 = vadd.f32 %v290, %v742
      %v744 = vpop.f32.mrb[0].mxu0
      %745 = vmatprep.mubr.f32.mxu0 0.0
      %746 = vmatmul.mubr.f32.gmra.mrb[0].mxu0 %v296
      %v747 = vpop.f32.mrb[0].mxu0
      %v748 = vadd.f32 %v290, %v747
      %v749 = vpop.f32.mrb[0].mxu0
      %750 = vmatprep.mubr.f32.mxu0 0.0
      %751 = vmatmul.mubr.f32.gmra.mrb[0].mxu0 %v299
      %v752 = vpop.f32.mrb[0].mxu0
      %v753 = vadd.f32 %v290, %v752
      %v754 = vpop.f32.mrb[0].mxu0
      %755 = vmatprep.mubr.f32.mxu0 0.0
      %756 = vmatmul.mubr.f32.gmra.mrb[0].mxu0 %v302
      %v757 = vpop.f32.mrb[0].mxu0
      %v758 = vadd.f32 %v290, %v757
      %v759 = vpop.f32.mrb[0].mxu0
      %760 = vmatprep.mubr.f32.mxu0 0.0
      %761 = vmatmul.mubr.f32.gmra.mrb[0].mxu0 %v305
      %v762 = vpop.f32.mrb[0].mxu0
      %v763 = vadd.f32 %v290, %v762
      %v764 = vpop.f32.mrb[0].mxu0
      %765 = vmatprep.mubr.f32.mxu0 0.0
      %766 = vmatmul.mubr.f32.gmra.mrb[0].mxu0 %v308
      %v767 = vpop.f32.mrb[0].mxu0
      %v768 = vadd.f32 %v290, %v767
      %v769 = vpop.f32.mrb[0].mxu0
      %770 = vmatprep.mubr.f32.mxu0 0.0
      %771 = vmatmul.mubr.f32.gmra.mrb[0].mxu0 %v311
      %v772 = vpop.f32.mrb[0].mxu0
      %v773 = vadd.f32 %v290, %v772
      %v774 = vpop.f32.mrb[0].mxu0
      %775 = vmatprep.mubr.f32.mxu0 0.0
      %776 = vmatmul.mubr.f32.gmra.mrb[0].mxu0 %v314
      %v777 = vpop.f32.mrb[0].mxu0
      %v778 = vadd.f32 %v290, %v777
      %v779 = vpop.f32.mrb[0].mxu0
      %780 = vmatprep.mubr.f32.mxu0 0.0
      %781 = vmatmul.mubr.f32.gmra.mrb[0].mxu0 %v317
      %v782 = vpop.f32.mrb[0].mxu0
      %v783 = vadd.f32 %v290, %v782
      %v784 = vpop.f32.mrb[0].mxu0
      %785 = vmatprep.mubr.f32.mxu0 0.0
      %786 = vmatmul.mubr.f32.gmra.mrb[0].mxu0 %v320
      %v787 = vpop.f32.mrb[0].mxu0
      %v788 = vadd.f32 %v290, %v787
      %v789 = vpop.f32.mrb[0].mxu0
      %790 = vmatprep.mubr.f32.mxu0 0.0
      %791 = vmatmul.mubr.f32.gmra.mrb[0].mxu0 %v323
      %v792 = vpop.f32.mrb[0].mxu0
      %v793 = vadd.f32 %v290, %v792
      %v794 = vpop.f32.mrb[0].mxu0
      %795 = vmatprep.mubr.f32.mxu0 0.0
      %796 = vmatmul.mubr.f32.gmra.mrb[0].mxu0 %v326
      %v797 = vpop.f32.mrb[0].mxu0
      %v798 = vadd.f32 %v290, %v797
      %v799 = vpop.f32.mrb[0].mxu0
      %800 = vmatprep.mubr.f32.mxu0 0.0
      %801 = vmatmul.mubr.f32.gmra.mrb[0].mxu0 %v329
      %v802 = vpop.f32.mrb[0].mxu0
      %v803 = vadd.f32 %v290, %v802
      %v804 = vpop.f32.mrb[0].mxu0
      %805 = vmatprep.mubr.f32.mxu0 0.0
      %806 = vmatmul.mubr.f32.gmra.mrb[0].mxu0 %v332
      %v807 = vpop.f32.mrb[0].mxu0
      %v808 = vadd.f32 %v290, %v807
      %v809 = vpop.f32.mrb[0].mxu0
      %810 = vmatprep.mubr.f32.mxu0 0.0
      %811 = vmatmul.mubr.f32.gmra.mrb[0].mxu0 %v335
      %v812 = vpop.f32.mrb[0].mxu0
      %v813 = vadd.f32 %v290, %v812
      %v814 = vpop.f32.mrb[0].mxu0
      %815 = vmatprep.mubr.f32.mxu0 0.0
      %816 = vmatmul.mubr.f32.gmra.mrb[0].mxu0 %v338
      %v817 = vpop.f32.mrb[0].mxu0
      %v818 = vadd.f32 %v290, %v817
      %v819 = vpop.f32.mrb[0].mxu0
      %820 = vmatprep.mubr.f32.mxu0 0.0
      %821 = vmatmul.mubr.f32.gmra.mrb[0].mxu0 %v341
      %v822 = vpop.f32.mrb[0].mxu0
      %v823 = vadd.f32 %v290, %v822
      %v824 = vpop.f32.mrb[0].mxu0
      %825 = vmatprep.mubr.f32.mxu0 0.0
      %826 = vmatmul.mubr.f32.gmra.mrb[0].mxu0 %v344
      %v827 = vpop.f32.mrb[0].mxu0
      %v828 = vadd.f32 %v290, %v827
      %v829 = vpop.f32.mrb[0].mxu0
      %830 = vmatprep.mubr.f32.mxu0 0.0
      %831 = vmatmul.mubr.f32.gmra.mrb[0].mxu0 %v347
      %v832 = vpop.f32.mrb[0].mxu0
      %v833 = vadd.f32 %v290, %v832
      %v834 = vpop.f32.mrb[0].mxu0
      %835 = vmatprep.mubr.f32.mxu0 0.0
      %836 = vmatmul.mubr.f32.gmra.mrb[0].mxu0 %v350
      %v837 = vpop.f32.mrb[0].mxu0
      %v838 = vadd.f32 %v290, %v837
      %v839 = vpop.f32.mrb[0].mxu0
      %840 = vmatprep.mubr.f32.mxu0 0.0
      %841 = vmatmul.mubr.f32.gmra.mrb[0].mxu0 %v353
      %v842 = vpop.f32.mrb[0].mxu0
      %v843 = vadd.f32 %v290, %v842
      %v844 = vpop.f32.mrb[0].mxu0
      %845 = vmatprep.mubr.f32.mxu0 0.0
      %846 = vmatmul.mubr.f32.gmra.mrb[0].mxu0 %v356
      %v847 = vpop.f32.mrb[0].mxu0
      %v848 = vadd.f32 %v290, %v847
      %v849 = vpop.f32.mrb[0].mxu0
      %850 = vmatprep.mubr.f32.mxu0 0.0
      %851 = vmatmul.mubr.f32.gmra.mrb[0].mxu0 %v359
      %v852 = vpop.f32.mrb[0].mxu0
      %v853 = vadd.f32 %v290, %v852
      %v854 = vpop.f32.mrb[0].mxu0
      %855 = vmatprep.mubr.f32.mxu0 0.0
      %856 = vmatmul.mubr.f32.gmra.mrb[0].mxu0 %v362
      %v857 = vpop.f32.mrb[0].mxu0
      %v858 = vadd.f32 %v290, %v857
      %v859 = vpop.f32.mrb[0].mxu0
      %860 = vmatprep.mubr.f32.mxu0 0.0
      %861 = vmatmul.mubr.f32.gmra.mrb[0].mxu0 %v365
      %v862 = vpop.f32.mrb[0].mxu0
      %v863 = vadd.f32 %v290, %v862
      %v864 = vpop.f32.mrb[0].mxu0
      %865 = vmatprep.mubr.f32.mxu0 0.0
      %866 = vmatmul.mubr.f32.gmra.mrb[0].mxu0 %v368
      %v867 = vpop.f32.mrb[0].mxu0
      %v868 = vadd.f32 %v290, %v867
      %v869 = vpop.f32.mrb[0].mxu0
      %870 = vmatprep.mubr.f32.mxu0 0.0
      %871 = vmatmul.mubr.f32.gmra.mrb[0].mxu0 %v371
      %v872 = vpop.f32.mrb[0].mxu0
      %v873 = vadd.f32 %v290, %v872
      %v874 = vpop.f32.mrb[0].mxu0
      %875 = vmatprep.mubr.f32.mxu0 0.0
      %876 = vmatmul.mubr.f32.gmra.mrb[0].mxu0 %v374
      %v877 = vpop.f32.mrb[0].mxu0
      %v878 = vadd.f32 %v290, %v877
      %v879 = vpop.f32.mrb[0].mxu0
      %880 = vmatprep.mubr.f32.mxu0 0.0
      %881 = vmatmul.mubr.f32.gmra.mrb[0].mxu0 %v377
      %v882 = vpop.f32.mrb[0].mxu0
      %v883 = vadd.f32 %v290, %v882
      %v884 = vpop.f32.mrb[0].mxu0
      %885 = vmatprep.mubr.f32.mxu0 0.0
      %886 = vmatmul.mubr.f32.gmra.mrb[0].mxu0 %v380
      %v887 = vpop.f32.mrb[0].mxu0
      %v888 = vadd.f32 %v290, %v887
      %v889 = vpop.f32.mrb[0].mxu0
      %890 = vmatprep.mubr.f32.mxu0 0.0
      %891 = vmatmul.mubr.f32.gmra.mrb[0].mxu0 %v383
      %v892 = vpop.f32.mrb[0].mxu0
      %v893 = vadd.f32 %v290, %v892
      %v894 = vpop.f32.mrb[0].mxu0
      %895 = vmatprep.mubr.f32.mxu0 0.0
      %896 = vmatmul.mubr.f32.gmra.mrb[0].mxu0 %v386
      %v897 = vpop.f32.mrb[0].mxu0
      %v898 = vadd.f32 %v290, %v897
      %v899 = vpop.f32.mrb[0].mxu0
      %900 = vmatprep.mubr.f32.mxu0 0.0
      %901 = vmatmul.mubr.f32.gmra.mrb[0].mxu0 %v389
      %v902 = vpop.f32.mrb[0].mxu0
      %v903 = vadd.f32 %v290, %v902
      %v904 = vpop.f32.mrb[0].mxu0
      %905 = vmatprep.mubr.f32.mxu0 0.0
      %906 = vmatmul.mubr.f32.gmra.mrb[0].mxu0 %v392
      %v907 = vpop.f32.mrb[0].mxu0
      %v908 = vadd.f32 %v290, %v907
      %v909 = vpop.f32.mrb[0].mxu0
      %910 = vmatprep.mubr.f32.mxu0 0.0
      %911 = vmatmul.mubr.f32.gmra.mrb[0].mxu0 %v395
      %v912 = vpop.f32.mrb[0].mxu0
      %v913 = vadd.f32 %v290, %v912
      %v914 = vpop.f32.mrb[0].mxu0
      %915 = vmatprep.mubr.f32.mxu0 0.0
      %916 = vmatmul.mubr.f32.gmra.mrb[0].mxu0 %v398
      %v917 = vpop.f32.mrb[0].mxu0
      %v918 = vadd.f32 %v290, %v917
      %v919 = vpop.f32.mrb[0].mxu0
      %920 = vmatprep.mubr.f32.mxu0 0.0
      %921 = vmatmul.mubr.f32.gmra.mrb[0].mxu0 %v401
      %v922 = vpop.f32.mrb[0].mxu0
      %v923 = vadd.f32 %v290, %v922
      %v924 = vpop.f32.mrb[0].mxu0
      %925 = vmatprep.mubr.f32.mxu0 0.0
      %926 = vmatmul.mubr.f32.gmra.mrb[0].mxu0 %v404
      %v927 = vpop.f32.mrb[0].mxu0
      %v928 = vadd.f32 %v290, %v927
      %v929 = vpop.f32.mrb[0].mxu0
      %930 = vmatprep.mubr.f32.mxu0 0.0
      %931 = vmatmul.mubr.f32.gmra.mrb[0].mxu0 %v407
      %v932 = vpop.f32.mrb[0].mxu0
      %v933 = vadd.f32 %v290, %v932
      %v934 = vpop.f32.mrb[0].mxu0
      %935 = vmatprep.mubr.f32.mxu0 0.0
      %936 = vmatmul.mubr.f32.gmra.mrb[0].mxu0 %v410
      %v937 = vpop.f32.mrb[0].mxu0
      %v938 = vadd.f32 %v290, %v937
      %v939 = vpop.f32.mrb[0].mxu0
      %940 = vmatprep.mubr.f32.mxu0 0.0
      %941 = vmatmul.mubr.f32.gmra.mrb[0].mxu0 %v413
      %v942 = vpop.f32.mrb[0].mxu0
      %v943 = vadd.f32 %v290, %v942
      %v944 = vpop.f32.mrb[0].mxu0
      %945 = vmatprep.mubr.f32.mxu0 0.0
      %946 = vmatmul.mubr.f32.gmra.mrb[0].mxu0 %v416
      %v947 = vpop.f32.mrb[0].mxu0
      %v948 = vadd.f32 %v290, %v947
      %v949 = vpop.f32.mrb[0].mxu0
      %950 = vmatprep.mubr.f32.mxu0 0.0
      %951 = vmatmul.mubr.f32.gmra.mrb[0].mxu0 %v419
      %v952 = vpop.f32.mrb[0].mxu0
      %v953 = vadd.f32 %v290, %v952
      %v954 = vpop.f32.mrb[0].mxu0
      %955 = vmatprep.mubr.f32.mxu0 0.0
      %956 = vmatmul.mubr.f32.gmra.mrb[0].mxu0 %v422
      %v957 = vpop.f32.mrb[0].mxu0
      %v958 = vadd.f32 %v290, %v957
      %v959 = vpop.f32.mrb[0].mxu0
      %960 = vmatprep.mubr.f32.mxu0 0.0
      %961 = vmatmul.mubr.f32.gmra.mrb[0].mxu0 %v425
      %v962 = vpop.f32.mrb[0].mxu0
      %v963 = vadd.f32 %v290, %v962
      %v964 = vpop.f32.mrb[0].mxu0
      %965 = vmatprep.mubr.f32.mxu0 0.0
      %966 = vmatmul.mubr.f32.gmra.mrb[0].mxu0 %v428
      %v967 = vpop.f32.mrb[0].mxu0
      %v968 = vadd.f32 %v290, %v967
      %v969 = vpop.f32.mrb[0].mxu0
      %970 = vmatprep.mubr.f32.mxu0 0.0
      %971 = vmatmul.mubr.f32.gmra.mrb[0].mxu0 %v431
      %v972 = vpop.f32.mrb[0].mxu0
      %v973 = vadd.f32 %v290, %v972
      %v974 = vpop.f32.mrb[0].mxu0
      %975 = vmatprep.mubr.f32.mxu0 0.0
      %976 = vmatmul.mubr.f32.gmra.mrb[0].mxu0 %v434
      %v977 = vpop.f32.mrb[0].mxu0
      %v978 = vadd.f32 %v290, %v977
      %v979 = vpop.f32.mrb[0].mxu0
      %980 = vmatprep.mubr.f32.mxu0 0.0
      %981 = vmatmul.mubr.f32.gmra.mrb[0].mxu0 %v437
      %v982 = vpop.f32.mrb[0].mxu0
      %v983 = vadd.f32 %v290, %v982
      %v984 = vpop.f32.mrb[0].mxu0
      %985 = vmatprep.mubr.f32.mxu0 0.0
      %986 = vmatmul.mubr.f32.gmra.mrb[0].mxu0 %v440
      %v987 = vpop.f32.mrb[0].mxu0
      %v988 = vadd.f32 %v290, %v987
      %v989 = vpop.f32.mrb[0].mxu0
      %990 = vmatprep.mubr.f32.mxu0 0.0
      %991 = vmatmul.mubr.f32.gmra.mrb[0].mxu0 %v443
      %v992 = vpop.f32.mrb[0].mxu0
      %v993 = vadd.f32 %v290, %v992
      %v994 = vpop.f32.mrb[0].mxu0
      %995 = vmatprep.mubr.f32.mxu0 0.0
      %996 = vmatmul.mubr.f32.gmra.mrb[0].mxu0 %v446
      %v997 = vpop.f32.mrb[0].mxu0
      %v998 = vadd.f32 %v290, %v997
      %v999 = vpop.f32.mrb[0].mxu0
      %1000 = vmatprep.mubr.f32.mxu0 0.0
      %1001 = vmatmul.mubr.f32.gmra.mrb[0].mxu0 %v449
      %v1002 = vpop.f32.mrb[0].mxu0
      %v1003 = vadd.f32 %v290, %v1002
      %v1004 = vpop.f32.mrb[0].mxu0
      %1005 = vmatprep.mubr.f32.mxu0 0.0
      %1006 = vmatmul.mubr.f32.gmra.mrb[0].mxu0 %v452
      %v1007 = vpop.f32.mrb[0].mxu0
      %v1008 = vadd.f32 %v290, %v1007
      %v1009 = vpop.f32.mrb[0].mxu0
      %1010 = vmatprep.mubr.f32.mxu0 0.0
      %1011 = vmatmul.mubr.f32.gmra.mrb[0].mxu0 %v455
      %v1012 = vpop.f32.mrb[0].mxu0
      %v1013 = vadd.f32 %v290, %v1012
      %v1014 = vpop.f32.mrb[0].mxu0
      %1015 = vmatprep.mubr.f32.mxu0 0.0
      %1016 = vmatmul.mubr.f32.gmra.mrb[0].mxu0 %v458
      %v1017 = vpop.f32.mrb[0].mxu0
      %v1018 = vadd.f32 %v290, %v1017
      %v1019 = vpop.f32.mrb[0].mxu0
      %1020 = vmatprep.mubr.f32.mxu0 0.0
      %1021 = vmatmul.mubr.f32.gmra.mrb[0].mxu0 %v461
      %v1022 = vpop.f32.mrb[0].mxu0
      %v1023 = vadd.f32 %v290, %v1022
      %v1024 = vpop.f32.mrb[0].mxu0
      %1025 = vmatprep.mubr.f32.mxu0 0.0
      %1026 = vmatmul.mubr.f32.gmra.mrb[0].mxu0 %v464
      %v1027 = vpop.f32.mrb[0].mxu0
      %v1028 = vadd.f32 %v290, %v1027
      %v1029 = vpop.f32.mrb[0].mxu0
      %1030 = vmatprep.mubr.f32.mxu0 0.0
      %1031 = vmatmul.mubr.f32.gmra.mrb[0].mxu0 %v467
      %v1032 = vpop.f32.mrb[0].mxu0
      %v1033 = vadd.f32 %v290, %v1032
      %v1034 = vpop.f32.mrb[0].mxu0
      %1035 = vmatprep.mubr.f32.mxu0 0.0
      %1036 = vmatmul.mubr.f32.gmra.mrb[0].mxu0 %v470
      %v1037 = vpop.f32.mrb[0].mxu0
      %v1038 = vadd.f32 %v290, %v1037
      %v1039 = vpop.f32.mrb[0].mxu0
      %1040 = vmatprep.mubr.f32.mxu0 0.0
      %1041 = vmatmul.mubr.f32.gmra.mrb[0].mxu0 %v473
      %v1042 = vpop.f32.mrb[0].mxu0
      %v1043 = vadd.f32 %v290, %v1042
      %v1044 = vpop.f32.mrb[0].mxu0
      %1045 = vmatprep.mubr.f32.mxu0 0.0
      %1046 = vmatmul.mubr.f32.gmra.mrb[0].mxu0 %v476
      %v1047 = vpop.f32.mrb[0].mxu0
      %v1048 = vadd.f32 %v290, %v1047
      %v1049 = vpop.f32.mrb[0].mxu0
      %1050 = vmatprep.mubr.f32.mxu0 0.0
      %1051 = vmatmul.mubr.f32.gmra.mrb[0].mxu0 %v479
      %v1052 = vpop.f32.mrb[0].mxu0
      %v1053 = vadd.f32 %v290, %v1052
      %v1054 = vpop.f32.mrb[0].mxu0
      %1055 = vmatprep.mubr.f32.mxu0 0.0
      %1056 = vmatmul.mubr.f32.gmra.mrb[0].mxu0 %v482
      %v1057 = vpop.f32.mrb[0].mxu0
      %v1058 = vadd.f32 %v290, %v1057
      %v1059 = vpop.f32.mrb[0].mxu0
      %1060 = vmatprep.mubr.f32.mxu0 0.0
      %1061 = vmatmul.mubr.f32.gmra.mrb[0].mxu0 %v485
      %v1062 = vpop.f32.mrb[0].mxu0
      %v1063 = vadd.f32 %v290, %v1062
      %v1064 = vpop.f32.mrb[0].mxu0
      %1065 = vmatprep.mubr.f32.mxu0 0.0
      %1066 = vmatmul.mubr.f32.gmra.mrb[0].mxu0 %v488
      %v1067 = vpop.f32.mrb[0].mxu0
      %v1068 = vadd.f32 %v290, %v1067
      %v1069 = vpop.f32.mrb[0].mxu0
      %1070 = vmatprep.mubr.f32.mxu0 0.0
      %1071 = vmatmul.mubr.f32.gmra.mrb[0].mxu0 %v491
      %v1072 = vpop.f32.mrb[0].mxu0
      %v1073 = vadd.f32 %v290, %v1072
      %v1074 = vpop.f32.mrb[0].mxu0
      %1075 = vmatprep.mubr.f32.mxu0 0.0
      %1076 = vmatmul.mubr.f32.gmra.mrb[0].mxu0 %v494
      %v1077 = vpop.f32.mrb[0].mxu0
      %v1078 = vadd.f32 %v290, %v1077
      %v1079 = vpop.f32.mrb[0].mxu0
      %1080 = vmatprep.mubr.f32.mxu0 0.0
      %1081 = vmatmul.mubr.f32.gmra.mrb[0].mxu0 %v497
      %v1082 = vpop.f32.mrb[0].mxu0
      %v1083 = vadd.f32 %v290, %v1082
      %v1084 = vpop.f32.mrb[0].mxu0
      %1085 = vmatprep.mubr.f32.mxu0 0.0
      %1086 = vmatmul.mubr.f32.gmra.mrb[0].mxu0 %v500
      %v1087 = vpop.f32.mrb[0].mxu0
      %v1088 = vadd.f32 %v290, %v1087
      %v1089 = vpop.f32.mrb[0].mxu0
      %1090 = vmatprep.mubr.f32.mxu0 0.0
      %1091 = vmatmul.mubr.f32.gmra.mrb[0].mxu0 %v503
      %v1092 = vpop.f32.mrb[0].mxu0
      %v1093 = vadd.f32 %v290, %v1092
      %v1094 = vpop.f32.mrb[0].mxu0
      %1095 = vmatprep.mubr.f32.mxu0 0.0
      %1096 = vmatmul.mubr.f32.gmra.mrb[0].mxu0 %v506
      %v1097 = vpop.f32.mrb[0].mxu0
      %v1098 = vadd.f32 %v290, %v1097
      %v1099 = vpop.f32.mrb[0].mxu0
      %1100 = vmatprep.mubr.f32.mxu0 0.0
      %1101 = vmatmul.mubr.f32.gmra.mrb[0].mxu0 %v509
      %v1102 = vpop.f32.mrb[0].mxu0
      %v1103 = vadd.f32 %v290, %v1102
      %v1104 = vpop.f32.mrb[0].mxu0
      %1105 = vmatprep.mubr.f32.mxu0 0.0
      %1106 = vmatmul.mubr.f32.gmra.mrb[0].mxu0 %v512
      %v1107 = vpop.f32.mrb[0].mxu0
      %v1108 = vadd.f32 %v290, %v1107
      %v1109 = vpop.f32.mrb[0].mxu0
      %1110 = vmatprep.mubr.f32.mxu0 0.0
      %1111 = vmatmul.mubr.f32.gmra.mrb[0].mxu0 %v515
      %v1112 = vpop.f32.mrb[0].mxu0
      %v1113 = vadd.f32 %v290, %v1112
      %v1114 = vpop.f32.mrb[0].mxu0
      %1115 = vmatprep.mubr.f32.mxu0 0.0
      %1116 = vmatmul.mubr.f32.gmra.mrb[0].mxu0 %v518
      %v1117 = vpop.f32.mrb[0].mxu0
      %v1118 = vadd.f32 %v290, %v1117
      %v1119 = vpop.f32.mrb[0].mxu0
      %1120 = vmatprep.mubr.f32.mxu0 0.0
      %1121 = vmatmul.mubr.f32.gmra.mrb[0].mxu0 %v521
      %v1122 = vpop.f32.mrb[0].mxu0
      %v1123 = vadd.f32 %v290, %v1122
      %v1124 = vpop.f32.mrb[0].mxu0
      %1125 = vmatprep.mubr.f32.mxu0 0.0
      %1126 = vmatmul.mubr.f32.gmra.mrb[0].mxu0 %v524
      %v1127 = vpop.f32.mrb[0].mxu0
      %v1128 = vadd.f32 %v290, %v1127
      %v1129 = vpop.f32.mrb[0].mxu0
      %1130 = vmatprep.mubr.f32.mxu0 0.0
      %1131 = vmatmul.mubr.f32.gmra.mrb[0].mxu0 %v527
      %v1132 = vpop.f32.mrb[0].mxu0
      %v1133 = vadd.f32 %v290, %v1132
      %v1134 = vpop.f32.mrb[0].mxu0
      %1135 = vmatprep.mubr.f32.mxu0 0.0
      %1136 = vmatmul.mubr.f32.gmra.mrb[0].mxu0 %v530
      %v1137 = vpop.f32.mrb[0].mxu0
      %v1138 = vadd.f32 %v290, %v1137
      %v1139 = vpop.f32.mrb[0].mxu0
      %1140 = vmatprep.mubr.f32.mxu0 0.0
      %1141 = vmatmul.mubr.f32.gmra.mrb[0].mxu0 %v533
      %v1142 = vpop.f32.mrb[0].mxu0
      %v1143 = vadd.f32 %v290, %v1142
      %v1144 = vpop.f32.mrb[0].mxu0
      %1145 = vmatprep.mubr.f32.mxu0 0.0
      %1146 = vmatmul.mubr.f32.gmra.mrb[0].mxu0 %v536
      %v1147 = vpop.f32.mrb[0].mxu0
      %v1148 = vadd.f32 %v290, %v1147
      %v1149 = vpop.f32.mrb[0].mxu0
      %1150 = vmatprep.mubr.f32.mxu0 0.0
      %1151 = vmatmul.mubr.f32.gmra.mrb[0].mxu0 %v539
      %v1152 = vpop.f32.mrb[0].mxu0
      %v1153 = vadd.f32 %v290, %v1152
      %v1154 = vpop.f32.mrb[0].mxu0
      %1155 = vmatprep.mubr.f32.mxu0 0.0
      %1156 = vmatmul.mubr.f32.gmra.mrb[0].mxu0 %v542
      %v1157 = vpop.f32.mrb[0].mxu0
      %v1158 = vadd.f32 %v290, %v1157
      %v1159 = vpop.f32.mrb[0].mxu0
      %1160 = vmatprep.mubr.f32.mxu0 0.0
      %1161 = vmatmul.mubr.f32.gmra.mrb[0].mxu0 %v545
      %v1162 = vpop.f32.mrb[0].mxu0
      %v1163 = vadd.f32 %v290, %v1162
      %v1164 = vpop.f32.mrb[0].mxu0
      %1165 = vmatprep.mubr.f32.mxu0 0.0
      %1166 = vmatmul.mubr.f32.gmra.mrb[0].mxu0 %v548
      %v1167 = vpop.f32.mrb[0].mxu0
      %v1168 = vadd.f32 %v290, %v1167
      %v1169 = vpop.f32.mrb[0].mxu0
      %1170 = vmatprep.mubr.f32.mxu0 0.0
      %1171 = vmatmul.mubr.f32.gmra.mrb[0].mxu0 %v551
      %v1172 = vpop.f32.mrb[0].mxu0
      %v1173 = vadd.f32 %v290, %v1172
      %v1174 = vpop.f32.mrb[0].mxu0
      %1175 = vmatprep.mubr.f32.mxu0 0.0
      %1176 = vmatmul.mubr.f32.gmra.mrb[0].mxu0 %v554
      %v1177 = vpop.f32.mrb[0].mxu0
      %v1178 = vadd.f32 %v290, %v1177
      %v1179 = vpop.f32.mrb[0].mxu0
      %1180 = vmatprep.mubr.f32.mxu0 0.0
      %1181 = vmatmul.mubr.f32.gmra.mrb[0].mxu0 %v557
      %v1182 = vpop.f32.mrb[0].mxu0
      %v1183 = vadd.f32 %v290, %v1182
      %v1184 = vpop.f32.mrb[0].mxu0
      %1185 = vmatprep.mubr.f32.mxu0 0.0
      %1186 = vmatmul.mubr.f32.gmra.mrb[0].mxu0 %v560
      %v1187 = vpop.f32.mrb[0].mxu0
      %v1188 = vadd.f32 %v290, %v1187
      %v1189 = vpop.f32.mrb[0].mxu0
      %1190 = vmatprep.mubr.f32.mxu0 0.0
      %1191 = vmatmul.mubr.f32.gmra.mrb[0].mxu0 %v563
      %v1192 = vpop.f32.mrb[0].mxu0
      %v1193 = vadd.f32 %v290, %v1192
      %v1194 = vpop.f32.mrb[0].mxu0
      %1195 = vmatprep.mubr.f32.mxu0 0.0
      %1196 = vmatmul.mubr.f32.gmra.mrb[0].mxu0 %v566
      %v1197 = vpop.f32.mrb[0].mxu0
      %v1198 = vadd.f32 %v290, %v1197
      %v1199 = vpop.f32.mrb[0].mxu0
      %1200 = vmatprep.mubr.f32.mxu0 0.0
      %1201 = vmatmul.mubr.f32.gmra.mrb[0].mxu0 %v569
      %v1202 = vpop.f32.mrb[0].mxu0
      %v1203 = vadd.f32 %v290, %v1202
      %v1204 = vpop.f32.mrb[0].mxu0
      %1205 = vmatprep.mubr.f32.mxu0 0.0
      %1206 = vmatmul.mubr.f32.gmra.mrb[0].mxu0 %v572
      %v1207 = vpop.f32.mrb[0].mxu0
      %v1208 = vadd.f32 %v290, %v1207
      %v1209 = vpop.f32.mrb[0].mxu0
      %1210 = vmatprep.mubr.f32.mxu0 0.0
      %1211 = vmatmul.mubr.f32.gmra.mrb[0].mxu0 %v575
      %v1212 = vpop.f32.mrb[0].mxu0
      %v1213 = vadd.f32 %v290, %v1212
      %v1214 = vpop.f32.mrb[0].mxu0
      %1215 = vmatprep.mubr.f32.mxu0 0.0
      %1216 = vmatmul.mubr.f32.gmra.mrb[0].mxu0 %v578
      %v1217 = vpop.f32.mrb[0].mxu0
      %v1218 = vadd.f32 %v290, %v1217
      %v1219 = vpop.f32.mrb[0].mxu0
      %1220 = vmatprep.mubr.f32.mxu0 0.0
      %1221 = vmatmul.mubr.f32.gmra.mrb[0].mxu0 %v581
      %v1222 = vpop.f32.mrb[0].mxu0
      %v1223 = vadd.f32 %v290, %v1222
      %v1224 = vpop.f32.mrb[0].mxu0
      %1225 = vmatprep.mubr.f32.mxu0 0.0
      %1226 = vmatmul.mubr.f32.gmra.mrb[0].mxu0 %v584
      %v1227 = vpop.f32.mrb[0].mxu0
      %v1228 = vadd.f32 %v290, %v1227
      %v1229 = vpop.f32.mrb[0].mxu0
      %1230 = vmatprep.mubr.f32.mxu0 0.0
      %1231 = vmatmul.mubr.f32.gmra.mrb[0].mxu0 %v587
      %v1232 = vpop.f32.mrb[0].mxu0
      %v1233 = vadd.f32 %v290, %v1232
      %v1234 = vpop.f32.mrb[0].mxu0
      %1235 = vmatprep.mubr.f32.mxu0 0.0
      %1236 = vmatmul.mubr.f32.gmra.mrb[0].mxu0 %v590
      %v1237 = vpop.f32.mrb[0].mxu0
      %v1238 = vadd.f32 %v290, %v1237
      %v1239 = vpop.f32.mrb[0].mxu0
      %1240 = vmatprep.mubr.f32.mxu0 0.0
      %1241 = vmatmul.mubr.f32.gmra.mrb[0].mxu0 %v593
      %v1242 = vpop.f32.mrb[0].mxu0
      %v1243 = vadd.f32 %v290, %v1242
      %v1244 = vpop.f32.mrb[0].mxu0
      %1245 = vmatprep.mubr.f32.mxu0 0.0
      %1246 = vmatmul.mubr.f32.gmra.mrb[0].mxu0 %v596
      %v1247 = vpop.f32.mrb[0].mxu0
      %v1248 = vadd.f32 %v290, %v1247
      %v1249 = vpop.f32.mrb[0].mxu0
      %1250 = vmatprep.mubr.f32.mxu0 0.0
      %1251 = vmatmul.mubr.f32.gmra.mrb[0].mxu0 %v599
      %v1252 = vpop.f32.mrb[0].mxu0
      %v1253 = vadd.f32 %v290, %v1252
      %v1254 = vpop.f32.mrb[0].mxu0
      %1255 = vmatprep.mubr.f32.mxu0 0.0
      %1256 = vmatmul.mubr.f32.gmra.mrb[0].mxu0 %v602
      %v1257 = vpop.f32.mrb[0].mxu0
      %v1258 = vadd.f32 %v290, %v1257
      %v1259 = vpop.f32.mrb[0].mxu0
      %1260 = vmatprep.mubr.f32.mxu0 0.0
      %1261 = vmatmul.mubr.f32.gmra.mrb[0].mxu0 %v605
      %v1262 = vpop.f32.mrb[0].mxu0
      %v1263 = vadd.f32 %v290, %v1262
      %v1264 = vpop.f32.mrb[0].mxu0
      %1265 = vmatprep.mubr.f32.mxu0 0.0
      %1266 = vmatmul.mubr.f32.gmra.mrb[0].mxu0 %v608
      %v1267 = vpop.f32.mrb[0].mxu0
      %v1268 = vadd.f32 %v290, %v1267
      %v1269 = vpop.f32.mrb[0].mxu0
      %1270 = vmatprep.mubr.f32.mxu0 0.0
      %1271 = vmatmul.mubr.f32.gmra.mrb[0].mxu0 %v611
      %v1272 = vpop.f32.mrb[0].mxu0
      %v1273 = vadd.f32 %v290, %v1272
      %v1274 = vpop.f32.mrb[0].mxu0
      %1275 = vmatprep.mubr.f32.mxu0 0.0
      %1276 = vmatmul.mubr.f32.gmra.mrb[0].mxu0 %v614
      %v1277 = vpop.f32.mrb[0].mxu0
      %v1278 = vadd.f32 %v290, %v1277
      %v1279 = vpop.f32.mrb[0].mxu0
      %1280 = vmatprep.mubr.f32.mxu0 0.0
      %1281 = vmatmul.mubr.f32.gmra.mrb[0].mxu0 %v617
      %v1282 = vpop.f32.mrb[0].mxu0
      %v1283 = vadd.f32 %v290, %v1282
      %v1284 = vpop.f32.mrb[0].mxu0
      %1285 = vmatprep.mubr.f32.mxu0 0.0
      %1286 = vmatmul.mubr.f32.gmra.mrb[0].mxu0 %v620
      %v1287 = vpop.f32.mrb[0].mxu0
      %v1288 = vadd.f32 %v290, %v1287
      %v1289 = vpop.f32.mrb[0].mxu0
      %1290 = vmatprep.mubr.f32.mxu0 0.0
      %1291 = vmatmul.mubr.f32.gmra.mrb[0].mxu0 %v623
      %v1292 = vpop.f32.mrb[0].mxu0
      %v1293 = vadd.f32 %v290, %v1292
      %v1294 = vpop.f32.mrb[0].mxu0
      %1295 = vmatprep.mubr.f32.mxu0 0.0
      %1296 = vmatmul.mubr.f32.gmra.mrb[0].mxu0 %v626
      %v1297 = vpop.f32.mrb[0].mxu0
      %v1298 = vadd.f32 %v290, %v1297
      %v1299 = vpop.f32.mrb[0].mxu0
      %1300 = vmatprep.mubr.f32.mxu0 0.0
      %1301 = vmatmul.mubr.f32.gmra.mrb[0].mxu0 %v629
      %v1302 = vpop.f32.mrb[0].mxu0
      %v1303 = vadd.f32 %v290, %v1302
      %v1304 = vpop.f32.mrb[0].mxu0
      %1305 = vmatprep.mubr.f32.mxu0 0.0
      %1306 = vmatmul.mubr.f32.gmra.mrb[0].mxu0 %v632
      %v1307 = vpop.f32.mrb[0].mxu0
      %v1308 = vadd.f32 %v290, %v1307
      %v1309 = vpop.f32.mrb[0].mxu0
      %1310 = vmatprep.mubr.f32.mxu0 0.0
      %1311 = vmatmul.mubr.f32.gmra.mrb[0].mxu0 %v635
      %v1312 = vpop.f32.mrb[0].mxu0
      %v1313 = vadd.f32 %v290, %v1312
      %v1314 = vpop.f32.mrb[0].mxu0
      %1315 = vmatprep.mubr.f32.mxu0 0.0
      %1316 = vmatmul.mubr.f32.gmra.mrb[0].mxu0 %v638
      %v1317 = vpop.f32.mrb[0].mxu0
      %v1318 = vadd.f32 %v290, %v1317
      %v1319 = vpop.f32.mrb[0].mxu0
      %1320 = vmatprep.mubr.f32.mxu0 0.0
      %1321 = vmatmul.mubr.f32.gmra.mrb[0].mxu0 %v641
      %v1322 = vpop.f32.mrb[0].mxu0
      %v1323 = vadd.f32 %v290, %v1322
      %v1324 = vpop.f32.mrb[0].mxu0
      %1325 = vmatprep.mubr.f32.mxu0 0.0
      %1326 = vmatmul.mubr.f32.gmra.mrb[0].mxu0 %v644
      %v1327 = vpop.f32.mrb[0].mxu0
      %v1328 = vadd.f32 %v290, %v1327
      %v1329 = vpop.f32.mrb[0].mxu0
      %1330 = vmatprep.mubr.f32.mxu0 0.0
      %1331 = vmatmul.mubr.f32.gmra.mrb[0].mxu0 %v647
      %v1332 = vpop.f32.mrb[0].mxu0
      %v1333 = vadd.f32 %v290, %v1332
      %v1334 = vpop.f32.mrb[0].mxu0
      %1335 = vmatprep.mubr.f32.mxu0 0.0
      %1336 = vmatmul.mubr.f32.gmra.mrb[0].mxu0 %v650
      %v1337 = vpop.f32.mrb[0].mxu0
      %v1338 = vadd.f32 %v290, %v1337
      %v1339 = vpop.f32.mrb[0].mxu0
      %1340 = vmatprep.mubr.f32.mxu0 0.0
      %1341 = vmatmul.mubr.f32.gmra.mrb[0].mxu0 %v653
      %v1342 = vpop.f32.mrb[0].mxu0
      %v1343 = vadd.f32 %v290, %v1342
      %v1344 = vpop.f32.mrb[0].mxu0
      %1345 = vmatprep.mubr.f32.mxu0 0.0
      %1346 = vmatmul.mubr.f32.gmra.mrb[0].mxu0 %v656
      %v1347 = vpop.f32.mrb[0].mxu0
      %v1348 = vadd.f32 %v290, %v1347
      %v1349 = vpop.f32.mrb[0].mxu0
      %1350 = vmatprep.mubr.f32.mxu0 0.0
      %1351 = vmatmul.mubr.f32.gmra.mrb[0].mxu0 %v659
      %v1352 = vpop.f32.mrb[0].mxu0
      %v1353 = vadd.f32 %v290, %v1352
      %v1354 = vpop.f32.mrb[0].mxu0
      %1355 = vmatprep.mubr.f32.mxu0 0.0
      %1356 = vmatmul.mubr.f32.gmra.mrb[0].mxu0 %v662
      %v1357 = vpop.f32.mrb[0].mxu0
      %v1358 = vadd.f32 %v290, %v1357
      %v1359 = vpop.f32.mrb[0].mxu0
      %1360 = vmatprep.mubr.f32.mxu0 0.0
      %1361 = vmatmul.mubr.f32.gmra.mrb[0].mxu0 %v665
      %v1362 = vpop.f32.mrb[0].mxu0
      %v1363 = vadd.f32 %v290, %v1362
      %v1364 = vpop.f32.mrb[0].mxu0
      %1365 = vmatprep.mubr.f32.mxu0 0.0
      %1366 = vmatmul.mubr.f32.gmra.mrb[0].mxu0 %v668
      %v1367 = vpop.f32.mrb[0].mxu0
      %v1368 = vadd.f32 %v290, %v1367
      %v1369 = vpop.f32.mrb[0].mxu0
      %1370 = vmatprep.mubr.f32.mxu0 0.0
      %1371 = vmatmul.mubr.f32.gmra.mrb[0].mxu0 %v671
      %v1372 = vpop.f32.mrb[0].mxu0
      %v1373 = vadd.f32 %v290, %v1372
      %v1374 = vpop.f32.mrb[0].mxu0
      %1375 = vmatprep.mubr.f32.mxu0 0.0
      %1376 = vmatmul.mubr.f32.gmra.mrb[0].mxu0 %v674
      %v1377 = vpop.f32.mrb[0].mxu0
      %v1378 = vadd.f32 %v290, %v1377
      %v1379 = vpop.f32.mrb[0].mxu0
      %1380 = vdwg.mxu0
      %v1381 = vmax.f32 %v743, 0.0
      %v1382 = vmax.f32 %v748, 0.0
      %v1383 = vmax.f32 %v753, 0.0
      %v1384 = vmax.f32 %v758, 0.0
      %v1385 = vmax.f32 %v763, 0.0
      %v1386 = vmax.f32 %v768, 0.0
      %v1387 = vmax.f32 %v773, 0.0
      %v1388 = vmax.f32 %v778, 0.0
      %v1389 = vmax.f32 %v783, 0.0
      %v1390 = vmax.f32 %v788, 0.0
      %v1391 = vmax.f32 %v793, 0.0
      %v1392 = vmax.f32 %v798, 0.0
      %v1393 = vmax.f32 %v803, 0.0
      %v1394 = vmax.f32 %v808, 0.0
      %v1395 = vmax.f32 %v813, 0.0
      %v1396 = vmax.f32 %v818, 0.0
      %v1397 = vmax.f32 %v823, 0.0
      %v1398 = vmax.f32 %v828, 0.0
      %v1399 = vmax.f32 %v833, 0.0
      %v1400 = vmax.f32 %v838, 0.0
      %v1401 = vmax.f32 %v843, 0.0
      %v1402 = vmax.f32 %v848, 0.0
      %v1403 = vmax.f32 %v853, 0.0
      %v1404 = vmax.f32 %v858, 0.0
      %v1405 = vmax.f32 %v863, 0.0
      %v1406 = vmax.f32 %v868, 0.0
      %v1407 = vmax.f32 %v873, 0.0
      %v1408 = vmax.f32 %v878, 0.0
      %v1409 = vmax.f32 %v883, 0.0
      %v1410 = vmax.f32 %v888, 0.0
      %v1411 = vmax.f32 %v893, 0.0
      %v1412 = vmax.f32 %v898, 0.0
      %v1413 = vmax.f32 %v903, 0.0
      %v1414 = vmax.f32 %v908, 0.0
      %v1415 = vmax.f32 %v913, 0.0
      %v1416 = vmax.f32 %v918, 0.0
      %v1417 = vmax.f32 %v923, 0.0
      %v1418 = vmax.f32 %v928, 0.0
      %v1419 = vmax.f32 %v933, 0.0
      %v1420 = vmax.f32 %v938, 0.0
      %v1421 = vmax.f32 %v943, 0.0
      %v1422 = vmax.f32 %v948, 0.0
      %v1423 = vmax.f32 %v953, 0.0
      %v1424 = vmax.f32 %v958, 0.0
      %v1425 = vmax.f32 %v963, 0.0
      %v1426 = vmax.f32 %v968, 0.0
      %v1427 = vmax.f32 %v973, 0.0
      %v1428 = vmax.f32 %v978, 0.0
      %v1429 = vmax.f32 %v983, 0.0
      %v1430 = vmax.f32 %v988, 0.0
      %v1431 = vmax.f32 %v993, 0.0
      %v1432 = vmax.f32 %v998, 0.0
      %v1433 = vmax.f32 %v1003, 0.0
      %v1434 = vmax.f32 %v1008, 0.0
      %v1435 = vmax.f32 %v1013, 0.0
      %v1436 = vmax.f32 %v1018, 0.0
      %v1437 = vmax.f32 %v1023, 0.0
      %v1438 = vmax.f32 %v1028, 0.0
      %v1439 = vmax.f32 %v1033, 0.0
      %v1440 = vmax.f32 %v1038, 0.0
      %v1441 = vmax.f32 %v1043, 0.0
      %v1442 = vmax.f32 %v1048, 0.0
      %v1443 = vmax.f32 %v1053, 0.0
      %v1444 = vmax.f32 %v1058, 0.0
      %v1445 = vmax.f32 %v1063, 0.0
      %v1446 = vmax.f32 %v1068, 0.0
      %v1447 = vmax.f32 %v1073, 0.0
      %v1448 = vmax.f32 %v1078, 0.0
      %v1449 = vmax.f32 %v1083, 0.0
      %v1450 = vmax.f32 %v1088, 0.0
      %v1451 = vmax.f32 %v1093, 0.0
      %v1452 = vmax.f32 %v1098, 0.0
      %v1453 = vmax.f32 %v1103, 0.0
      %v1454 = vmax.f32 %v1108, 0.0
      %v1455 = vmax.f32 %v1113, 0.0
      %v1456 = vmax.f32 %v1118, 0.0
      %v1457 = vmax.f32 %v1123, 0.0
      %v1458 = vmax.f32 %v1128, 0.0
      %v1459 = vmax.f32 %v1133, 0.0
      %v1460 = vmax.f32 %v1138, 0.0
      %v1461 = vmax.f32 %v1143, 0.0
      %v1462 = vmax.f32 %v1148, 0.0
      %v1463 = vmax.f32 %v1153, 0.0
      %v1464 = vmax.f32 %v1158, 0.0
      %v1465 = vmax.f32 %v1163, 0.0
      %v1466 = vmax.f32 %v1168, 0.0
      %v1467 = vmax.f32 %v1173, 0.0
      %v1468 = vmax.f32 %v1178, 0.0
      %v1469 = vmax.f32 %v1183, 0.0
      %v1470 = vmax.f32 %v1188, 0.0
      %v1471 = vmax.f32 %v1193, 0.0
      %v1472 = vmax.f32 %v1198, 0.0
      %v1473 = vmax.f32 %v1203, 0.0
      %v1474 = vmax.f32 %v1208, 0.0
      %v1475 = vmax.f32 %v1213, 0.0
      %v1476 = vmax.f32 %v1218, 0.0
      %v1477 = vmax.f32 %v1223, 0.0
      %v1478 = vmax.f32 %v1228, 0.0
      %v1479 = vmax.f32 %v1233, 0.0
      %v1480 = vmax.f32 %v1238, 0.0
      %v1481 = vmax.f32 %v1243, 0.0
      %v1482 = vmax.f32 %v1248, 0.0
      %v1483 = vmax.f32 %v1253, 0.0
      %v1484 = vmax.f32 %v1258, 0.0
      %v1485 = vmax.f32 %v1263, 0.0
      %v1486 = vmax.f32 %v1268, 0.0
      %v1487 = vmax.f32 %v1273, 0.0
      %v1488 = vmax.f32 %v1278, 0.0
      %v1489 = vmax.f32 %v1283, 0.0
      %v1490 = vmax.f32 %v1288, 0.0
      %v1491 = vmax.f32 %v1293, 0.0
      %v1492 = vmax.f32 %v1298, 0.0
      %v1493 = vmax.f32 %v1303, 0.0
      %v1494 = vmax.f32 %v1308, 0.0
      %v1495 = vmax.f32 %v1313, 0.0
      %v1496 = vmax.f32 %v1318, 0.0
      %v1497 = vmax.f32 %v1323, 0.0
      %v1498 = vmax.f32 %v1328, 0.0
      %v1499 = vmax.f32 %v1333, 0.0
      %v1500 = vmax.f32 %v1338, 0.0
      %v1501 = vmax.f32 %v1343, 0.0
      %v1502 = vmax.f32 %v1348, 0.0
      %v1503 = vmax.f32 %v1353, 0.0
      %v1504 = vmax.f32 %v1358, 0.0
      %v1505 = vmax.f32 %v1363, 0.0
      %v1506 = vmax.f32 %v1368, 0.0
      %v1507 = vmax.f32 %v1373, 0.0
      %v1508 = vmax.f32 %v1378, 0.0
      %v1509 = vlaneseq
      %v1510 = vshrl.u32 %v1509, 7
      %v1511 = vsub.s32 0, %v1510
      %v1512 = vrot.slane %v286, %v1511
      %v1514 = vsel %vm291, %v1381, 0
      %v1517 = vsel %vm291, %v1382, 0
      %v1520 = vsel %vm291, %v1383, 0
      %v1523 = vsel %vm291, %v1384, 0
      %v1526 = vsel %vm291, %v1385, 0
      %v1529 = vsel %vm291, %v1386, 0
      %v1532 = vsel %vm291, %v1387, 0
      %v1535 = vsel %vm291, %v1388, 0
      %v1538 = vsel %vm291, %v1389, 0
      %v1541 = vsel %vm291, %v1390, 0
      %v1544 = vsel %vm291, %v1391, 0
      %v1547 = vsel %vm291, %v1392, 0
      %v1550 = vsel %vm291, %v1393, 0
      %v1553 = vsel %vm291, %v1394, 0
      %v1556 = vsel %vm291, %v1395, 0
      %v1559 = vsel %vm291, %v1396, 0
      %v1562 = vsel %vm291, %v1397, 0
      %v1565 = vsel %vm291, %v1398, 0
      %v1568 = vsel %vm291, %v1399, 0
      %v1571 = vsel %vm291, %v1400, 0
      %v1574 = vsel %vm291, %v1401, 0
      %v1577 = vsel %vm291, %v1402, 0
      %v1580 = vsel %vm291, %v1403, 0
      %v1583 = vsel %vm291, %v1404, 0
      %v1586 = vsel %vm291, %v1405, 0
      %v1589 = vsel %vm291, %v1406, 0
      %v1592 = vsel %vm291, %v1407, 0
      %v1595 = vsel %vm291, %v1408, 0
      %v1598 = vsel %vm291, %v1409, 0
      %v1601 = vsel %vm291, %v1410, 0
      %v1604 = vsel %vm291, %v1411, 0
      %v1607 = vsel %vm291, %v1412, 0
      %v1610 = vsel %vm291, %v1413, 0
      %v1613 = vsel %vm291, %v1414, 0
      %v1616 = vsel %vm291, %v1415, 0
      %v1619 = vsel %vm291, %v1416, 0
      %v1622 = vsel %vm291, %v1417, 0
      %v1625 = vsel %vm291, %v1418, 0
      %v1628 = vsel %vm291, %v1419, 0
      %v1631 = vsel %vm291, %v1420, 0
      %v1634 = vsel %vm291, %v1421, 0
      %v1637 = vsel %vm291, %v1422, 0
      %v1640 = vsel %vm291, %v1423, 0
      %v1643 = vsel %vm291, %v1424, 0
      %v1646 = vsel %vm291, %v1425, 0
      %v1649 = vsel %vm291, %v1426, 0
      %v1652 = vsel %vm291, %v1427, 0
      %v1655 = vsel %vm291, %v1428, 0
      %v1658 = vsel %vm291, %v1429, 0
      %v1661 = vsel %vm291, %v1430, 0
      %v1664 = vsel %vm291, %v1431, 0
      %v1667 = vsel %vm291, %v1432, 0
      %v1670 = vsel %vm291, %v1433, 0
      %v1673 = vsel %vm291, %v1434, 0
      %v1676 = vsel %vm291, %v1435, 0
      %v1679 = vsel %vm291, %v1436, 0
      %v1682 = vsel %vm291, %v1437, 0
      %v1685 = vsel %vm291, %v1438, 0
      %v1688 = vsel %vm291, %v1439, 0
      %v1691 = vsel %vm291, %v1440, 0
      %v1694 = vsel %vm291, %v1441, 0
      %v1697 = vsel %vm291, %v1442, 0
      %v1700 = vsel %vm291, %v1443, 0
      %v1703 = vsel %vm291, %v1444, 0
      %v1706 = vsel %vm291, %v1445, 0
      %v1709 = vsel %vm291, %v1446, 0
      %v1712 = vsel %vm291, %v1447, 0
      %v1715 = vsel %vm291, %v1448, 0
      %v1718 = vsel %vm291, %v1449, 0
      %v1721 = vsel %vm291, %v1450, 0
      %v1724 = vsel %vm291, %v1451, 0
      %v1727 = vsel %vm291, %v1452, 0
      %v1730 = vsel %vm291, %v1453, 0
      %v1733 = vsel %vm291, %v1454, 0
      %v1736 = vsel %vm291, %v1455, 0
      %v1739 = vsel %vm291, %v1456, 0
      %v1742 = vsel %vm291, %v1457, 0
      %v1745 = vsel %vm291, %v1458, 0
      %v1748 = vsel %vm291, %v1459, 0
      %v1751 = vsel %vm291, %v1460, 0
      %v1754 = vsel %vm291, %v1461, 0
      %v1757 = vsel %vm291, %v1462, 0
      %v1760 = vsel %vm291, %v1463, 0
      %v1763 = vsel %vm291, %v1464, 0
      %v1766 = vsel %vm291, %v1465, 0
      %v1769 = vsel %vm291, %v1466, 0
      %v1772 = vsel %vm291, %v1467, 0
      %v1775 = vsel %vm291, %v1468, 0
      %v1778 = vsel %vm291, %v1469, 0
      %v1781 = vsel %vm291, %v1470, 0
      %v1784 = vsel %vm291, %v1471, 0
      %v1787 = vsel %vm291, %v1472, 0
      %v1790 = vsel %vm291, %v1473, 0
      %v1793 = vsel %vm291, %v1474, 0
      %v1796 = vsel %vm291, %v1475, 0
      %v1799 = vsel %vm291, %v1476, 0
      %v1802 = vsel %vm291, %v1477, 0
      %v1805 = vsel %vm291, %v1478, 0
      %v1808 = vsel %vm291, %v1479, 0
      %v1811 = vsel %vm291, %v1480, 0
      %v1814 = vsel %vm291, %v1481, 0
      %v1817 = vsel %vm291, %v1482, 0
      %v1820 = vsel %vm291, %v1483, 0
      %v1823 = vsel %vm291, %v1484, 0
      %v1826 = vsel %vm291, %v1485, 0
      %v1829 = vsel %vm291, %v1486, 0
      %v1832 = vsel %vm291, %v1487, 0
      %v1835 = vsel %vm291, %v1488, 0
      %v1838 = vsel %vm291, %v1489, 0
      %v1841 = vsel %vm291, %v1490, 0
      %v1844 = vsel %vm291, %v1491, 0
      %v1847 = vsel %vm291, %v1492, 0
      %v1850 = vsel %vm291, %v1493, 0
      %v1853 = vsel %vm291, %v1494, 0
      %v1856 = vsel %vm291, %v1495, 0
      %v1859 = vsel %vm291, %v1496, 0
      %v1862 = vsel %vm291, %v1497, 0
      %v1865 = vsel %vm291, %v1498, 0
      %v1868 = vsel %vm291, %v1499, 0
      %v1871 = vsel %vm291, %v1500, 0
      %v1874 = vsel %vm291, %v1501, 0
      %v1877 = vsel %vm291, %v1502, 0
      %v1880 = vsel %vm291, %v1503, 0
      %v1883 = vsel %vm291, %v1504, 0
      %v1886 = vsel %vm291, %v1505, 0
      %v1889 = vsel %vm291, %v1506, 0
      %v1892 = vsel %vm291, %v1507, 0
      %v1895 = vsel %vm291, %v1508, 0
      %1897 = vmatprep.subr.mxu0 0.0
      %1898 = vmatpush1.msra.mxu0 %v280
      %1899 = vmatprep.subr.mxu0 0.0
      %1900 = vmatpush1.msra.mxu0 %v281
      %1901 = vmatprep.subr.mxu0 0.0
      %1902 = vmatpush1.msra.mxu0 %v282
      %1903 = vmatprep.subr.mxu0 0.0
      %1904 = vmatpush1.msra.mxu0 %v283
      %1905 = vmatprep.subr.mxu0 0.0
      %1906 = vmatpush1.msra.mxu0 %v284
      %1907 = vmatprep.subr.mxu0 0.0
      %1908 = vmatpush1.msra.mxu0 0.0
      %1909 = vmatprep.subr.mxu0 0.0
      %1910 = vmatpush1.msra.mxu0 0.0
      %1911 = vmatprep.subr.mxu0 0.0
      %1912 = vmatpush1.msra.mxu0 0.0
      %1913 = vmatprep.subr.mxu0 0.0
      %1914 = vmatpush1.msra.mxu0 0.0
      %1915 = vmatprep.subr.mxu0 0.0
      %1916 = vmatpush1.msra.mxu0 0.0
      %1917 = vmatprep.subr.mxu0 0.0
      %1918 = vmatpush1.msra.mxu0 0.0
      %1919 = vmatprep.subr.mxu0 0.0
      %1920 = vmatpush1.msra.mxu0 0.0
      %1921 = vmatprep.subr.mxu0 0.0
      %1922 = vmatpush1.msra.mxu0 0.0
      %1923 = vmatprep.subr.mxu0 0.0
      %1924 = vmatpush1.msra.mxu0 0.0
      %1925 = vmatprep.subr.mxu0 0.0
      %1926 = vmatpush1.msra.mxu0 0.0
      %1927 = vmatprep.subr.mxu0 0.0
      %1928 = vmatpush1.msra.mxu0 0.0
      %1929 = vmatprep.subr.mxu0 0.0
      %1930 = vmatpush1.msra.mxu0 0.0
      %1931 = vmatprep.subr.mxu0 0.0
      %1932 = vmatpush1.msra.mxu0 0.0
      %1933 = vmatprep.subr.mxu0 0.0
      %1934 = vmatpush1.msra.mxu0 0.0
      %1935 = vmatprep.subr.mxu0 0.0
      %1936 = vmatpush1.msra.mxu0 0.0
      %1937 = vmatprep.subr.mxu0 0.0
      %1938 = vmatpush1.msra.mxu0 0.0
      %1939 = vmatprep.subr.mxu0 0.0
      %1940 = vmatpush1.msra.mxu0 0.0
      %1941 = vmatprep.subr.mxu0 0.0
      %1942 = vmatpush1.msra.mxu0 0.0
      %1943 = vmatprep.subr.mxu0 0.0
      %1944 = vmatpush1.msra.mxu0 0.0
      %1945 = vmatprep.subr.mxu0 0.0
      %1946 = vmatpush1.msra.mxu0 0.0
      %1947 = vmatprep.subr.mxu0 0.0
      %1948 = vmatpush1.msra.mxu0 0.0
      %1949 = vmatprep.subr.mxu0 0.0
      %1950 = vmatpush1.msra.mxu0 0.0
      %1951 = vmatprep.subr.mxu0 0.0
      %1952 = vmatpush1.msra.mxu0 0.0
      %1953 = vmatprep.subr.mxu0 0.0
      %1954 = vmatpush1.msra.mxu0 0.0
      %1955 = vmatprep.subr.mxu0 0.0
      %1956 = vmatpush1.msra.mxu0 0.0
      %1957 = vmatprep.subr.mxu0 0.0
      %1958 = vmatpush1.msra.mxu0 0.0
      %1959 = vmatprep.subr.mxu0 0.0
      %1960 = vmatpush1.msra.mxu0 0.0
      %1961 = vmatprep.mubr.f32.mxu0 0.0
      %1962 = vmatmul.mubr.f32.gmra.mrb[0].mxu0 %v1514
      %v1963 = vpop.f32.mrb[0].mxu0
      %v1964 = vadd.f32 %v1512, %v1963
      %v1965 = vpop.f32.mrb[0].mxu0
      %1966 = vmatprep.mubr.f32.mxu0 0.0
      %1967 = vmatmul.mubr.f32.gmra.mrb[0].mxu0 %v1517
      %v1968 = vpop.f32.mrb[0].mxu0
      %v1969 = vadd.f32 %v1512, %v1968
      %v1970 = vpop.f32.mrb[0].mxu0
      %1971 = vmatprep.mubr.f32.mxu0 0.0
      %1972 = vmatmul.mubr.f32.gmra.mrb[0].mxu0 %v1520
      %v1973 = vpop.f32.mrb[0].mxu0
      %v1974 = vadd.f32 %v1512, %v1973
      %v1975 = vpop.f32.mrb[0].mxu0
      %1976 = vmatprep.mubr.f32.mxu0 0.0
      %1977 = vmatmul.mubr.f32.gmra.mrb[0].mxu0 %v1523
      %v1978 = vpop.f32.mrb[0].mxu0
      %v1979 = vadd.f32 %v1512, %v1978
      %v1980 = vpop.f32.mrb[0].mxu0
      %1981 = vmatprep.mubr.f32.mxu0 0.0
      %1982 = vmatmul.mubr.f32.gmra.mrb[0].mxu0 %v1526
      %v1983 = vpop.f32.mrb[0].mxu0
      %v1984 = vadd.f32 %v1512, %v1983
      %v1985 = vpop.f32.mrb[0].mxu0
      %1986 = vmatprep.mubr.f32.mxu0 0.0
      %1987 = vmatmul.mubr.f32.gmra.mrb[0].mxu0 %v1529
      %v1988 = vpop.f32.mrb[0].mxu0
      %v1989 = vadd.f32 %v1512, %v1988
      %v1990 = vpop.f32.mrb[0].mxu0
      %1991 = vmatprep.mubr.f32.mxu0 0.0
      %1992 = vmatmul.mubr.f32.gmra.mrb[0].mxu0 %v1532
      %v1993 = vpop.f32.mrb[0].mxu0
      %v1994 = vadd.f32 %v1512, %v1993
      %v1995 = vpop.f32.mrb[0].mxu0
      %1996 = vmatprep.mubr.f32.mxu0 0.0
      %1997 = vmatmul.mubr.f32.gmra.mrb[0].mxu0 %v1535
      %v1998 = vpop.f32.mrb[0].mxu0
      %v1999 = vadd.f32 %v1512, %v1998
      %v2000 = vpop.f32.mrb[0].mxu0
      %2001 = vmatprep.mubr.f32.mxu0 0.0
      %2002 = vmatmul.mubr.f32.gmra.mrb[0].mxu0 %v1538
      %v2003 = vpop.f32.mrb[0].mxu0
      %v2004 = vadd.f32 %v1512, %v2003
      %v2005 = vpop.f32.mrb[0].mxu0
      %2006 = vmatprep.mubr.f32.mxu0 0.0
      %2007 = vmatmul.mubr.f32.gmra.mrb[0].mxu0 %v1541
      %v2008 = vpop.f32.mrb[0].mxu0
      %v2009 = vadd.f32 %v1512, %v2008
      %v2010 = vpop.f32.mrb[0].mxu0
      %2011 = vmatprep.mubr.f32.mxu0 0.0
      %2012 = vmatmul.mubr.f32.gmra.mrb[0].mxu0 %v1544
      %v2013 = vpop.f32.mrb[0].mxu0
      %v2014 = vadd.f32 %v1512, %v2013
      %v2015 = vpop.f32.mrb[0].mxu0
      %2016 = vmatprep.mubr.f32.mxu0 0.0
      %2017 = vmatmul.mubr.f32.gmra.mrb[0].mxu0 %v1547
      %v2018 = vpop.f32.mrb[0].mxu0
      %v2019 = vadd.f32 %v1512, %v2018
      %v2020 = vpop.f32.mrb[0].mxu0
      %2021 = vmatprep.mubr.f32.mxu0 0.0
      %2022 = vmatmul.mubr.f32.gmra.mrb[0].mxu0 %v1550
      %v2023 = vpop.f32.mrb[0].mxu0
      %v2024 = vadd.f32 %v1512, %v2023
      %v2025 = vpop.f32.mrb[0].mxu0
      %2026 = vmatprep.mubr.f32.mxu0 0.0
      %2027 = vmatmul.mubr.f32.gmra.mrb[0].mxu0 %v1553
      %v2028 = vpop.f32.mrb[0].mxu0
      %v2029 = vadd.f32 %v1512, %v2028
      %v2030 = vpop.f32.mrb[0].mxu0
      %2031 = vmatprep.mubr.f32.mxu0 0.0
      %2032 = vmatmul.mubr.f32.gmra.mrb[0].mxu0 %v1556
      %v2033 = vpop.f32.mrb[0].mxu0
      %v2034 = vadd.f32 %v1512, %v2033
      %v2035 = vpop.f32.mrb[0].mxu0
      %2036 = vmatprep.mubr.f32.mxu0 0.0
      %2037 = vmatmul.mubr.f32.gmra.mrb[0].mxu0 %v1559
      %v2038 = vpop.f32.mrb[0].mxu0
      %v2039 = vadd.f32 %v1512, %v2038
      %v2040 = vpop.f32.mrb[0].mxu0
      %2041 = vmatprep.mubr.f32.mxu0 0.0
      %2042 = vmatmul.mubr.f32.gmra.mrb[0].mxu0 %v1562
      %v2043 = vpop.f32.mrb[0].mxu0
      %v2044 = vadd.f32 %v1512, %v2043
      %v2045 = vpop.f32.mrb[0].mxu0
      %2046 = vmatprep.mubr.f32.mxu0 0.0
      %2047 = vmatmul.mubr.f32.gmra.mrb[0].mxu0 %v1565
      %v2048 = vpop.f32.mrb[0].mxu0
      %v2049 = vadd.f32 %v1512, %v2048
      %v2050 = vpop.f32.mrb[0].mxu0
      %2051 = vmatprep.mubr.f32.mxu0 0.0
      %2052 = vmatmul.mubr.f32.gmra.mrb[0].mxu0 %v1568
      %v2053 = vpop.f32.mrb[0].mxu0
      %v2054 = vadd.f32 %v1512, %v2053
      %v2055 = vpop.f32.mrb[0].mxu0
      %2056 = vmatprep.mubr.f32.mxu0 0.0
      %2057 = vmatmul.mubr.f32.gmra.mrb[0].mxu0 %v1571
      %v2058 = vpop.f32.mrb[0].mxu0
      %v2059 = vadd.f32 %v1512, %v2058
      %v2060 = vpop.f32.mrb[0].mxu0
      %2061 = vmatprep.mubr.f32.mxu0 0.0
      %2062 = vmatmul.mubr.f32.gmra.mrb[0].mxu0 %v1574
      %v2063 = vpop.f32.mrb[0].mxu0
      %v2064 = vadd.f32 %v1512, %v2063
      %v2065 = vpop.f32.mrb[0].mxu0
      %2066 = vmatprep.mubr.f32.mxu0 0.0
      %2067 = vmatmul.mubr.f32.gmra.mrb[0].mxu0 %v1577
      %v2068 = vpop.f32.mrb[0].mxu0
      %v2069 = vadd.f32 %v1512, %v2068
      %v2070 = vpop.f32.mrb[0].mxu0
      %2071 = vmatprep.mubr.f32.mxu0 0.0
      %2072 = vmatmul.mubr.f32.gmra.mrb[0].mxu0 %v1580
      %v2073 = vpop.f32.mrb[0].mxu0
      %v2074 = vadd.f32 %v1512, %v2073
      %v2075 = vpop.f32.mrb[0].mxu0
      %2076 = vmatprep.mubr.f32.mxu0 0.0
      %2077 = vmatmul.mubr.f32.gmra.mrb[0].mxu0 %v1583
      %v2078 = vpop.f32.mrb[0].mxu0
      %v2079 = vadd.f32 %v1512, %v2078
      %v2080 = vpop.f32.mrb[0].mxu0
      %2081 = vmatprep.mubr.f32.mxu0 0.0
      %2082 = vmatmul.mubr.f32.gmra.mrb[0].mxu0 %v1586
      %v2083 = vpop.f32.mrb[0].mxu0
      %v2084 = vadd.f32 %v1512, %v2083
      %v2085 = vpop.f32.mrb[0].mxu0
      %2086 = vmatprep.mubr.f32.mxu0 0.0
      %2087 = vmatmul.mubr.f32.gmra.mrb[0].mxu0 %v1589
      %v2088 = vpop.f32.mrb[0].mxu0
      %v2089 = vadd.f32 %v1512, %v2088
      %v2090 = vpop.f32.mrb[0].mxu0
      %2091 = vmatprep.mubr.f32.mxu0 0.0
      %2092 = vmatmul.mubr.f32.gmra.mrb[0].mxu0 %v1592
      %v2093 = vpop.f32.mrb[0].mxu0
      %v2094 = vadd.f32 %v1512, %v2093
      %v2095 = vpop.f32.mrb[0].mxu0
      %2096 = vmatprep.mubr.f32.mxu0 0.0
      %2097 = vmatmul.mubr.f32.gmra.mrb[0].mxu0 %v1595
      %v2098 = vpop.f32.mrb[0].mxu0
      %v2099 = vadd.f32 %v1512, %v2098
      %v2100 = vpop.f32.mrb[0].mxu0
      %2101 = vmatprep.mubr.f32.mxu0 0.0
      %2102 = vmatmul.mubr.f32.gmra.mrb[0].mxu0 %v1598
      %v2103 = vpop.f32.mrb[0].mxu0
      %v2104 = vadd.f32 %v1512, %v2103
      %v2105 = vpop.f32.mrb[0].mxu0
      %2106 = vmatprep.mubr.f32.mxu0 0.0
      %2107 = vmatmul.mubr.f32.gmra.mrb[0].mxu0 %v1601
      %v2108 = vpop.f32.mrb[0].mxu0
      %v2109 = vadd.f32 %v1512, %v2108
      %v2110 = vpop.f32.mrb[0].mxu0
      %2111 = vmatprep.mubr.f32.mxu0 0.0
      %2112 = vmatmul.mubr.f32.gmra.mrb[0].mxu0 %v1604
      %v2113 = vpop.f32.mrb[0].mxu0
      %v2114 = vadd.f32 %v1512, %v2113
      %v2115 = vpop.f32.mrb[0].mxu0
      %2116 = vmatprep.mubr.f32.mxu0 0.0
      %2117 = vmatmul.mubr.f32.gmra.mrb[0].mxu0 %v1607
      %v2118 = vpop.f32.mrb[0].mxu0
      %v2119 = vadd.f32 %v1512, %v2118
      %v2120 = vpop.f32.mrb[0].mxu0
      %2121 = vmatprep.mubr.f32.mxu0 0.0
      %2122 = vmatmul.mubr.f32.gmra.mrb[0].mxu0 %v1610
      %v2123 = vpop.f32.mrb[0].mxu0
      %v2124 = vadd.f32 %v1512, %v2123
      %v2125 = vpop.f32.mrb[0].mxu0
      %2126 = vmatprep.mubr.f32.mxu0 0.0
      %2127 = vmatmul.mubr.f32.gmra.mrb[0].mxu0 %v1613
      %v2128 = vpop.f32.mrb[0].mxu0
      %v2129 = vadd.f32 %v1512, %v2128
      %v2130 = vpop.f32.mrb[0].mxu0
      %2131 = vmatprep.mubr.f32.mxu0 0.0
      %2132 = vmatmul.mubr.f32.gmra.mrb[0].mxu0 %v1616
      %v2133 = vpop.f32.mrb[0].mxu0
      %v2134 = vadd.f32 %v1512, %v2133
      %v2135 = vpop.f32.mrb[0].mxu0
      %2136 = vmatprep.mubr.f32.mxu0 0.0
      %2137 = vmatmul.mubr.f32.gmra.mrb[0].mxu0 %v1619
      %v2138 = vpop.f32.mrb[0].mxu0
      %v2139 = vadd.f32 %v1512, %v2138
      %v2140 = vpop.f32.mrb[0].mxu0
      %2141 = vmatprep.mubr.f32.mxu0 0.0
      %2142 = vmatmul.mubr.f32.gmra.mrb[0].mxu0 %v1622
      %v2143 = vpop.f32.mrb[0].mxu0
      %v2144 = vadd.f32 %v1512, %v2143
      %v2145 = vpop.f32.mrb[0].mxu0
      %2146 = vmatprep.mubr.f32.mxu0 0.0
      %2147 = vmatmul.mubr.f32.gmra.mrb[0].mxu0 %v1625
      %v2148 = vpop.f32.mrb[0].mxu0
      %v2149 = vadd.f32 %v1512, %v2148
      %v2150 = vpop.f32.mrb[0].mxu0
      %2151 = vmatprep.mubr.f32.mxu0 0.0
      %2152 = vmatmul.mubr.f32.gmra.mrb[0].mxu0 %v1628
      %v2153 = vpop.f32.mrb[0].mxu0
      %v2154 = vadd.f32 %v1512, %v2153
      %v2155 = vpop.f32.mrb[0].mxu0
      %2156 = vmatprep.mubr.f32.mxu0 0.0
      %2157 = vmatmul.mubr.f32.gmra.mrb[0].mxu0 %v1631
      %v2158 = vpop.f32.mrb[0].mxu0
      %v2159 = vadd.f32 %v1512, %v2158
      %v2160 = vpop.f32.mrb[0].mxu0
      %2161 = vmatprep.mubr.f32.mxu0 0.0
      %2162 = vmatmul.mubr.f32.gmra.mrb[0].mxu0 %v1634
      %v2163 = vpop.f32.mrb[0].mxu0
      %v2164 = vadd.f32 %v1512, %v2163
      %v2165 = vpop.f32.mrb[0].mxu0
      %2166 = vmatprep.mubr.f32.mxu0 0.0
      %2167 = vmatmul.mubr.f32.gmra.mrb[0].mxu0 %v1637
      %v2168 = vpop.f32.mrb[0].mxu0
      %v2169 = vadd.f32 %v1512, %v2168
      %v2170 = vpop.f32.mrb[0].mxu0
      %2171 = vmatprep.mubr.f32.mxu0 0.0
      %2172 = vmatmul.mubr.f32.gmra.mrb[0].mxu0 %v1640
      %v2173 = vpop.f32.mrb[0].mxu0
      %v2174 = vadd.f32 %v1512, %v2173
      %v2175 = vpop.f32.mrb[0].mxu0
      %2176 = vmatprep.mubr.f32.mxu0 0.0
      %2177 = vmatmul.mubr.f32.gmra.mrb[0].mxu0 %v1643
      %v2178 = vpop.f32.mrb[0].mxu0
      %v2179 = vadd.f32 %v1512, %v2178
      %v2180 = vpop.f32.mrb[0].mxu0
      %2181 = vmatprep.mubr.f32.mxu0 0.0
      %2182 = vmatmul.mubr.f32.gmra.mrb[0].mxu0 %v1646
      %v2183 = vpop.f32.mrb[0].mxu0
      %v2184 = vadd.f32 %v1512, %v2183
      %v2185 = vpop.f32.mrb[0].mxu0
      %2186 = vmatprep.mubr.f32.mxu0 0.0
      %2187 = vmatmul.mubr.f32.gmra.mrb[0].mxu0 %v1649
      %v2188 = vpop.f32.mrb[0].mxu0
      %v2189 = vadd.f32 %v1512, %v2188
      %v2190 = vpop.f32.mrb[0].mxu0
      %2191 = vmatprep.mubr.f32.mxu0 0.0
      %2192 = vmatmul.mubr.f32.gmra.mrb[0].mxu0 %v1652
      %v2193 = vpop.f32.mrb[0].mxu0
      %v2194 = vadd.f32 %v1512, %v2193
      %v2195 = vpop.f32.mrb[0].mxu0
      %2196 = vmatprep.mubr.f32.mxu0 0.0
      %2197 = vmatmul.mubr.f32.gmra.mrb[0].mxu0 %v1655
      %v2198 = vpop.f32.mrb[0].mxu0
      %v2199 = vadd.f32 %v1512, %v2198
      %v2200 = vpop.f32.mrb[0].mxu0
      %2201 = vmatprep.mubr.f32.mxu0 0.0
      %2202 = vmatmul.mubr.f32.gmra.mrb[0].mxu0 %v1658
      %v2203 = vpop.f32.mrb[0].mxu0
      %v2204 = vadd.f32 %v1512, %v2203
      %v2205 = vpop.f32.mrb[0].mxu0
      %2206 = vmatprep.mubr.f32.mxu0 0.0
      %2207 = vmatmul.mubr.f32.gmra.mrb[0].mxu0 %v1661
      %v2208 = vpop.f32.mrb[0].mxu0
      %v2209 = vadd.f32 %v1512, %v2208
      %v2210 = vpop.f32.mrb[0].mxu0
      %2211 = vmatprep.mubr.f32.mxu0 0.0
      %2212 = vmatmul.mubr.f32.gmra.mrb[0].mxu0 %v1664
      %v2213 = vpop.f32.mrb[0].mxu0
      %v2214 = vadd.f32 %v1512, %v2213
      %v2215 = vpop.f32.mrb[0].mxu0
      %2216 = vmatprep.mubr.f32.mxu0 0.0
      %2217 = vmatmul.mubr.f32.gmra.mrb[0].mxu0 %v1667
      %v2218 = vpop.f32.mrb[0].mxu0
      %v2219 = vadd.f32 %v1512, %v2218
      %v2220 = vpop.f32.mrb[0].mxu0
      %2221 = vmatprep.mubr.f32.mxu0 0.0
      %2222 = vmatmul.mubr.f32.gmra.mrb[0].mxu0 %v1670
      %v2223 = vpop.f32.mrb[0].mxu0
      %v2224 = vadd.f32 %v1512, %v2223
      %v2225 = vpop.f32.mrb[0].mxu0
      %2226 = vmatprep.mubr.f32.mxu0 0.0
      %2227 = vmatmul.mubr.f32.gmra.mrb[0].mxu0 %v1673
      %v2228 = vpop.f32.mrb[0].mxu0
      %v2229 = vadd.f32 %v1512, %v2228
      %v2230 = vpop.f32.mrb[0].mxu0
      %2231 = vmatprep.mubr.f32.mxu0 0.0
      %2232 = vmatmul.mubr.f32.gmra.mrb[0].mxu0 %v1676
      %v2233 = vpop.f32.mrb[0].mxu0
      %v2234 = vadd.f32 %v1512, %v2233
      %v2235 = vpop.f32.mrb[0].mxu0
      %2236 = vmatprep.mubr.f32.mxu0 0.0
      %2237 = vmatmul.mubr.f32.gmra.mrb[0].mxu0 %v1679
      %v2238 = vpop.f32.mrb[0].mxu0
      %v2239 = vadd.f32 %v1512, %v2238
      %v2240 = vpop.f32.mrb[0].mxu0
      %2241 = vmatprep.mubr.f32.mxu0 0.0
      %2242 = vmatmul.mubr.f32.gmra.mrb[0].mxu0 %v1682
      %v2243 = vpop.f32.mrb[0].mxu0
      %v2244 = vadd.f32 %v1512, %v2243
      %v2245 = vpop.f32.mrb[0].mxu0
      %2246 = vmatprep.mubr.f32.mxu0 0.0
      %2247 = vmatmul.mubr.f32.gmra.mrb[0].mxu0 %v1685
      %v2248 = vpop.f32.mrb[0].mxu0
      %v2249 = vadd.f32 %v1512, %v2248
      %v2250 = vpop.f32.mrb[0].mxu0
      %2251 = vmatprep.mubr.f32.mxu0 0.0
      %2252 = vmatmul.mubr.f32.gmra.mrb[0].mxu0 %v1688
      %v2253 = vpop.f32.mrb[0].mxu0
      %v2254 = vadd.f32 %v1512, %v2253
      %v2255 = vpop.f32.mrb[0].mxu0
      %2256 = vmatprep.mubr.f32.mxu0 0.0
      %2257 = vmatmul.mubr.f32.gmra.mrb[0].mxu0 %v1691
      %v2258 = vpop.f32.mrb[0].mxu0
      %v2259 = vadd.f32 %v1512, %v2258
      %v2260 = vpop.f32.mrb[0].mxu0
      %2261 = vmatprep.mubr.f32.mxu0 0.0
      %2262 = vmatmul.mubr.f32.gmra.mrb[0].mxu0 %v1694
      %v2263 = vpop.f32.mrb[0].mxu0
      %v2264 = vadd.f32 %v1512, %v2263
      %v2265 = vpop.f32.mrb[0].mxu0
      %2266 = vmatprep.mubr.f32.mxu0 0.0
      %2267 = vmatmul.mubr.f32.gmra.mrb[0].mxu0 %v1697
      %v2268 = vpop.f32.mrb[0].mxu0
      %v2269 = vadd.f32 %v1512, %v2268
      %v2270 = vpop.f32.mrb[0].mxu0
      %2271 = vmatprep.mubr.f32.mxu0 0.0
      %2272 = vmatmul.mubr.f32.gmra.mrb[0].mxu0 %v1700
      %v2273 = vpop.f32.mrb[0].mxu0
      %v2274 = vadd.f32 %v1512, %v2273
      %v2275 = vpop.f32.mrb[0].mxu0
      %2276 = vmatprep.mubr.f32.mxu0 0.0
      %2277 = vmatmul.mubr.f32.gmra.mrb[0].mxu0 %v1703
      %v2278 = vpop.f32.mrb[0].mxu0
      %v2279 = vadd.f32 %v1512, %v2278
      %v2280 = vpop.f32.mrb[0].mxu0
      %2281 = vmatprep.mubr.f32.mxu0 0.0
      %2282 = vmatmul.mubr.f32.gmra.mrb[0].mxu0 %v1706
      %v2283 = vpop.f32.mrb[0].mxu0
      %v2284 = vadd.f32 %v1512, %v2283
      %v2285 = vpop.f32.mrb[0].mxu0
      %2286 = vmatprep.mubr.f32.mxu0 0.0
      %2287 = vmatmul.mubr.f32.gmra.mrb[0].mxu0 %v1709
      %v2288 = vpop.f32.mrb[0].mxu0
      %v2289 = vadd.f32 %v1512, %v2288
      %v2290 = vpop.f32.mrb[0].mxu0
      %2291 = vmatprep.mubr.f32.mxu0 0.0
      %2292 = vmatmul.mubr.f32.gmra.mrb[0].mxu0 %v1712
      %v2293 = vpop.f32.mrb[0].mxu0
      %v2294 = vadd.f32 %v1512, %v2293
      %v2295 = vpop.f32.mrb[0].mxu0
      %2296 = vmatprep.mubr.f32.mxu0 0.0
      %2297 = vmatmul.mubr.f32.gmra.mrb[0].mxu0 %v1715
      %v2298 = vpop.f32.mrb[0].mxu0
      %v2299 = vadd.f32 %v1512, %v2298
      %v2300 = vpop.f32.mrb[0].mxu0
      %2301 = vmatprep.mubr.f32.mxu0 0.0
      %2302 = vmatmul.mubr.f32.gmra.mrb[0].mxu0 %v1718
      %v2303 = vpop.f32.mrb[0].mxu0
      %v2304 = vadd.f32 %v1512, %v2303
      %v2305 = vpop.f32.mrb[0].mxu0
      %2306 = vmatprep.mubr.f32.mxu0 0.0
      %2307 = vmatmul.mubr.f32.gmra.mrb[0].mxu0 %v1721
      %v2308 = vpop.f32.mrb[0].mxu0
      %v2309 = vadd.f32 %v1512, %v2308
      %v2310 = vpop.f32.mrb[0].mxu0
      %2311 = vmatprep.mubr.f32.mxu0 0.0
      %2312 = vmatmul.mubr.f32.gmra.mrb[0].mxu0 %v1724
      %v2313 = vpop.f32.mrb[0].mxu0
      %v2314 = vadd.f32 %v1512, %v2313
      %v2315 = vpop.f32.mrb[0].mxu0
      %2316 = vmatprep.mubr.f32.mxu0 0.0
      %2317 = vmatmul.mubr.f32.gmra.mrb[0].mxu0 %v1727
      %v2318 = vpop.f32.mrb[0].mxu0
      %v2319 = vadd.f32 %v1512, %v2318
      %v2320 = vpop.f32.mrb[0].mxu0
      %2321 = vmatprep.mubr.f32.mxu0 0.0
      %2322 = vmatmul.mubr.f32.gmra.mrb[0].mxu0 %v1730
      %v2323 = vpop.f32.mrb[0].mxu0
      %v2324 = vadd.f32 %v1512, %v2323
      %v2325 = vpop.f32.mrb[0].mxu0
      %2326 = vmatprep.mubr.f32.mxu0 0.0
      %2327 = vmatmul.mubr.f32.gmra.mrb[0].mxu0 %v1733
      %v2328 = vpop.f32.mrb[0].mxu0
      %v2329 = vadd.f32 %v1512, %v2328
      %v2330 = vpop.f32.mrb[0].mxu0
      %2331 = vmatprep.mubr.f32.mxu0 0.0
      %2332 = vmatmul.mubr.f32.gmra.mrb[0].mxu0 %v1736
      %v2333 = vpop.f32.mrb[0].mxu0
      %v2334 = vadd.f32 %v1512, %v2333
      %v2335 = vpop.f32.mrb[0].mxu0
      %2336 = vmatprep.mubr.f32.mxu0 0.0
      %2337 = vmatmul.mubr.f32.gmra.mrb[0].mxu0 %v1739
      %v2338 = vpop.f32.mrb[0].mxu0
      %v2339 = vadd.f32 %v1512, %v2338
      %v2340 = vpop.f32.mrb[0].mxu0
      %2341 = vmatprep.mubr.f32.mxu0 0.0
      %2342 = vmatmul.mubr.f32.gmra.mrb[0].mxu0 %v1742
      %v2343 = vpop.f32.mrb[0].mxu0
      %v2344 = vadd.f32 %v1512, %v2343
      %v2345 = vpop.f32.mrb[0].mxu0
      %2346 = vmatprep.mubr.f32.mxu0 0.0
      %2347 = vmatmul.mubr.f32.gmra.mrb[0].mxu0 %v1745
      %v2348 = vpop.f32.mrb[0].mxu0
      %v2349 = vadd.f32 %v1512, %v2348
      %v2350 = vpop.f32.mrb[0].mxu0
      %2351 = vmatprep.mubr.f32.mxu0 0.0
      %2352 = vmatmul.mubr.f32.gmra.mrb[0].mxu0 %v1748
      %v2353 = vpop.f32.mrb[0].mxu0
      %v2354 = vadd.f32 %v1512, %v2353
      %v2355 = vpop.f32.mrb[0].mxu0
      %2356 = vmatprep.mubr.f32.mxu0 0.0
      %2357 = vmatmul.mubr.f32.gmra.mrb[0].mxu0 %v1751
      %v2358 = vpop.f32.mrb[0].mxu0
      %v2359 = vadd.f32 %v1512, %v2358
      %v2360 = vpop.f32.mrb[0].mxu0
      %2361 = vmatprep.mubr.f32.mxu0 0.0
      %2362 = vmatmul.mubr.f32.gmra.mrb[0].mxu0 %v1754
      %v2363 = vpop.f32.mrb[0].mxu0
      %v2364 = vadd.f32 %v1512, %v2363
      %v2365 = vpop.f32.mrb[0].mxu0
      %2366 = vmatprep.mubr.f32.mxu0 0.0
      %2367 = vmatmul.mubr.f32.gmra.mrb[0].mxu0 %v1757
      %v2368 = vpop.f32.mrb[0].mxu0
      %v2369 = vadd.f32 %v1512, %v2368
      %v2370 = vpop.f32.mrb[0].mxu0
      %2371 = vmatprep.mubr.f32.mxu0 0.0
      %2372 = vmatmul.mubr.f32.gmra.mrb[0].mxu0 %v1760
      %v2373 = vpop.f32.mrb[0].mxu0
      %v2374 = vadd.f32 %v1512, %v2373
      %v2375 = vpop.f32.mrb[0].mxu0
      %2376 = vmatprep.mubr.f32.mxu0 0.0
      %2377 = vmatmul.mubr.f32.gmra.mrb[0].mxu0 %v1763
      %v2378 = vpop.f32.mrb[0].mxu0
      %v2379 = vadd.f32 %v1512, %v2378
      %v2380 = vpop.f32.mrb[0].mxu0
      %2381 = vmatprep.mubr.f32.mxu0 0.0
      %2382 = vmatmul.mubr.f32.gmra.mrb[0].mxu0 %v1766
      %v2383 = vpop.f32.mrb[0].mxu0
      %v2384 = vadd.f32 %v1512, %v2383
      %v2385 = vpop.f32.mrb[0].mxu0
      %2386 = vmatprep.mubr.f32.mxu0 0.0
      %2387 = vmatmul.mubr.f32.gmra.mrb[0].mxu0 %v1769
      %v2388 = vpop.f32.mrb[0].mxu0
      %v2389 = vadd.f32 %v1512, %v2388
      %v2390 = vpop.f32.mrb[0].mxu0
      %2391 = vmatprep.mubr.f32.mxu0 0.0
      %2392 = vmatmul.mubr.f32.gmra.mrb[0].mxu0 %v1772
      %v2393 = vpop.f32.mrb[0].mxu0
      %v2394 = vadd.f32 %v1512, %v2393
      %v2395 = vpop.f32.mrb[0].mxu0
      %2396 = vmatprep.mubr.f32.mxu0 0.0
      %2397 = vmatmul.mubr.f32.gmra.mrb[0].mxu0 %v1775
      %v2398 = vpop.f32.mrb[0].mxu0
      %v2399 = vadd.f32 %v1512, %v2398
      %v2400 = vpop.f32.mrb[0].mxu0
      %2401 = vmatprep.mubr.f32.mxu0 0.0
      %2402 = vmatmul.mubr.f32.gmra.mrb[0].mxu0 %v1778
      %v2403 = vpop.f32.mrb[0].mxu0
      %v2404 = vadd.f32 %v1512, %v2403
      %v2405 = vpop.f32.mrb[0].mxu0
      %2406 = vmatprep.mubr.f32.mxu0 0.0
      %2407 = vmatmul.mubr.f32.gmra.mrb[0].mxu0 %v1781
      %v2408 = vpop.f32.mrb[0].mxu0
      %v2409 = vadd.f32 %v1512, %v2408
      %v2410 = vpop.f32.mrb[0].mxu0
      %2411 = vmatprep.mubr.f32.mxu0 0.0
      %2412 = vmatmul.mubr.f32.gmra.mrb[0].mxu0 %v1784
      %v2413 = vpop.f32.mrb[0].mxu0
      %v2414 = vadd.f32 %v1512, %v2413
      %v2415 = vpop.f32.mrb[0].mxu0
      %2416 = vmatprep.mubr.f32.mxu0 0.0
      %2417 = vmatmul.mubr.f32.gmra.mrb[0].mxu0 %v1787
      %v2418 = vpop.f32.mrb[0].mxu0
      %v2419 = vadd.f32 %v1512, %v2418
      %v2420 = vpop.f32.mrb[0].mxu0
      %2421 = vmatprep.mubr.f32.mxu0 0.0
      %2422 = vmatmul.mubr.f32.gmra.mrb[0].mxu0 %v1790
      %v2423 = vpop.f32.mrb[0].mxu0
      %v2424 = vadd.f32 %v1512, %v2423
      %v2425 = vpop.f32.mrb[0].mxu0
      %2426 = vmatprep.mubr.f32.mxu0 0.0
      %2427 = vmatmul.mubr.f32.gmra.mrb[0].mxu0 %v1793
      %v2428 = vpop.f32.mrb[0].mxu0
      %v2429 = vadd.f32 %v1512, %v2428
      %v2430 = vpop.f32.mrb[0].mxu0
      %2431 = vmatprep.mubr.f32.mxu0 0.0
      %2432 = vmatmul.mubr.f32.gmra.mrb[0].mxu0 %v1796
      %v2433 = vpop.f32.mrb[0].mxu0
      %v2434 = vadd.f32 %v1512, %v2433
      %v2435 = vpop.f32.mrb[0].mxu0
      %2436 = vmatprep.mubr.f32.mxu0 0.0
      %2437 = vmatmul.mubr.f32.gmra.mrb[0].mxu0 %v1799
      %v2438 = vpop.f32.mrb[0].mxu0
      %v2439 = vadd.f32 %v1512, %v2438
      %v2440 = vpop.f32.mrb[0].mxu0
      %2441 = vmatprep.mubr.f32.mxu0 0.0
      %2442 = vmatmul.mubr.f32.gmra.mrb[0].mxu0 %v1802
      %v2443 = vpop.f32.mrb[0].mxu0
      %v2444 = vadd.f32 %v1512, %v2443
      %v2445 = vpop.f32.mrb[0].mxu0
      %2446 = vmatprep.mubr.f32.mxu0 0.0
      %2447 = vmatmul.mubr.f32.gmra.mrb[0].mxu0 %v1805
      %v2448 = vpop.f32.mrb[0].mxu0
      %v2449 = vadd.f32 %v1512, %v2448
      %v2450 = vpop.f32.mrb[0].mxu0
      %2451 = vmatprep.mubr.f32.mxu0 0.0
      %2452 = vmatmul.mubr.f32.gmra.mrb[0].mxu0 %v1808
      %v2453 = vpop.f32.mrb[0].mxu0
      %v2454 = vadd.f32 %v1512, %v2453
      %v2455 = vpop.f32.mrb[0].mxu0
      %2456 = vmatprep.mubr.f32.mxu0 0.0
      %2457 = vmatmul.mubr.f32.gmra.mrb[0].mxu0 %v1811
      %v2458 = vpop.f32.mrb[0].mxu0
      %v2459 = vadd.f32 %v1512, %v2458
      %v2460 = vpop.f32.mrb[0].mxu0
      %2461 = vmatprep.mubr.f32.mxu0 0.0
      %2462 = vmatmul.mubr.f32.gmra.mrb[0].mxu0 %v1814
      %v2463 = vpop.f32.mrb[0].mxu0
      %v2464 = vadd.f32 %v1512, %v2463
      %v2465 = vpop.f32.mrb[0].mxu0
      %2466 = vmatprep.mubr.f32.mxu0 0.0
      %2467 = vmatmul.mubr.f32.gmra.mrb[0].mxu0 %v1817
      %v2468 = vpop.f32.mrb[0].mxu0
      %v2469 = vadd.f32 %v1512, %v2468
      %v2470 = vpop.f32.mrb[0].mxu0
      %2471 = vmatprep.mubr.f32.mxu0 0.0
      %2472 = vmatmul.mubr.f32.gmra.mrb[0].mxu0 %v1820
      %v2473 = vpop.f32.mrb[0].mxu0
      %v2474 = vadd.f32 %v1512, %v2473
      %v2475 = vpop.f32.mrb[0].mxu0
      %2476 = vmatprep.mubr.f32.mxu0 0.0
      %2477 = vmatmul.mubr.f32.gmra.mrb[0].mxu0 %v1823
      %v2478 = vpop.f32.mrb[0].mxu0
      %v2479 = vadd.f32 %v1512, %v2478
      %v2480 = vpop.f32.mrb[0].mxu0
      %2481 = vmatprep.mubr.f32.mxu0 0.0
      %2482 = vmatmul.mubr.f32.gmra.mrb[0].mxu0 %v1826
      %v2483 = vpop.f32.mrb[0].mxu0
      %v2484 = vadd.f32 %v1512, %v2483
      %v2485 = vpop.f32.mrb[0].mxu0
      %2486 = vmatprep.mubr.f32.mxu0 0.0
      %2487 = vmatmul.mubr.f32.gmra.mrb[0].mxu0 %v1829
      %v2488 = vpop.f32.mrb[0].mxu0
      %v2489 = vadd.f32 %v1512, %v2488
      %v2490 = vpop.f32.mrb[0].mxu0
      %2491 = vmatprep.mubr.f32.mxu0 0.0
      %2492 = vmatmul.mubr.f32.gmra.mrb[0].mxu0 %v1832
      %v2493 = vpop.f32.mrb[0].mxu0
      %v2494 = vadd.f32 %v1512, %v2493
      %v2495 = vpop.f32.mrb[0].mxu0
      %2496 = vmatprep.mubr.f32.mxu0 0.0
      %2497 = vmatmul.mubr.f32.gmra.mrb[0].mxu0 %v1835
      %v2498 = vpop.f32.mrb[0].mxu0
      %v2499 = vadd.f32 %v1512, %v2498
      %v2500 = vpop.f32.mrb[0].mxu0
      %2501 = vmatprep.mubr.f32.mxu0 0.0
      %2502 = vmatmul.mubr.f32.gmra.mrb[0].mxu0 %v1838
      %v2503 = vpop.f32.mrb[0].mxu0
      %v2504 = vadd.f32 %v1512, %v2503
      %v2505 = vpop.f32.mrb[0].mxu0
      %2506 = vmatprep.mubr.f32.mxu0 0.0
      %2507 = vmatmul.mubr.f32.gmra.mrb[0].mxu0 %v1841
      %v2508 = vpop.f32.mrb[0].mxu0
      %v2509 = vadd.f32 %v1512, %v2508
      %v2510 = vpop.f32.mrb[0].mxu0
      %2511 = vmatprep.mubr.f32.mxu0 0.0
      %2512 = vmatmul.mubr.f32.gmra.mrb[0].mxu0 %v1844
      %v2513 = vpop.f32.mrb[0].mxu0
      %v2514 = vadd.f32 %v1512, %v2513
      %v2515 = vpop.f32.mrb[0].mxu0
      %2516 = vmatprep.mubr.f32.mxu0 0.0
      %2517 = vmatmul.mubr.f32.gmra.mrb[0].mxu0 %v1847
      %v2518 = vpop.f32.mrb[0].mxu0
      %v2519 = vadd.f32 %v1512, %v2518
      %v2520 = vpop.f32.mrb[0].mxu0
      %2521 = vmatprep.mubr.f32.mxu0 0.0
      %2522 = vmatmul.mubr.f32.gmra.mrb[0].mxu0 %v1850
      %v2523 = vpop.f32.mrb[0].mxu0
      %v2524 = vadd.f32 %v1512, %v2523
      %v2525 = vpop.f32.mrb[0].mxu0
      %2526 = vmatprep.mubr.f32.mxu0 0.0
      %2527 = vmatmul.mubr.f32.gmra.mrb[0].mxu0 %v1853
      %v2528 = vpop.f32.mrb[0].mxu0
      %v2529 = vadd.f32 %v1512, %v2528
      %v2530 = vpop.f32.mrb[0].mxu0
      %2531 = vmatprep.mubr.f32.mxu0 0.0
      %2532 = vmatmul.mubr.f32.gmra.mrb[0].mxu0 %v1856
      %v2533 = vpop.f32.mrb[0].mxu0
      %v2534 = vadd.f32 %v1512, %v2533
      %v2535 = vpop.f32.mrb[0].mxu0
      %2536 = vmatprep.mubr.f32.mxu0 0.0
      %2537 = vmatmul.mubr.f32.gmra.mrb[0].mxu0 %v1859
      %v2538 = vpop.f32.mrb[0].mxu0
      %v2539 = vadd.f32 %v1512, %v2538
      %v2540 = vpop.f32.mrb[0].mxu0
      %2541 = vmatprep.mubr.f32.mxu0 0.0
      %2542 = vmatmul.mubr.f32.gmra.mrb[0].mxu0 %v1862
      %v2543 = vpop.f32.mrb[0].mxu0
      %v2544 = vadd.f32 %v1512, %v2543
      %v2545 = vpop.f32.mrb[0].mxu0
      %2546 = vmatprep.mubr.f32.mxu0 0.0
      %2547 = vmatmul.mubr.f32.gmra.mrb[0].mxu0 %v1865
      %v2548 = vpop.f32.mrb[0].mxu0
      %v2549 = vadd.f32 %v1512, %v2548
      %v2550 = vpop.f32.mrb[0].mxu0
      %2551 = vmatprep.mubr.f32.mxu0 0.0
      %2552 = vmatmul.mubr.f32.gmra.mrb[0].mxu0 %v1868
      %v2553 = vpop.f32.mrb[0].mxu0
      %v2554 = vadd.f32 %v1512, %v2553
      %v2555 = vpop.f32.mrb[0].mxu0
      %2556 = vmatprep.mubr.f32.mxu0 0.0
      %2557 = vmatmul.mubr.f32.gmra.mrb[0].mxu0 %v1871
      %v2558 = vpop.f32.mrb[0].mxu0
      %v2559 = vadd.f32 %v1512, %v2558
      %v2560 = vpop.f32.mrb[0].mxu0
      %2561 = vmatprep.mubr.f32.mxu0 0.0
      %2562 = vmatmul.mubr.f32.gmra.mrb[0].mxu0 %v1874
      %v2563 = vpop.f32.mrb[0].mxu0
      %v2564 = vadd.f32 %v1512, %v2563
      %v2565 = vpop.f32.mrb[0].mxu0
      %2566 = vmatprep.mubr.f32.mxu0 0.0
      %2567 = vmatmul.mubr.f32.gmra.mrb[0].mxu0 %v1877
      %v2568 = vpop.f32.mrb[0].mxu0
      %v2569 = vadd.f32 %v1512, %v2568
      %v2570 = vpop.f32.mrb[0].mxu0
      %2571 = vmatprep.mubr.f32.mxu0 0.0
      %2572 = vmatmul.mubr.f32.gmra.mrb[0].mxu0 %v1880
      %v2573 = vpop.f32.mrb[0].mxu0
      %v2574 = vadd.f32 %v1512, %v2573
      %v2575 = vpop.f32.mrb[0].mxu0
      %2576 = vmatprep.mubr.f32.mxu0 0.0
      %2577 = vmatmul.mubr.f32.gmra.mrb[0].mxu0 %v1883
      %v2578 = vpop.f32.mrb[0].mxu0
      %v2579 = vadd.f32 %v1512, %v2578
      %v2580 = vpop.f32.mrb[0].mxu0
      %2581 = vmatprep.mubr.f32.mxu0 0.0
      %2582 = vmatmul.mubr.f32.gmra.mrb[0].mxu0 %v1886
      %v2583 = vpop.f32.mrb[0].mxu0
      %v2584 = vadd.f32 %v1512, %v2583
      %v2585 = vpop.f32.mrb[0].mxu0
      %2586 = vmatprep.mubr.f32.mxu0 0.0
      %2587 = vmatmul.mubr.f32.gmra.mrb[0].mxu0 %v1889
      %v2588 = vpop.f32.mrb[0].mxu0
      %v2589 = vadd.f32 %v1512, %v2588
      %v2590 = vpop.f32.mrb[0].mxu0
      %2591 = vmatprep.mubr.f32.mxu0 0.0
      %2592 = vmatmul.mubr.f32.gmra.mrb[0].mxu0 %v1892
      %v2593 = vpop.f32.mrb[0].mxu0
      %v2594 = vadd.f32 %v1512, %v2593
      %v2595 = vpop.f32.mrb[0].mxu0
      %2596 = vmatprep.mubr.f32.mxu0 0.0
      %2597 = vmatmul.mubr.f32.gmra.mrb[0].mxu0 %v1895
      %v2598 = vpop.f32.mrb[0].mxu0
      %v2599 = vadd.f32 %v1512, %v2598
      %v2600 = vpop.f32.mrb[0].mxu0
      %2601 = vdwg.mxu0
      %v2602 = vand.u32 2147483647, %v1964
      %v2603 = vand.u32 2147483647, %v1969
      %v2604 = vand.u32 2147483647, %v1974
      %v2605 = vand.u32 2147483647, %v1979
      %v2606 = vand.u32 2147483647, %v1984
      %v2607 = vand.u32 2147483647, %v1989
      %v2608 = vand.u32 2147483647, %v1994
      %v2609 = vand.u32 2147483647, %v1999
      %v2610 = vand.u32 2147483647, %v2004
      %v2611 = vand.u32 2147483647, %v2009
      %v2612 = vand.u32 2147483647, %v2014
      %v2613 = vand.u32 2147483647, %v2019
      %v2614 = vand.u32 2147483647, %v2024
      %v2615 = vand.u32 2147483647, %v2029
      %v2616 = vand.u32 2147483647, %v2034
      %v2617 = vand.u32 2147483647, %v2039
      %v2618 = vand.u32 2147483647, %v2044
      %v2619 = vand.u32 2147483647, %v2049
      %v2620 = vand.u32 2147483647, %v2054
      %v2621 = vand.u32 2147483647, %v2059
      %v2622 = vand.u32 2147483647, %v2064
      %v2623 = vand.u32 2147483647, %v2069
      %v2624 = vand.u32 2147483647, %v2074
      %v2625 = vand.u32 2147483647, %v2079
      %v2626 = vand.u32 2147483647, %v2084
      %v2627 = vand.u32 2147483647, %v2089
      %v2628 = vand.u32 2147483647, %v2094
      %v2629 = vand.u32 2147483647, %v2099
      %v2630 = vand.u32 2147483647, %v2104
      %v2631 = vand.u32 2147483647, %v2109
      %v2632 = vand.u32 2147483647, %v2114
      %v2633 = vand.u32 2147483647, %v2119
      %v2634 = vand.u32 2147483647, %v2124
      %v2635 = vand.u32 2147483647, %v2129
      %v2636 = vand.u32 2147483647, %v2134
      %v2637 = vand.u32 2147483647, %v2139
      %v2638 = vand.u32 2147483647, %v2144
      %v2639 = vand.u32 2147483647, %v2149
      %v2640 = vand.u32 2147483647, %v2154
      %v2641 = vand.u32 2147483647, %v2159
      %v2642 = vand.u32 2147483647, %v2164
      %v2643 = vand.u32 2147483647, %v2169
      %v2644 = vand.u32 2147483647, %v2174
      %v2645 = vand.u32 2147483647, %v2179
      %v2646 = vand.u32 2147483647, %v2184
      %v2647 = vand.u32 2147483647, %v2189
      %v2648 = vand.u32 2147483647, %v2194
      %v2649 = vand.u32 2147483647, %v2199
      %v2650 = vand.u32 2147483647, %v2204
      %v2651 = vand.u32 2147483647, %v2209
      %v2652 = vand.u32 2147483647, %v2214
      %v2653 = vand.u32 2147483647, %v2219
      %v2654 = vand.u32 2147483647, %v2224
      %v2655 = vand.u32 2147483647, %v2229
      %v2656 = vand.u32 2147483647, %v2234
      %v2657 = vand.u32 2147483647, %v2239
      %v2658 = vand.u32 2147483647, %v2244
      %v2659 = vand.u32 2147483647, %v2249
      %v2660 = vand.u32 2147483647, %v2254
      %v2661 = vand.u32 2147483647, %v2259
      %v2662 = vand.u32 2147483647, %v2264
      %v2663 = vand.u32 2147483647, %v2269
      %v2664 = vand.u32 2147483647, %v2274
      %v2665 = vand.u32 2147483647, %v2279
      %v2666 = vand.u32 2147483647, %v2284
      %v2667 = vand.u32 2147483647, %v2289
      %v2668 = vand.u32 2147483647, %v2294
      %v2669 = vand.u32 2147483647, %v2299
      %v2670 = vand.u32 2147483647, %v2304
      %v2671 = vand.u32 2147483647, %v2309
      %v2672 = vand.u32 2147483647, %v2314
      %v2673 = vand.u32 2147483647, %v2319
      %v2674 = vand.u32 2147483647, %v2324
      %v2675 = vand.u32 2147483647, %v2329
      %v2676 = vand.u32 2147483647, %v2334
      %v2677 = vand.u32 2147483647, %v2339
      %v2678 = vand.u32 2147483647, %v2344
      %v2679 = vand.u32 2147483647, %v2349
      %v2680 = vand.u32 2147483647, %v2354
      %v2681 = vand.u32 2147483647, %v2359
      %v2682 = vand.u32 2147483647, %v2364
      %v2683 = vand.u32 2147483647, %v2369
      %v2684 = vand.u32 2147483647, %v2374
      %v2685 = vand.u32 2147483647, %v2379
      %v2686 = vand.u32 2147483647, %v2384
      %v2687 = vand.u32 2147483647, %v2389
      %v2688 = vand.u32 2147483647, %v2394
      %v2689 = vand.u32 2147483647, %v2399
      %v2690 = vand.u32 2147483647, %v2404
      %v2691 = vand.u32 2147483647, %v2409
      %v2692 = vand.u32 2147483647, %v2414
      %v2693 = vand.u32 2147483647, %v2419
      %v2694 = vand.u32 2147483647, %v2424
      %v2695 = vand.u32 2147483647, %v2429
      %v2696 = vand.u32 2147483647, %v2434
      %v2697 = vand.u32 2147483647, %v2439
      %v2698 = vand.u32 2147483647, %v2444
      %v2699 = vand.u32 2147483647, %v2449
      %v2700 = vand.u32 2147483647, %v2454
      %v2701 = vand.u32 2147483647, %v2459
      %v2702 = vand.u32 2147483647, %v2464
      %v2703 = vand.u32 2147483647, %v2469
      %v2704 = vand.u32 2147483647, %v2474
      %v2705 = vand.u32 2147483647, %v2479
      %v2706 = vand.u32 2147483647, %v2484
      %v2707 = vand.u32 2147483647, %v2489
      %v2708 = vand.u32 2147483647, %v2494
      %v2709 = vand.u32 2147483647, %v2499
      %v2710 = vand.u32 2147483647, %v2504
      %v2711 = vand.u32 2147483647, %v2509
      %v2712 = vand.u32 2147483647, %v2514
      %v2713 = vand.u32 2147483647, %v2519
      %v2714 = vand.u32 2147483647, %v2524
      %v2715 = vand.u32 2147483647, %v2529
      %v2716 = vand.u32 2147483647, %v2534
      %v2717 = vand.u32 2147483647, %v2539
      %v2718 = vand.u32 2147483647, %v2544
      %v2719 = vand.u32 2147483647, %v2549
      %v2720 = vand.u32 2147483647, %v2554
      %v2721 = vand.u32 2147483647, %v2559
      %v2722 = vand.u32 2147483647, %v2564
      %v2723 = vand.u32 2147483647, %v2569
      %v2724 = vand.u32 2147483647, %v2574
      %v2725 = vand.u32 2147483647, %v2579
      %v2726 = vand.u32 2147483647, %v2584
      %v2727 = vand.u32 2147483647, %v2589
      %v2728 = vand.u32 2147483647, %v2594
      %v2729 = vand.u32 2147483647, %v2599
      %v2730 = vsel %vm291, %v2602, 0.0
      %2731 = vadd.xlane.f32.xlu0 %v2730
      %v2732 = vpop.xlane.xlu0 %2731
      %v2733 = vsel %vm291, %v2603, 0.0
      %2734 = vadd.xlane.f32.xlu0 %v2733
      %v2735 = vpop.xlane.xlu0 %2734
      %v2736 = vsel %vm291, %v2604, 0.0
      %2737 = vadd.xlane.f32.xlu0 %v2736
      %v2738 = vpop.xlane.xlu0 %2737
      %v2739 = vsel %vm291, %v2605, 0.0
      %2740 = vadd.xlane.f32.xlu0 %v2739
      %v2741 = vpop.xlane.xlu0 %2740
      %v2742 = vsel %vm291, %v2606, 0.0
      %2743 = vadd.xlane.f32.xlu0 %v2742
      %v2744 = vpop.xlane.xlu0 %2743
      %v2745 = vsel %vm291, %v2607, 0.0
      %2746 = vadd.xlane.f32.xlu0 %v2745
      %v2747 = vpop.xlane.xlu0 %2746
      %v2748 = vsel %vm291, %v2608, 0.0
      %2749 = vadd.xlane.f32.xlu0 %v2748
      %v2750 = vpop.xlane.xlu0 %2749
      %v2751 = vsel %vm291, %v2609, 0.0
      %2752 = vadd.xlane.f32.xlu0 %v2751
      %v2753 = vpop.xlane.xlu0 %2752
      %v2754 = vsel %vm291, %v2610, 0.0
      %2755 = vadd.xlane.f32.xlu0 %v2754
      %v2756 = vpop.xlane.xlu0 %2755
      %v2757 = vsel %vm291, %v2611, 0.0
      %2758 = vadd.xlane.f32.xlu0 %v2757
      %v2759 = vpop.xlane.xlu0 %2758
      %v2760 = vsel %vm291, %v2612, 0.0
      %2761 = vadd.xlane.f32.xlu0 %v2760
      %v2762 = vpop.xlane.xlu0 %2761
      %v2763 = vsel %vm291, %v2613, 0.0
      %2764 = vadd.xlane.f32.xlu0 %v2763
      %v2765 = vpop.xlane.xlu0 %2764
      %v2766 = vsel %vm291, %v2614, 0.0
      %2767 = vadd.xlane.f32.xlu0 %v2766
      %v2768 = vpop.xlane.xlu0 %2767
      %v2769 = vsel %vm291, %v2615, 0.0
      %2770 = vadd.xlane.f32.xlu0 %v2769
      %v2771 = vpop.xlane.xlu0 %2770
      %v2772 = vsel %vm291, %v2616, 0.0
      %2773 = vadd.xlane.f32.xlu0 %v2772
      %v2774 = vpop.xlane.xlu0 %2773
      %v2775 = vsel %vm291, %v2617, 0.0
      %2776 = vadd.xlane.f32.xlu0 %v2775
      %v2777 = vpop.xlane.xlu0 %2776
      %v2778 = vsel %vm291, %v2618, 0.0
      %2779 = vadd.xlane.f32.xlu0 %v2778
      %v2780 = vpop.xlane.xlu0 %2779
      %v2781 = vsel %vm291, %v2619, 0.0
      %2782 = vadd.xlane.f32.xlu0 %v2781
      %v2783 = vpop.xlane.xlu0 %2782
      %v2784 = vsel %vm291, %v2620, 0.0
      %2785 = vadd.xlane.f32.xlu0 %v2784
      %v2786 = vpop.xlane.xlu0 %2785
      %v2787 = vsel %vm291, %v2621, 0.0
      %2788 = vadd.xlane.f32.xlu0 %v2787
      %v2789 = vpop.xlane.xlu0 %2788
      %v2790 = vsel %vm291, %v2622, 0.0
      %2791 = vadd.xlane.f32.xlu0 %v2790
      %v2792 = vpop.xlane.xlu0 %2791
      %v2793 = vsel %vm291, %v2623, 0.0
      %2794 = vadd.xlane.f32.xlu0 %v2793
      %v2795 = vpop.xlane.xlu0 %2794
      %v2796 = vsel %vm291, %v2624, 0.0
      %2797 = vadd.xlane.f32.xlu0 %v2796
      %v2798 = vpop.xlane.xlu0 %2797
      %v2799 = vsel %vm291, %v2625, 0.0
      %2800 = vadd.xlane.f32.xlu0 %v2799
      %v2801 = vpop.xlane.xlu0 %2800
      %v2802 = vsel %vm291, %v2626, 0.0
      %2803 = vadd.xlane.f32.xlu0 %v2802
      %v2804 = vpop.xlane.xlu0 %2803
      %v2805 = vsel %vm291, %v2627, 0.0
      %2806 = vadd.xlane.f32.xlu0 %v2805
      %v2807 = vpop.xlane.xlu0 %2806
      %v2808 = vsel %vm291, %v2628, 0.0
      %2809 = vadd.xlane.f32.xlu0 %v2808
      %v2810 = vpop.xlane.xlu0 %2809
      %v2811 = vsel %vm291, %v2629, 0.0
      %2812 = vadd.xlane.f32.xlu0 %v2811
      %v2813 = vpop.xlane.xlu0 %2812
      %v2814 = vsel %vm291, %v2630, 0.0
      %2815 = vadd.xlane.f32.xlu0 %v2814
      %v2816 = vpop.xlane.xlu0 %2815
      %v2817 = vsel %vm291, %v2631, 0.0
      %2818 = vadd.xlane.f32.xlu0 %v2817
      %v2819 = vpop.xlane.xlu0 %2818
      %v2820 = vsel %vm291, %v2632, 0.0
      %2821 = vadd.xlane.f32.xlu0 %v2820
      %v2822 = vpop.xlane.xlu0 %2821
      %v2823 = vsel %vm291, %v2633, 0.0
      %2824 = vadd.xlane.f32.xlu0 %v2823
      %v2825 = vpop.xlane.xlu0 %2824
      %v2826 = vsel %vm291, %v2634, 0.0
      %2827 = vadd.xlane.f32.xlu0 %v2826
      %v2828 = vpop.xlane.xlu0 %2827
      %v2829 = vsel %vm291, %v2635, 0.0
      %2830 = vadd.xlane.f32.xlu0 %v2829
      %v2831 = vpop.xlane.xlu0 %2830
      %v2832 = vsel %vm291, %v2636, 0.0
      %2833 = vadd.xlane.f32.xlu0 %v2832
      %v2834 = vpop.xlane.xlu0 %2833
      %v2835 = vsel %vm291, %v2637, 0.0
      %2836 = vadd.xlane.f32.xlu0 %v2835
      %v2837 = vpop.xlane.xlu0 %2836
      %v2838 = vsel %vm291, %v2638, 0.0
      %2839 = vadd.xlane.f32.xlu0 %v2838
      %v2840 = vpop.xlane.xlu0 %2839
      %v2841 = vsel %vm291, %v2639, 0.0
      %2842 = vadd.xlane.f32.xlu0 %v2841
      %v2843 = vpop.xlane.xlu0 %2842
      %v2844 = vsel %vm291, %v2640, 0.0
      %2845 = vadd.xlane.f32.xlu0 %v2844
      %v2846 = vpop.xlane.xlu0 %2845
      %v2847 = vsel %vm291, %v2641, 0.0
      %2848 = vadd.xlane.f32.xlu0 %v2847
      %v2849 = vpop.xlane.xlu0 %2848
      %v2850 = vsel %vm291, %v2642, 0.0
      %2851 = vadd.xlane.f32.xlu0 %v2850
      %v2852 = vpop.xlane.xlu0 %2851
      %v2853 = vsel %vm291, %v2643, 0.0
      %2854 = vadd.xlane.f32.xlu0 %v2853
      %v2855 = vpop.xlane.xlu0 %2854
      %v2856 = vsel %vm291, %v2644, 0.0
      %2857 = vadd.xlane.f32.xlu0 %v2856
      %v2858 = vpop.xlane.xlu0 %2857
      %v2859 = vsel %vm291, %v2645, 0.0
      %2860 = vadd.xlane.f32.xlu0 %v2859
      %v2861 = vpop.xlane.xlu0 %2860
      %v2862 = vsel %vm291, %v2646, 0.0
      %2863 = vadd.xlane.f32.xlu0 %v2862
      %v2864 = vpop.xlane.xlu0 %2863
      %v2865 = vsel %vm291, %v2647, 0.0
      %2866 = vadd.xlane.f32.xlu0 %v2865
      %v2867 = vpop.xlane.xlu0 %2866
      %v2868 = vsel %vm291, %v2648, 0.0
      %2869 = vadd.xlane.f32.xlu0 %v2868
      %v2870 = vpop.xlane.xlu0 %2869
      %v2871 = vsel %vm291, %v2649, 0.0
      %2872 = vadd.xlane.f32.xlu0 %v2871
      %v2873 = vpop.xlane.xlu0 %2872
      %v2874 = vsel %vm291, %v2650, 0.0
      %2875 = vadd.xlane.f32.xlu0 %v2874
      %v2876 = vpop.xlane.xlu0 %2875
      %v2877 = vsel %vm291, %v2651, 0.0
      %2878 = vadd.xlane.f32.xlu0 %v2877
      %v2879 = vpop.xlane.xlu0 %2878
      %v2880 = vsel %vm291, %v2652, 0.0
      %2881 = vadd.xlane.f32.xlu0 %v2880
      %v2882 = vpop.xlane.xlu0 %2881
      %v2883 = vsel %vm291, %v2653, 0.0
      %2884 = vadd.xlane.f32.xlu0 %v2883
      %v2885 = vpop.xlane.xlu0 %2884
      %v2886 = vsel %vm291, %v2654, 0.0
      %2887 = vadd.xlane.f32.xlu0 %v2886
      %v2888 = vpop.xlane.xlu0 %2887
      %v2889 = vsel %vm291, %v2655, 0.0
      %2890 = vadd.xlane.f32.xlu0 %v2889
      %v2891 = vpop.xlane.xlu0 %2890
      %v2892 = vsel %vm291, %v2656, 0.0
      %2893 = vadd.xlane.f32.xlu0 %v2892
      %v2894 = vpop.xlane.xlu0 %2893
      %v2895 = vsel %vm291, %v2657, 0.0
      %2896 = vadd.xlane.f32.xlu0 %v2895
      %v2897 = vpop.xlane.xlu0 %2896
      %v2898 = vsel %vm291, %v2658, 0.0
      %2899 = vadd.xlane.f32.xlu0 %v2898
      %v2900 = vpop.xlane.xlu0 %2899
      %v2901 = vsel %vm291, %v2659, 0.0
      %2902 = vadd.xlane.f32.xlu0 %v2901
      %v2903 = vpop.xlane.xlu0 %2902
      %v2904 = vsel %vm291, %v2660, 0.0
      %2905 = vadd.xlane.f32.xlu0 %v2904
      %v2906 = vpop.xlane.xlu0 %2905
      %v2907 = vsel %vm291, %v2661, 0.0
      %2908 = vadd.xlane.f32.xlu0 %v2907
      %v2909 = vpop.xlane.xlu0 %2908
      %v2910 = vsel %vm291, %v2662, 0.0
      %2911 = vadd.xlane.f32.xlu0 %v2910
      %v2912 = vpop.xlane.xlu0 %2911
      %v2913 = vsel %vm291, %v2663, 0.0
      %2914 = vadd.xlane.f32.xlu0 %v2913
      %v2915 = vpop.xlane.xlu0 %2914
      %v2916 = vsel %vm291, %v2664, 0.0
      %2917 = vadd.xlane.f32.xlu0 %v2916
      %v2918 = vpop.xlane.xlu0 %2917
      %v2919 = vsel %vm291, %v2665, 0.0
      %2920 = vadd.xlane.f32.xlu0 %v2919
      %v2921 = vpop.xlane.xlu0 %2920
      %v2922 = vsel %vm291, %v2666, 0.0
      %2923 = vadd.xlane.f32.xlu0 %v2922
      %v2924 = vpop.xlane.xlu0 %2923
      %v2925 = vsel %vm291, %v2667, 0.0
      %2926 = vadd.xlane.f32.xlu0 %v2925
      %v2927 = vpop.xlane.xlu0 %2926
      %v2928 = vsel %vm291, %v2668, 0.0
      %2929 = vadd.xlane.f32.xlu0 %v2928
      %v2930 = vpop.xlane.xlu0 %2929
      %v2931 = vsel %vm291, %v2669, 0.0
      %2932 = vadd.xlane.f32.xlu0 %v2931
      %v2933 = vpop.xlane.xlu0 %2932
      %v2934 = vsel %vm291, %v2670, 0.0
      %2935 = vadd.xlane.f32.xlu0 %v2934
      %v2936 = vpop.xlane.xlu0 %2935
      %v2937 = vsel %vm291, %v2671, 0.0
      %2938 = vadd.xlane.f32.xlu0 %v2937
      %v2939 = vpop.xlane.xlu0 %2938
      %v2940 = vsel %vm291, %v2672, 0.0
      %2941 = vadd.xlane.f32.xlu0 %v2940
      %v2942 = vpop.xlane.xlu0 %2941
      %v2943 = vsel %vm291, %v2673, 0.0
      %2944 = vadd.xlane.f32.xlu0 %v2943
      %v2945 = vpop.xlane.xlu0 %2944
      %v2946 = vsel %vm291, %v2674, 0.0
      %2947 = vadd.xlane.f32.xlu0 %v2946
      %v2948 = vpop.xlane.xlu0 %2947
      %v2949 = vsel %vm291, %v2675, 0.0
      %2950 = vadd.xlane.f32.xlu0 %v2949
      %v2951 = vpop.xlane.xlu0 %2950
      %v2952 = vsel %vm291, %v2676, 0.0
      %2953 = vadd.xlane.f32.xlu0 %v2952
      %v2954 = vpop.xlane.xlu0 %2953
      %v2955 = vsel %vm291, %v2677, 0.0
      %2956 = vadd.xlane.f32.xlu0 %v2955
      %v2957 = vpop.xlane.xlu0 %2956
      %v2958 = vsel %vm291, %v2678, 0.0
      %2959 = vadd.xlane.f32.xlu0 %v2958
      %v2960 = vpop.xlane.xlu0 %2959
      %v2961 = vsel %vm291, %v2679, 0.0
      %2962 = vadd.xlane.f32.xlu0 %v2961
      %v2963 = vpop.xlane.xlu0 %2962
      %v2964 = vsel %vm291, %v2680, 0.0
      %2965 = vadd.xlane.f32.xlu0 %v2964
      %v2966 = vpop.xlane.xlu0 %2965
      %v2967 = vsel %vm291, %v2681, 0.0
      %2968 = vadd.xlane.f32.xlu0 %v2967
      %v2969 = vpop.xlane.xlu0 %2968
      %v2970 = vsel %vm291, %v2682, 0.0
      %2971 = vadd.xlane.f32.xlu0 %v2970
      %v2972 = vpop.xlane.xlu0 %2971
      %v2973 = vsel %vm291, %v2683, 0.0
      %2974 = vadd.xlane.f32.xlu0 %v2973
      %v2975 = vpop.xlane.xlu0 %2974
      %v2976 = vsel %vm291, %v2684, 0.0
      %2977 = vadd.xlane.f32.xlu0 %v2976
      %v2978 = vpop.xlane.xlu0 %2977
      %v2979 = vsel %vm291, %v2685, 0.0
      %2980 = vadd.xlane.f32.xlu0 %v2979
      %v2981 = vpop.xlane.xlu0 %2980
      %v2982 = vsel %vm291, %v2686, 0.0
      %2983 = vadd.xlane.f32.xlu0 %v2982
      %v2984 = vpop.xlane.xlu0 %2983
      %v2985 = vsel %vm291, %v2687, 0.0
      %2986 = vadd.xlane.f32.xlu0 %v2985
      %v2987 = vpop.xlane.xlu0 %2986
      %v2988 = vsel %vm291, %v2688, 0.0
      %2989 = vadd.xlane.f32.xlu0 %v2988
      %v2990 = vpop.xlane.xlu0 %2989
      %v2991 = vsel %vm291, %v2689, 0.0
      %2992 = vadd.xlane.f32.xlu0 %v2991
      %v2993 = vpop.xlane.xlu0 %2992
      %v2994 = vsel %vm291, %v2690, 0.0
      %2995 = vadd.xlane.f32.xlu0 %v2994
      %v2996 = vpop.xlane.xlu0 %2995
      %v2997 = vsel %vm291, %v2691, 0.0
      %2998 = vadd.xlane.f32.xlu0 %v2997
      %v2999 = vpop.xlane.xlu0 %2998
      %v3000 = vsel %vm291, %v2692, 0.0
      %3001 = vadd.xlane.f32.xlu0 %v3000
      %v3002 = vpop.xlane.xlu0 %3001
      %v3003 = vsel %vm291, %v2693, 0.0
      %3004 = vadd.xlane.f32.xlu0 %v3003
      %v3005 = vpop.xlane.xlu0 %3004
      %v3006 = vsel %vm291, %v2694, 0.0
      %3007 = vadd.xlane.f32.xlu0 %v3006
      %v3008 = vpop.xlane.xlu0 %3007
      %v3009 = vsel %vm291, %v2695, 0.0
      %3010 = vadd.xlane.f32.xlu0 %v3009
      %v3011 = vpop.xlane.xlu0 %3010
      %v3012 = vsel %vm291, %v2696, 0.0
      %3013 = vadd.xlane.f32.xlu0 %v3012
      %v3014 = vpop.xlane.xlu0 %3013
      %v3015 = vsel %vm291, %v2697, 0.0
      %3016 = vadd.xlane.f32.xlu0 %v3015
      %v3017 = vpop.xlane.xlu0 %3016
      %v3018 = vsel %vm291, %v2698, 0.0
      %3019 = vadd.xlane.f32.xlu0 %v3018
      %v3020 = vpop.xlane.xlu0 %3019
      %v3021 = vsel %vm291, %v2699, 0.0
      %3022 = vadd.xlane.f32.xlu0 %v3021
      %v3023 = vpop.xlane.xlu0 %3022
      %v3024 = vsel %vm291, %v2700, 0.0
      %3025 = vadd.xlane.f32.xlu0 %v3024
      %v3026 = vpop.xlane.xlu0 %3025
      %v3027 = vsel %vm291, %v2701, 0.0
      %3028 = vadd.xlane.f32.xlu0 %v3027
      %v3029 = vpop.xlane.xlu0 %3028
      %v3030 = vsel %vm291, %v2702, 0.0
      %3031 = vadd.xlane.f32.xlu0 %v3030
      %v3032 = vpop.xlane.xlu0 %3031
      %v3033 = vsel %vm291, %v2703, 0.0
      %3034 = vadd.xlane.f32.xlu0 %v3033
      %v3035 = vpop.xlane.xlu0 %3034
      %v3036 = vsel %vm291, %v2704, 0.0
      %3037 = vadd.xlane.f32.xlu0 %v3036
      %v3038 = vpop.xlane.xlu0 %3037
      %v3039 = vsel %vm291, %v2705, 0.0
      %3040 = vadd.xlane.f32.xlu0 %v3039
      %v3041 = vpop.xlane.xlu0 %3040
      %v3042 = vsel %vm291, %v2706, 0.0
      %3043 = vadd.xlane.f32.xlu0 %v3042
      %v3044 = vpop.xlane.xlu0 %3043
      %v3045 = vsel %vm291, %v2707, 0.0
      %3046 = vadd.xlane.f32.xlu0 %v3045
      %v3047 = vpop.xlane.xlu0 %3046
      %v3048 = vsel %vm291, %v2708, 0.0
      %3049 = vadd.xlane.f32.xlu0 %v3048
      %v3050 = vpop.xlane.xlu0 %3049
      %v3051 = vsel %vm291, %v2709, 0.0
      %3052 = vadd.xlane.f32.xlu0 %v3051
      %v3053 = vpop.xlane.xlu0 %3052
      %v3054 = vsel %vm291, %v2710, 0.0
      %3055 = vadd.xlane.f32.xlu0 %v3054
      %v3056 = vpop.xlane.xlu0 %3055
      %v3057 = vsel %vm291, %v2711, 0.0
      %3058 = vadd.xlane.f32.xlu0 %v3057
      %v3059 = vpop.xlane.xlu0 %3058
      %v3060 = vsel %vm291, %v2712, 0.0
      %3061 = vadd.xlane.f32.xlu0 %v3060
      %v3062 = vpop.xlane.xlu0 %3061
      %v3063 = vsel %vm291, %v2713, 0.0
      %3064 = vadd.xlane.f32.xlu0 %v3063
      %v3065 = vpop.xlane.xlu0 %3064
      %v3066 = vsel %vm291, %v2714, 0.0
      %3067 = vadd.xlane.f32.xlu0 %v3066
      %v3068 = vpop.xlane.xlu0 %3067
      %v3069 = vsel %vm291, %v2715, 0.0
      %3070 = vadd.xlane.f32.xlu0 %v3069
      %v3071 = vpop.xlane.xlu0 %3070
      %v3072 = vsel %vm291, %v2716, 0.0
      %3073 = vadd.xlane.f32.xlu0 %v3072
      %v3074 = vpop.xlane.xlu0 %3073
      %v3075 = vsel %vm291, %v2717, 0.0
      %3076 = vadd.xlane.f32.xlu0 %v3075
      %v3077 = vpop.xlane.xlu0 %3076
      %v3078 = vsel %vm291, %v2718, 0.0
      %3079 = vadd.xlane.f32.xlu0 %v3078
      %v3080 = vpop.xlane.xlu0 %3079
      %v3081 = vsel %vm291, %v2719, 0.0
      %3082 = vadd.xlane.f32.xlu0 %v3081
      %v3083 = vpop.xlane.xlu0 %3082
      %v3084 = vsel %vm291, %v2720, 0.0
      %3085 = vadd.xlane.f32.xlu0 %v3084
      %v3086 = vpop.xlane.xlu0 %3085
      %v3087 = vsel %vm291, %v2721, 0.0
      %3088 = vadd.xlane.f32.xlu0 %v3087
      %v3089 = vpop.xlane.xlu0 %3088
      %v3090 = vsel %vm291, %v2722, 0.0
      %3091 = vadd.xlane.f32.xlu0 %v3090
      %v3092 = vpop.xlane.xlu0 %3091
      %v3093 = vsel %vm291, %v2723, 0.0
      %3094 = vadd.xlane.f32.xlu0 %v3093
      %v3095 = vpop.xlane.xlu0 %3094
      %v3096 = vsel %vm291, %v2724, 0.0
      %3097 = vadd.xlane.f32.xlu0 %v3096
      %v3098 = vpop.xlane.xlu0 %3097
      %v3099 = vsel %vm291, %v2725, 0.0
      %3100 = vadd.xlane.f32.xlu0 %v3099
      %v3101 = vpop.xlane.xlu0 %3100
      %v3102 = vsel %vm291, %v2726, 0.0
      %3103 = vadd.xlane.f32.xlu0 %v3102
      %v3104 = vpop.xlane.xlu0 %3103
      %v3105 = vsel %vm291, %v2727, 0.0
      %3106 = vadd.xlane.f32.xlu0 %v3105
      %v3107 = vpop.xlane.xlu0 %3106
      %v3108 = vsel %vm291, %v2728, 0.0
      %3109 = vadd.xlane.f32.xlu0 %v3108
      %v3110 = vpop.xlane.xlu0 %3109
      %v3111 = vsel %vm291, %v2729, 0.0
      %3112 = vadd.xlane.f32.xlu0 %v3111
      %v3113 = vpop.xlane.xlu0 %3112
      %v3114 = vsel %vm291, %v1964, 0.0
      %3115 = vadd.xlane.f32.xlu0 %v3114
      %v3116 = vpop.xlane.xlu0 %3115
      %v3117 = vsel %vm291, %v1969, 0.0
      %3118 = vadd.xlane.f32.xlu0 %v3117
      %v3119 = vpop.xlane.xlu0 %3118
      %v3120 = vsel %vm291, %v1974, 0.0
      %3121 = vadd.xlane.f32.xlu0 %v3120
      %v3122 = vpop.xlane.xlu0 %3121
      %v3123 = vsel %vm291, %v1979, 0.0
      %3124 = vadd.xlane.f32.xlu0 %v3123
      %v3125 = vpop.xlane.xlu0 %3124
      %v3126 = vsel %vm291, %v1984, 0.0
      %3127 = vadd.xlane.f32.xlu0 %v3126
      %v3128 = vpop.xlane.xlu0 %3127
      %v3129 = vsel %vm291, %v1989, 0.0
      %3130 = vadd.xlane.f32.xlu0 %v3129
      %v3131 = vpop.xlane.xlu0 %3130
      %v3132 = vsel %vm291, %v1994, 0.0
      %3133 = vadd.xlane.f32.xlu0 %v3132
      %v3134 = vpop.xlane.xlu0 %3133
      %v3135 = vsel %vm291, %v1999, 0.0
      %3136 = vadd.xlane.f32.xlu0 %v3135
      %v3137 = vpop.xlane.xlu0 %3136
      %v3138 = vsel %vm291, %v2004, 0.0
      %3139 = vadd.xlane.f32.xlu0 %v3138
      %v3140 = vpop.xlane.xlu0 %3139
      %v3141 = vsel %vm291, %v2009, 0.0
      %3142 = vadd.xlane.f32.xlu0 %v3141
      %v3143 = vpop.xlane.xlu0 %3142
      %v3144 = vsel %vm291, %v2014, 0.0
      %3145 = vadd.xlane.f32.xlu0 %v3144
      %v3146 = vpop.xlane.xlu0 %3145
      %v3147 = vsel %vm291, %v2019, 0.0
      %3148 = vadd.xlane.f32.xlu0 %v3147
      %v3149 = vpop.xlane.xlu0 %3148
      %v3150 = vsel %vm291, %v2024, 0.0
      %3151 = vadd.xlane.f32.xlu0 %v3150
      %v3152 = vpop.xlane.xlu0 %3151
      %v3153 = vsel %vm291, %v2029, 0.0
      %3154 = vadd.xlane.f32.xlu0 %v3153
      %v3155 = vpop.xlane.xlu0 %3154
      %v3156 = vsel %vm291, %v2034, 0.0
      %3157 = vadd.xlane.f32.xlu0 %v3156
      %v3158 = vpop.xlane.xlu0 %3157
      %v3159 = vsel %vm291, %v2039, 0.0
      %3160 = vadd.xlane.f32.xlu0 %v3159
      %v3161 = vpop.xlane.xlu0 %3160
      %v3162 = vsel %vm291, %v2044, 0.0
      %3163 = vadd.xlane.f32.xlu0 %v3162
      %v3164 = vpop.xlane.xlu0 %3163
      %v3165 = vsel %vm291, %v2049, 0.0
      %3166 = vadd.xlane.f32.xlu0 %v3165
      %v3167 = vpop.xlane.xlu0 %3166
      %v3168 = vsel %vm291, %v2054, 0.0
      %3169 = vadd.xlane.f32.xlu0 %v3168
      %v3170 = vpop.xlane.xlu0 %3169
      %v3171 = vsel %vm291, %v2059, 0.0
      %3172 = vadd.xlane.f32.xlu0 %v3171
      %v3173 = vpop.xlane.xlu0 %3172
      %v3174 = vsel %vm291, %v2064, 0.0
      %3175 = vadd.xlane.f32.xlu0 %v3174
      %v3176 = vpop.xlane.xlu0 %3175
      %v3177 = vsel %vm291, %v2069, 0.0
      %3178 = vadd.xlane.f32.xlu0 %v3177
      %v3179 = vpop.xlane.xlu0 %3178
      %v3180 = vsel %vm291, %v2074, 0.0
      %3181 = vadd.xlane.f32.xlu0 %v3180
      %v3182 = vpop.xlane.xlu0 %3181
      %v3183 = vsel %vm291, %v2079, 0.0
      %3184 = vadd.xlane.f32.xlu0 %v3183
      %v3185 = vpop.xlane.xlu0 %3184
      %v3186 = vsel %vm291, %v2084, 0.0
      %3187 = vadd.xlane.f32.xlu0 %v3186
      %v3188 = vpop.xlane.xlu0 %3187
      %v3189 = vsel %vm291, %v2089, 0.0
      %3190 = vadd.xlane.f32.xlu0 %v3189
      %v3191 = vpop.xlane.xlu0 %3190
      %v3192 = vsel %vm291, %v2094, 0.0
      %3193 = vadd.xlane.f32.xlu0 %v3192
      %v3194 = vpop.xlane.xlu0 %3193
      %v3195 = vsel %vm291, %v2099, 0.0
      %3196 = vadd.xlane.f32.xlu0 %v3195
      %v3197 = vpop.xlane.xlu0 %3196
      %v3198 = vsel %vm291, %v2104, 0.0
      %3199 = vadd.xlane.f32.xlu0 %v3198
      %v3200 = vpop.xlane.xlu0 %3199
      %v3201 = vsel %vm291, %v2109, 0.0
      %3202 = vadd.xlane.f32.xlu0 %v3201
      %v3203 = vpop.xlane.xlu0 %3202
      %v3204 = vsel %vm291, %v2114, 0.0
      %3205 = vadd.xlane.f32.xlu0 %v3204
      %v3206 = vpop.xlane.xlu0 %3205
      %v3207 = vsel %vm291, %v2119, 0.0
      %3208 = vadd.xlane.f32.xlu0 %v3207
      %v3209 = vpop.xlane.xlu0 %3208
      %v3210 = vsel %vm291, %v2124, 0.0
      %3211 = vadd.xlane.f32.xlu0 %v3210
      %v3212 = vpop.xlane.xlu0 %3211
      %v3213 = vsel %vm291, %v2129, 0.0
      %3214 = vadd.xlane.f32.xlu0 %v3213
      %v3215 = vpop.xlane.xlu0 %3214
      %v3216 = vsel %vm291, %v2134, 0.0
      %3217 = vadd.xlane.f32.xlu0 %v3216
      %v3218 = vpop.xlane.xlu0 %3217
      %v3219 = vsel %vm291, %v2139, 0.0
      %3220 = vadd.xlane.f32.xlu0 %v3219
      %v3221 = vpop.xlane.xlu0 %3220
      %v3222 = vsel %vm291, %v2144, 0.0
      %3223 = vadd.xlane.f32.xlu0 %v3222
      %v3224 = vpop.xlane.xlu0 %3223
      %v3225 = vsel %vm291, %v2149, 0.0
      %3226 = vadd.xlane.f32.xlu0 %v3225
      %v3227 = vpop.xlane.xlu0 %3226
      %v3228 = vsel %vm291, %v2154, 0.0
      %3229 = vadd.xlane.f32.xlu0 %v3228
      %v3230 = vpop.xlane.xlu0 %3229
      %v3231 = vsel %vm291, %v2159, 0.0
      %3232 = vadd.xlane.f32.xlu0 %v3231
      %v3233 = vpop.xlane.xlu0 %3232
      %v3234 = vsel %vm291, %v2164, 0.0
      %3235 = vadd.xlane.f32.xlu0 %v3234
      %v3236 = vpop.xlane.xlu0 %3235
      %v3237 = vsel %vm291, %v2169, 0.0
      %3238 = vadd.xlane.f32.xlu0 %v3237
      %v3239 = vpop.xlane.xlu0 %3238
      %v3240 = vsel %vm291, %v2174, 0.0
      %3241 = vadd.xlane.f32.xlu0 %v3240
      %v3242 = vpop.xlane.xlu0 %3241
      %v3243 = vsel %vm291, %v2179, 0.0
      %3244 = vadd.xlane.f32.xlu0 %v3243
      %v3245 = vpop.xlane.xlu0 %3244
      %v3246 = vsel %vm291, %v2184, 0.0
      %3247 = vadd.xlane.f32.xlu0 %v3246
      %v3248 = vpop.xlane.xlu0 %3247
      %v3249 = vsel %vm291, %v2189, 0.0
      %3250 = vadd.xlane.f32.xlu0 %v3249
      %v3251 = vpop.xlane.xlu0 %3250
      %v3252 = vsel %vm291, %v2194, 0.0
      %3253 = vadd.xlane.f32.xlu0 %v3252
      %v3254 = vpop.xlane.xlu0 %3253
      %v3255 = vsel %vm291, %v2199, 0.0
      %3256 = vadd.xlane.f32.xlu0 %v3255
      %v3257 = vpop.xlane.xlu0 %3256
      %v3258 = vsel %vm291, %v2204, 0.0
      %3259 = vadd.xlane.f32.xlu0 %v3258
      %v3260 = vpop.xlane.xlu0 %3259
      %v3261 = vsel %vm291, %v2209, 0.0
      %3262 = vadd.xlane.f32.xlu0 %v3261
      %v3263 = vpop.xlane.xlu0 %3262
      %v3264 = vsel %vm291, %v2214, 0.0
      %3265 = vadd.xlane.f32.xlu0 %v3264
      %v3266 = vpop.xlane.xlu0 %3265
      %v3267 = vsel %vm291, %v2219, 0.0
      %3268 = vadd.xlane.f32.xlu0 %v3267
      %v3269 = vpop.xlane.xlu0 %3268
      %v3270 = vsel %vm291, %v2224, 0.0
      %3271 = vadd.xlane.f32.xlu0 %v3270
      %v3272 = vpop.xlane.xlu0 %3271
      %v3273 = vsel %vm291, %v2229, 0.0
      %3274 = vadd.xlane.f32.xlu0 %v3273
      %v3275 = vpop.xlane.xlu0 %3274
      %v3276 = vsel %vm291, %v2234, 0.0
      %3277 = vadd.xlane.f32.xlu0 %v3276
      %v3278 = vpop.xlane.xlu0 %3277
      %v3279 = vsel %vm291, %v2239, 0.0
      %3280 = vadd.xlane.f32.xlu0 %v3279
      %v3281 = vpop.xlane.xlu0 %3280
      %v3282 = vsel %vm291, %v2244, 0.0
      %3283 = vadd.xlane.f32.xlu0 %v3282
      %v3284 = vpop.xlane.xlu0 %3283
      %v3285 = vsel %vm291, %v2249, 0.0
      %3286 = vadd.xlane.f32.xlu0 %v3285
      %v3287 = vpop.xlane.xlu0 %3286
      %v3288 = vsel %vm291, %v2254, 0.0
      %3289 = vadd.xlane.f32.xlu0 %v3288
      %v3290 = vpop.xlane.xlu0 %3289
      %v3291 = vsel %vm291, %v2259, 0.0
      %3292 = vadd.xlane.f32.xlu0 %v3291
      %v3293 = vpop.xlane.xlu0 %3292
      %v3294 = vsel %vm291, %v2264, 0.0
      %3295 = vadd.xlane.f32.xlu0 %v3294
      %v3296 = vpop.xlane.xlu0 %3295
      %v3297 = vsel %vm291, %v2269, 0.0
      %3298 = vadd.xlane.f32.xlu0 %v3297
      %v3299 = vpop.xlane.xlu0 %3298
      %v3300 = vsel %vm291, %v2274, 0.0
      %3301 = vadd.xlane.f32.xlu0 %v3300
      %v3302 = vpop.xlane.xlu0 %3301
      %v3303 = vsel %vm291, %v2279, 0.0
      %3304 = vadd.xlane.f32.xlu0 %v3303
      %v3305 = vpop.xlane.xlu0 %3304
      %v3306 = vsel %vm291, %v2284, 0.0
      %3307 = vadd.xlane.f32.xlu0 %v3306
      %v3308 = vpop.xlane.xlu0 %3307
      %v3309 = vsel %vm291, %v2289, 0.0
      %3310 = vadd.xlane.f32.xlu0 %v3309
      %v3311 = vpop.xlane.xlu0 %3310
      %v3312 = vsel %vm291, %v2294, 0.0
      %3313 = vadd.xlane.f32.xlu0 %v3312
      %v3314 = vpop.xlane.xlu0 %3313
      %v3315 = vsel %vm291, %v2299, 0.0
      %3316 = vadd.xlane.f32.xlu0 %v3315
      %v3317 = vpop.xlane.xlu0 %3316
      %v3318 = vsel %vm291, %v2304, 0.0
      %3319 = vadd.xlane.f32.xlu0 %v3318
      %v3320 = vpop.xlane.xlu0 %3319
      %v3321 = vsel %vm291, %v2309, 0.0
      %3322 = vadd.xlane.f32.xlu0 %v3321
      %v3323 = vpop.xlane.xlu0 %3322
      %v3324 = vsel %vm291, %v2314, 0.0
      %3325 = vadd.xlane.f32.xlu0 %v3324
      %v3326 = vpop.xlane.xlu0 %3325
      %v3327 = vsel %vm291, %v2319, 0.0
      %3328 = vadd.xlane.f32.xlu0 %v3327
      %v3329 = vpop.xlane.xlu0 %3328
      %v3330 = vsel %vm291, %v2324, 0.0
      %3331 = vadd.xlane.f32.xlu0 %v3330
      %v3332 = vpop.xlane.xlu0 %3331
      %v3333 = vsel %vm291, %v2329, 0.0
      %3334 = vadd.xlane.f32.xlu0 %v3333
      %v3335 = vpop.xlane.xlu0 %3334
      %v3336 = vsel %vm291, %v2334, 0.0
      %3337 = vadd.xlane.f32.xlu0 %v3336
      %v3338 = vpop.xlane.xlu0 %3337
      %v3339 = vsel %vm291, %v2339, 0.0
      %3340 = vadd.xlane.f32.xlu0 %v3339
      %v3341 = vpop.xlane.xlu0 %3340
      %v3342 = vsel %vm291, %v2344, 0.0
      %3343 = vadd.xlane.f32.xlu0 %v3342
      %v3344 = vpop.xlane.xlu0 %3343
      %v3345 = vsel %vm291, %v2349, 0.0
      %3346 = vadd.xlane.f32.xlu0 %v3345
      %v3347 = vpop.xlane.xlu0 %3346
      %v3348 = vsel %vm291, %v2354, 0.0
      %3349 = vadd.xlane.f32.xlu0 %v3348
      %v3350 = vpop.xlane.xlu0 %3349
      %v3351 = vsel %vm291, %v2359, 0.0
      %3352 = vadd.xlane.f32.xlu0 %v3351
      %v3353 = vpop.xlane.xlu0 %3352
      %v3354 = vsel %vm291, %v2364, 0.0
      %3355 = vadd.xlane.f32.xlu0 %v3354
      %v3356 = vpop.xlane.xlu0 %3355
      %v3357 = vsel %vm291, %v2369, 0.0
      %3358 = vadd.xlane.f32.xlu0 %v3357
      %v3359 = vpop.xlane.xlu0 %3358
      %v3360 = vsel %vm291, %v2374, 0.0
      %3361 = vadd.xlane.f32.xlu0 %v3360
      %v3362 = vpop.xlane.xlu0 %3361
      %v3363 = vsel %vm291, %v2379, 0.0
      %3364 = vadd.xlane.f32.xlu0 %v3363
      %v3365 = vpop.xlane.xlu0 %3364
      %v3366 = vsel %vm291, %v2384, 0.0
      %3367 = vadd.xlane.f32.xlu0 %v3366
      %v3368 = vpop.xlane.xlu0 %3367
      %v3369 = vsel %vm291, %v2389, 0.0
      %3370 = vadd.xlane.f32.xlu0 %v3369
      %v3371 = vpop.xlane.xlu0 %3370
      %v3372 = vsel %vm291, %v2394, 0.0
      %3373 = vadd.xlane.f32.xlu0 %v3372
      %v3374 = vpop.xlane.xlu0 %3373
      %v3375 = vsel %vm291, %v2399, 0.0
      %3376 = vadd.xlane.f32.xlu0 %v3375
      %v3377 = vpop.xlane.xlu0 %3376
      %v3378 = vsel %vm291, %v2404, 0.0
      %3379 = vadd.xlane.f32.xlu0 %v3378
      %v3380 = vpop.xlane.xlu0 %3379
      %v3381 = vsel %vm291, %v2409, 0.0
      %3382 = vadd.xlane.f32.xlu0 %v3381
      %v3383 = vpop.xlane.xlu0 %3382
      %v3384 = vsel %vm291, %v2414, 0.0
      %3385 = vadd.xlane.f32.xlu0 %v3384
      %v3386 = vpop.xlane.xlu0 %3385
      %v3387 = vsel %vm291, %v2419, 0.0
      %3388 = vadd.xlane.f32.xlu0 %v3387
      %v3389 = vpop.xlane.xlu0 %3388
      %v3390 = vsel %vm291, %v2424, 0.0
      %3391 = vadd.xlane.f32.xlu0 %v3390
      %v3392 = vpop.xlane.xlu0 %3391
      %v3393 = vsel %vm291, %v2429, 0.0
      %3394 = vadd.xlane.f32.xlu0 %v3393
      %v3395 = vpop.xlane.xlu0 %3394
      %v3396 = vsel %vm291, %v2434, 0.0
      %3397 = vadd.xlane.f32.xlu0 %v3396
      %v3398 = vpop.xlane.xlu0 %3397
      %v3399 = vsel %vm291, %v2439, 0.0
      %3400 = vadd.xlane.f32.xlu0 %v3399
      %v3401 = vpop.xlane.xlu0 %3400
      %v3402 = vsel %vm291, %v2444, 0.0
      %3403 = vadd.xlane.f32.xlu0 %v3402
      %v3404 = vpop.xlane.xlu0 %3403
      %v3405 = vsel %vm291, %v2449, 0.0
      %3406 = vadd.xlane.f32.xlu0 %v3405
      %v3407 = vpop.xlane.xlu0 %3406
      %v3408 = vsel %vm291, %v2454, 0.0
      %3409 = vadd.xlane.f32.xlu0 %v3408
      %v3410 = vpop.xlane.xlu0 %3409
      %v3411 = vsel %vm291, %v2459, 0.0
      %3412 = vadd.xlane.f32.xlu0 %v3411
      %v3413 = vpop.xlane.xlu0 %3412
      %v3414 = vsel %vm291, %v2464, 0.0
      %3415 = vadd.xlane.f32.xlu0 %v3414
      %v3416 = vpop.xlane.xlu0 %3415
      %v3417 = vsel %vm291, %v2469, 0.0
      %3418 = vadd.xlane.f32.xlu0 %v3417
      %v3419 = vpop.xlane.xlu0 %3418
      %v3420 = vsel %vm291, %v2474, 0.0
      %3421 = vadd.xlane.f32.xlu0 %v3420
      %v3422 = vpop.xlane.xlu0 %3421
      %v3423 = vsel %vm291, %v2479, 0.0
      %3424 = vadd.xlane.f32.xlu0 %v3423
      %v3425 = vpop.xlane.xlu0 %3424
      %v3426 = vsel %vm291, %v2484, 0.0
      %3427 = vadd.xlane.f32.xlu0 %v3426
      %v3428 = vpop.xlane.xlu0 %3427
      %v3429 = vsel %vm291, %v2489, 0.0
      %3430 = vadd.xlane.f32.xlu0 %v3429
      %v3431 = vpop.xlane.xlu0 %3430
      %v3432 = vsel %vm291, %v2494, 0.0
      %3433 = vadd.xlane.f32.xlu0 %v3432
      %v3434 = vpop.xlane.xlu0 %3433
      %v3435 = vsel %vm291, %v2499, 0.0
      %3436 = vadd.xlane.f32.xlu0 %v3435
      %v3437 = vpop.xlane.xlu0 %3436
      %v3438 = vsel %vm291, %v2504, 0.0
      %3439 = vadd.xlane.f32.xlu0 %v3438
      %v3440 = vpop.xlane.xlu0 %3439
      %v3441 = vsel %vm291, %v2509, 0.0
      %3442 = vadd.xlane.f32.xlu0 %v3441
      %v3443 = vpop.xlane.xlu0 %3442
      %v3444 = vsel %vm291, %v2514, 0.0
      %3445 = vadd.xlane.f32.xlu0 %v3444
      %v3446 = vpop.xlane.xlu0 %3445
      %v3447 = vsel %vm291, %v2519, 0.0
      %3448 = vadd.xlane.f32.xlu0 %v3447
      %v3449 = vpop.xlane.xlu0 %3448
      %v3450 = vsel %vm291, %v2524, 0.0
      %3451 = vadd.xlane.f32.xlu0 %v3450
      %v3452 = vpop.xlane.xlu0 %3451
      %v3453 = vsel %vm291, %v2529, 0.0
      %3454 = vadd.xlane.f32.xlu0 %v3453
      %v3455 = vpop.xlane.xlu0 %3454
      %v3456 = vsel %vm291, %v2534, 0.0
      %3457 = vadd.xlane.f32.xlu0 %v3456
      %v3458 = vpop.xlane.xlu0 %3457
      %v3459 = vsel %vm291, %v2539, 0.0
      %3460 = vadd.xlane.f32.xlu0 %v3459
      %v3461 = vpop.xlane.xlu0 %3460
      %v3462 = vsel %vm291, %v2544, 0.0
      %3463 = vadd.xlane.f32.xlu0 %v3462
      %v3464 = vpop.xlane.xlu0 %3463
      %v3465 = vsel %vm291, %v2549, 0.0
      %3466 = vadd.xlane.f32.xlu0 %v3465
      %v3467 = vpop.xlane.xlu0 %3466
      %v3468 = vsel %vm291, %v2554, 0.0
      %3469 = vadd.xlane.f32.xlu0 %v3468
      %v3470 = vpop.xlane.xlu0 %3469
      %v3471 = vsel %vm291, %v2559, 0.0
      %3472 = vadd.xlane.f32.xlu0 %v3471
      %v3473 = vpop.xlane.xlu0 %3472
      %v3474 = vsel %vm291, %v2564, 0.0
      %3475 = vadd.xlane.f32.xlu0 %v3474
      %v3476 = vpop.xlane.xlu0 %3475
      %v3477 = vsel %vm291, %v2569, 0.0
      %3478 = vadd.xlane.f32.xlu0 %v3477
      %v3479 = vpop.xlane.xlu0 %3478
      %v3480 = vsel %vm291, %v2574, 0.0
      %3481 = vadd.xlane.f32.xlu0 %v3480
      %v3482 = vpop.xlane.xlu0 %3481
      %v3483 = vsel %vm291, %v2579, 0.0
      %3484 = vadd.xlane.f32.xlu0 %v3483
      %v3485 = vpop.xlane.xlu0 %3484
      %v3486 = vsel %vm291, %v2584, 0.0
      %3487 = vadd.xlane.f32.xlu0 %v3486
      %v3488 = vpop.xlane.xlu0 %3487
      %v3489 = vsel %vm291, %v2589, 0.0
      %3490 = vadd.xlane.f32.xlu0 %v3489
      %v3491 = vpop.xlane.xlu0 %3490
      %v3492 = vsel %vm291, %v2594, 0.0
      %3493 = vadd.xlane.f32.xlu0 %v3492
      %v3494 = vpop.xlane.xlu0 %3493
      %v3495 = vsel %vm291, %v2599, 0.0
      %3496 = vadd.xlane.f32.xlu0 %v3495
      %v3497 = vpop.xlane.xlu0 %3496
      %v3626 = vshra.s32 %v2732, 23
      %v3627 = vshra.s32 %v2735, 23
      %v3628 = vshra.s32 %v2738, 23
      %v3629 = vshra.s32 %v2741, 23
      %v3630 = vshra.s32 %v2744, 23
      %v3631 = vshra.s32 %v2747, 23
      %v3632 = vshra.s32 %v2750, 23
      %v3633 = vshra.s32 %v2753, 23
      %v3634 = vshra.s32 %v2756, 23
      %v3635 = vshra.s32 %v2759, 23
      %v3636 = vshra.s32 %v2762, 23
      %v3637 = vshra.s32 %v2765, 23
      %v3638 = vshra.s32 %v2768, 23
      %v3639 = vshra.s32 %v2771, 23
      %v3640 = vshra.s32 %v2774, 23
      %v3641 = vshra.s32 %v2777, 23
      %v3642 = vshra.s32 %v2780, 23
      %v3643 = vshra.s32 %v2783, 23
      %v3644 = vshra.s32 %v2786, 23
      %v3645 = vshra.s32 %v2789, 23
      %v3646 = vshra.s32 %v2792, 23
      %v3647 = vshra.s32 %v2795, 23
      %v3648 = vshra.s32 %v2798, 23
      %v3649 = vshra.s32 %v2801, 23
      %v3650 = vshra.s32 %v2804, 23
      %v3651 = vshra.s32 %v2807, 23
      %v3652 = vshra.s32 %v2810, 23
      %v3653 = vshra.s32 %v2813, 23
      %v3654 = vshra.s32 %v2816, 23
      %v3655 = vshra.s32 %v2819, 23
      %v3656 = vshra.s32 %v2822, 23
      %v3657 = vshra.s32 %v2825, 23
      %v3658 = vshra.s32 %v2828, 23
      %v3659 = vshra.s32 %v2831, 23
      %v3660 = vshra.s32 %v2834, 23
      %v3661 = vshra.s32 %v2837, 23
      %v3662 = vshra.s32 %v2840, 23
      %v3663 = vshra.s32 %v2843, 23
      %v3664 = vshra.s32 %v2846, 23
      %v3665 = vshra.s32 %v2849, 23
      %v3666 = vshra.s32 %v2852, 23
      %v3667 = vshra.s32 %v2855, 23
      %v3668 = vshra.s32 %v2858, 23
      %v3669 = vshra.s32 %v2861, 23
      %v3670 = vshra.s32 %v2864, 23
      %v3671 = vshra.s32 %v2867, 23
      %v3672 = vshra.s32 %v2870, 23
      %v3673 = vshra.s32 %v2873, 23
      %v3674 = vshra.s32 %v2876, 23
      %v3675 = vshra.s32 %v2879, 23
      %v3676 = vshra.s32 %v2882, 23
      %v3677 = vshra.s32 %v2885, 23
      %v3678 = vshra.s32 %v2888, 23
      %v3679 = vshra.s32 %v2891, 23
      %v3680 = vshra.s32 %v2894, 23
      %v3681 = vshra.s32 %v2897, 23
      %v3682 = vshra.s32 %v2900, 23
      %v3683 = vshra.s32 %v2903, 23
      %v3684 = vshra.s32 %v2906, 23
      %v3685 = vshra.s32 %v2909, 23
      %v3686 = vshra.s32 %v2912, 23
      %v3687 = vshra.s32 %v2915, 23
      %v3688 = vshra.s32 %v2918, 23
      %v3689 = vshra.s32 %v2921, 23
      %v3690 = vshra.s32 %v2924, 23
      %v3691 = vshra.s32 %v2927, 23
      %v3692 = vshra.s32 %v2930, 23
      %v3693 = vshra.s32 %v2933, 23
      %v3694 = vshra.s32 %v2936, 23
      %v3695 = vshra.s32 %v2939, 23
      %v3696 = vshra.s32 %v2942, 23
      %v3697 = vshra.s32 %v2945, 23
      %v3698 = vshra.s32 %v2948, 23
      %v3699 = vshra.s32 %v2951, 23
      %v3700 = vshra.s32 %v2954, 23
      %v3701 = vshra.s32 %v2957, 23
      %v3702 = vshra.s32 %v2960, 23
      %v3703 = vshra.s32 %v2963, 23
      %v3704 = vshra.s32 %v2966, 23
      %v3705 = vshra.s32 %v2969, 23
      %v3706 = vshra.s32 %v2972, 23
      %v3707 = vshra.s32 %v2975, 23
      %v3708 = vshra.s32 %v2978, 23
      %v3709 = vshra.s32 %v2981, 23
      %v3710 = vshra.s32 %v2984, 23
      %v3711 = vshra.s32 %v2987, 23
      %v3712 = vshra.s32 %v2990, 23
      %v3713 = vshra.s32 %v2993, 23
      %v3714 = vshra.s32 %v2996, 23
      %v3715 = vshra.s32 %v2999, 23
      %v3716 = vshra.s32 %v3002, 23
      %v3717 = vshra.s32 %v3005, 23
      %v3718 = vshra.s32 %v3008, 23
      %v3719 = vshra.s32 %v3011, 23
      %v3720 = vshra.s32 %v3014, 23
      %v3721 = vshra.s32 %v3017, 23
      %v3722 = vshra.s32 %v3020, 23
      %v3723 = vshra.s32 %v3023, 23
      %v3724 = vshra.s32 %v3026, 23
      %v3725 = vshra.s32 %v3029, 23
      %v3726 = vshra.s32 %v3032, 23
      %v3727 = vshra.s32 %v3035, 23
      %v3728 = vshra.s32 %v3038, 23
      %v3729 = vshra.s32 %v3041, 23
      %v3730 = vshra.s32 %v3044, 23
      %v3731 = vshra.s32 %v3047, 23
      %v3732 = vshra.s32 %v3050, 23
      %v3733 = vshra.s32 %v3053, 23
      %v3734 = vshra.s32 %v3056, 23
      %v3735 = vshra.s32 %v3059, 23
      %v3736 = vshra.s32 %v3062, 23
      %v3737 = vshra.s32 %v3065, 23
      %v3738 = vshra.s32 %v3068, 23
      %v3739 = vshra.s32 %v3071, 23
      %v3740 = vshra.s32 %v3074, 23
      %v3741 = vshra.s32 %v3077, 23
      %v3742 = vshra.s32 %v3080, 23
      %v3743 = vshra.s32 %v3083, 23
      %v3744 = vshra.s32 %v3086, 23
      %v3745 = vshra.s32 %v3089, 23
      %v3746 = vshra.s32 %v3092, 23
      %v3747 = vshra.s32 %v3095, 23
      %v3748 = vshra.s32 %v3098, 23
      %v3749 = vshra.s32 %v3101, 23
      %v3750 = vshra.s32 %v3104, 23
      %v3751 = vshra.s32 %v3107, 23
      %v3752 = vshra.s32 %v3110, 23
      %v3753 = vshra.s32 %v3113, 23
      %v3754 = vand.u32 %v3626, 255
      %v3755 = vand.u32 %v3627, 255
      %v3756 = vand.u32 %v3628, 255
      %v3757 = vand.u32 %v3629, 255
      %v3758 = vand.u32 %v3630, 255
      %v3759 = vand.u32 %v3631, 255
      %v3760 = vand.u32 %v3632, 255
      %v3761 = vand.u32 %v3633, 255
      %v3762 = vand.u32 %v3634, 255
      %v3763 = vand.u32 %v3635, 255
      %v3764 = vand.u32 %v3636, 255
      %v3765 = vand.u32 %v3637, 255
      %v3766 = vand.u32 %v3638, 255
      %v3767 = vand.u32 %v3639, 255
      %v3768 = vand.u32 %v3640, 255
      %v3769 = vand.u32 %v3641, 255
      %v3770 = vand.u32 %v3642, 255
      %v3771 = vand.u32 %v3643, 255
      %v3772 = vand.u32 %v3644, 255
      %v3773 = vand.u32 %v3645, 255
      %v3774 = vand.u32 %v3646, 255
      %v3775 = vand.u32 %v3647, 255
      %v3776 = vand.u32 %v3648, 255
      %v3777 = vand.u32 %v3649, 255
      %v3778 = vand.u32 %v3650, 255
      %v3779 = vand.u32 %v3651, 255
      %v3780 = vand.u32 %v3652, 255
      %v3781 = vand.u32 %v3653, 255
      %v3782 = vand.u32 %v3654, 255
      %v3783 = vand.u32 %v3655, 255
      %v3784 = vand.u32 %v3656, 255
      %v3785 = vand.u32 %v3657, 255
      %v3786 = vand.u32 %v3658, 255
      %v3787 = vand.u32 %v3659, 255
      %v3788 = vand.u32 %v3660, 255
      %v3789 = vand.u32 %v3661, 255
      %v3790 = vand.u32 %v3662, 255
      %v3791 = vand.u32 %v3663, 255
      %v3792 = vand.u32 %v3664, 255
      %v3793 = vand.u32 %v3665, 255
      %v3794 = vand.u32 %v3666, 255
      %v3795 = vand.u32 %v3667, 255
      %v3796 = vand.u32 %v3668, 255
      %v3797 = vand.u32 %v3669, 255
      %v3798 = vand.u32 %v3670, 255
      %v3799 = vand.u32 %v3671, 255
      %v3800 = vand.u32 %v3672, 255
      %v3801 = vand.u32 %v3673, 255
      %v3802 = vand.u32 %v3674, 255
      %v3803 = vand.u32 %v3675, 255
      %v3804 = vand.u32 %v3676, 255
      %v3805 = vand.u32 %v3677, 255
      %v3806 = vand.u32 %v3678, 255
      %v3807 = vand.u32 %v3679, 255
      %v3808 = vand.u32 %v3680, 255
      %v3809 = vand.u32 %v3681, 255
      %v3810 = vand.u32 %v3682, 255
      %v3811 = vand.u32 %v3683, 255
      %v3812 = vand.u32 %v3684, 255
      %v3813 = vand.u32 %v3685, 255
      %v3814 = vand.u32 %v3686, 255
      %v3815 = vand.u32 %v3687, 255
      %v3816 = vand.u32 %v3688, 255
      %v3817 = vand.u32 %v3689, 255
      %v3818 = vand.u32 %v3690, 255
      %v3819 = vand.u32 %v3691, 255
      %v3820 = vand.u32 %v3692, 255
      %v3821 = vand.u32 %v3693, 255
      %v3822 = vand.u32 %v3694, 255
      %v3823 = vand.u32 %v3695, 255
      %v3824 = vand.u32 %v3696, 255
      %v3825 = vand.u32 %v3697, 255
      %v3826 = vand.u32 %v3698, 255
      %v3827 = vand.u32 %v3699, 255
      %v3828 = vand.u32 %v3700, 255
      %v3829 = vand.u32 %v3701, 255
      %v3830 = vand.u32 %v3702, 255
      %v3831 = vand.u32 %v3703, 255
      %v3832 = vand.u32 %v3704, 255
      %v3833 = vand.u32 %v3705, 255
      %v3834 = vand.u32 %v3706, 255
      %v3835 = vand.u32 %v3707, 255
      %v3836 = vand.u32 %v3708, 255
      %v3837 = vand.u32 %v3709, 255
      %v3838 = vand.u32 %v3710, 255
      %v3839 = vand.u32 %v3711, 255
      %v3840 = vand.u32 %v3712, 255
      %v3841 = vand.u32 %v3713, 255
      %v3842 = vand.u32 %v3714, 255
      %v3843 = vand.u32 %v3715, 255
      %v3844 = vand.u32 %v3716, 255
      %v3845 = vand.u32 %v3717, 255
      %v3846 = vand.u32 %v3718, 255
      %v3847 = vand.u32 %v3719, 255
      %v3848 = vand.u32 %v3720, 255
      %v3849 = vand.u32 %v3721, 255
      %v3850 = vand.u32 %v3722, 255
      %v3851 = vand.u32 %v3723, 255
      %v3852 = vand.u32 %v3724, 255
      %v3853 = vand.u32 %v3725, 255
      %v3854 = vand.u32 %v3726, 255
      %v3855 = vand.u32 %v3727, 255
      %v3856 = vand.u32 %v3728, 255
      %v3857 = vand.u32 %v3729, 255
      %v3858 = vand.u32 %v3730, 255
      %v3859 = vand.u32 %v3731, 255
      %v3860 = vand.u32 %v3732, 255
      %v3861 = vand.u32 %v3733, 255
      %v3862 = vand.u32 %v3734, 255
      %v3863 = vand.u32 %v3735, 255
      %v3864 = vand.u32 %v3736, 255
      %v3865 = vand.u32 %v3737, 255
      %v3866 = vand.u32 %v3738, 255
      %v3867 = vand.u32 %v3739, 255
      %v3868 = vand.u32 %v3740, 255
      %v3869 = vand.u32 %v3741, 255
      %v3870 = vand.u32 %v3742, 255
      %v3871 = vand.u32 %v3743, 255
      %v3872 = vand.u32 %v3744, 255
      %v3873 = vand.u32 %v3745, 255
      %v3874 = vand.u32 %v3746, 255
      %v3875 = vand.u32 %v3747, 255
      %v3876 = vand.u32 %v3748, 255
      %v3877 = vand.u32 %v3749, 255
      %v3878 = vand.u32 %v3750, 255
      %v3879 = vand.u32 %v3751, 255
      %v3880 = vand.u32 %v3752, 255
      %v3881 = vand.u32 %v3753, 255
      %v3882 = vand.u32 %v2732, 8388607
      %v3883 = vand.u32 %v2735, 8388607
      %v3884 = vand.u32 %v2738, 8388607
      %v3885 = vand.u32 %v2741, 8388607
      %v3886 = vand.u32 %v2744, 8388607
      %v3887 = vand.u32 %v2747, 8388607
      %v3888 = vand.u32 %v2750, 8388607
      %v3889 = vand.u32 %v2753, 8388607
      %v3890 = vand.u32 %v2756, 8388607
      %v3891 = vand.u32 %v2759, 8388607
      %v3892 = vand.u32 %v2762, 8388607
      %v3893 = vand.u32 %v2765, 8388607
      %v3894 = vand.u32 %v2768, 8388607
      %v3895 = vand.u32 %v2771, 8388607
      %v3896 = vand.u32 %v2774, 8388607
      %v3897 = vand.u32 %v2777, 8388607
      %v3898 = vand.u32 %v2780, 8388607
      %v3899 = vand.u32 %v2783, 8388607
      %v3900 = vand.u32 %v2786, 8388607
      %v3901 = vand.u32 %v2789, 8388607
      %v3902 = vand.u32 %v2792, 8388607
      %v3903 = vand.u32 %v2795, 8388607
      %v3904 = vand.u32 %v2798, 8388607
      %v3905 = vand.u32 %v2801, 8388607
      %v3906 = vand.u32 %v2804, 8388607
      %v3907 = vand.u32 %v2807, 8388607
      %v3908 = vand.u32 %v2810, 8388607
      %v3909 = vand.u32 %v2813, 8388607
      %v3910 = vand.u32 %v2816, 8388607
      %v3911 = vand.u32 %v2819, 8388607
      %v3912 = vand.u32 %v2822, 8388607
      %v3913 = vand.u32 %v2825, 8388607
      %v3914 = vand.u32 %v2828, 8388607
      %v3915 = vand.u32 %v2831, 8388607
      %v3916 = vand.u32 %v2834, 8388607
      %v3917 = vand.u32 %v2837, 8388607
      %v3918 = vand.u32 %v2840, 8388607
      %v3919 = vand.u32 %v2843, 8388607
      %v3920 = vand.u32 %v2846, 8388607
      %v3921 = vand.u32 %v2849, 8388607
      %v3922 = vand.u32 %v2852, 8388607
      %v3923 = vand.u32 %v2855, 8388607
      %v3924 = vand.u32 %v2858, 8388607
      %v3925 = vand.u32 %v2861, 8388607
      %v3926 = vand.u32 %v2864, 8388607
      %v3927 = vand.u32 %v2867, 8388607
      %v3928 = vand.u32 %v2870, 8388607
      %v3929 = vand.u32 %v2873, 8388607
      %v3930 = vand.u32 %v2876, 8388607
      %v3931 = vand.u32 %v2879, 8388607
      %v3932 = vand.u32 %v2882, 8388607
      %v3933 = vand.u32 %v2885, 8388607
      %v3934 = vand.u32 %v2888, 8388607
      %v3935 = vand.u32 %v2891, 8388607
      %v3936 = vand.u32 %v2894, 8388607
      %v3937 = vand.u32 %v2897, 8388607
      %v3938 = vand.u32 %v2900, 8388607
      %v3939 = vand.u32 %v2903, 8388607
      %v3940 = vand.u32 %v2906, 8388607
      %v3941 = vand.u32 %v2909, 8388607
      %v3942 = vand.u32 %v2912, 8388607
      %v3943 = vand.u32 %v2915, 8388607
      %v3944 = vand.u32 %v2918, 8388607
      %v3945 = vand.u32 %v2921, 8388607
      %v3946 = vand.u32 %v2924, 8388607
      %v3947 = vand.u32 %v2927, 8388607
      %v3948 = vand.u32 %v2930, 8388607
      %v3949 = vand.u32 %v2933, 8388607
      %v3950 = vand.u32 %v2936, 8388607
      %v3951 = vand.u32 %v2939, 8388607
      %v3952 = vand.u32 %v2942, 8388607
      %v3953 = vand.u32 %v2945, 8388607
      %v3954 = vand.u32 %v2948, 8388607
      %v3955 = vand.u32 %v2951, 8388607
      %v3956 = vand.u32 %v2954, 8388607
      %v3957 = vand.u32 %v2957, 8388607
      %v3958 = vand.u32 %v2960, 8388607
      %v3959 = vand.u32 %v2963, 8388607
      %v3960 = vand.u32 %v2966, 8388607
      %v3961 = vand.u32 %v2969, 8388607
      %v3962 = vand.u32 %v2972, 8388607
      %v3963 = vand.u32 %v2975, 8388607
      %v3964 = vand.u32 %v2978, 8388607
      %v3965 = vand.u32 %v2981, 8388607
      %v3966 = vand.u32 %v2984, 8388607
      %v3967 = vand.u32 %v2987, 8388607
      %v3968 = vand.u32 %v2990, 8388607
      %v3969 = vand.u32 %v2993, 8388607
      %v3970 = vand.u32 %v2996, 8388607
      %v3971 = vand.u32 %v2999, 8388607
      %v3972 = vand.u32 %v3002, 8388607
      %v3973 = vand.u32 %v3005, 8388607
      %v3974 = vand.u32 %v3008, 8388607
      %v3975 = vand.u32 %v3011, 8388607
      %v3976 = vand.u32 %v3014, 8388607
      %v3977 = vand.u32 %v3017, 8388607
      %v3978 = vand.u32 %v3020, 8388607
      %v3979 = vand.u32 %v3023, 8388607
      %v3980 = vand.u32 %v3026, 8388607
      %v3981 = vand.u32 %v3029, 8388607
      %v3982 = vand.u32 %v3032, 8388607
      %v3983 = vand.u32 %v3035, 8388607
      %v3984 = vand.u32 %v3038, 8388607
      %v3985 = vand.u32 %v3041, 8388607
      %v3986 = vand.u32 %v3044, 8388607
      %v3987 = vand.u32 %v3047, 8388607
      %v3988 = vand.u32 %v3050, 8388607
      %v3989 = vand.u32 %v3053, 8388607
      %v3990 = vand.u32 %v3056, 8388607
      %v3991 = vand.u32 %v3059, 8388607
      %v3992 = vand.u32 %v3062, 8388607
      %v3993 = vand.u32 %v3065, 8388607
      %v3994 = vand.u32 %v3068, 8388607
      %v3995 = vand.u32 %v3071, 8388607
      %v3996 = vand.u32 %v3074, 8388607
      %v3997 = vand.u32 %v3077, 8388607
      %v3998 = vand.u32 %v3080, 8388607
      %v3999 = vand.u32 %v3083, 8388607
      %v4000 = vand.u32 %v3086, 8388607
      %v4001 = vand.u32 %v3089, 8388607
      %v4002 = vand.u32 %v3092, 8388607
      %v4003 = vand.u32 %v3095, 8388607
      %v4004 = vand.u32 %v3098, 8388607
      %v4005 = vand.u32 %v3101, 8388607
      %v4006 = vand.u32 %v3104, 8388607
      %v4007 = vand.u32 %v3107, 8388607
      %v4008 = vand.u32 %v3110, 8388607
      %v4009 = vand.u32 %v3113, 8388607
      %vm4010 = vcmp.eq.s32.totalorder %v3882, 0
      %vm4011 = vcmp.eq.s32.totalorder %v3883, 0
      %vm4012 = vcmp.eq.s32.totalorder %v3884, 0
      %vm4013 = vcmp.eq.s32.totalorder %v3885, 0
      %vm4014 = vcmp.eq.s32.totalorder %v3886, 0
      %vm4015 = vcmp.eq.s32.totalorder %v3887, 0
      %vm4016 = vcmp.eq.s32.totalorder %v3888, 0
      %vm4017 = vcmp.eq.s32.totalorder %v3889, 0
      %vm4018 = vcmp.eq.s32.totalorder %v3890, 0
      %vm4019 = vcmp.eq.s32.totalorder %v3891, 0
      %vm4020 = vcmp.eq.s32.totalorder %v3892, 0
      %vm4021 = vcmp.eq.s32.totalorder %v3893, 0
      %vm4022 = vcmp.eq.s32.totalorder %v3894, 0
      %vm4023 = vcmp.eq.s32.totalorder %v3895, 0
      %vm4024 = vcmp.eq.s32.totalorder %v3896, 0
      %vm4025 = vcmp.eq.s32.totalorder %v3897, 0
      %vm4026 = vcmp.eq.s32.totalorder %v3898, 0
      %vm4027 = vcmp.eq.s32.totalorder %v3899, 0
      %vm4028 = vcmp.eq.s32.totalorder %v3900, 0
      %vm4029 = vcmp.eq.s32.totalorder %v3901, 0
      %vm4030 = vcmp.eq.s32.totalorder %v3902, 0
      %vm4031 = vcmp.eq.s32.totalorder %v3903, 0
      %vm4032 = vcmp.eq.s32.totalorder %v3904, 0
      %vm4033 = vcmp.eq.s32.totalorder %v3905, 0
      %vm4034 = vcmp.eq.s32.totalorder %v3906, 0
      %vm4035 = vcmp.eq.s32.totalorder %v3907, 0
      %vm4036 = vcmp.eq.s32.totalorder %v3908, 0
      %vm4037 = vcmp.eq.s32.totalorder %v3909, 0
      %vm4038 = vcmp.eq.s32.totalorder %v3910, 0
      %vm4039 = vcmp.eq.s32.totalorder %v3911, 0
      %vm4040 = vcmp.eq.s32.totalorder %v3912, 0
      %vm4041 = vcmp.eq.s32.totalorder %v3913, 0
      %vm4042 = vcmp.eq.s32.totalorder %v3914, 0
      %vm4043 = vcmp.eq.s32.totalorder %v3915, 0
      %vm4044 = vcmp.eq.s32.totalorder %v3916, 0
      %vm4045 = vcmp.eq.s32.totalorder %v3917, 0
      %vm4046 = vcmp.eq.s32.totalorder %v3918, 0
      %vm4047 = vcmp.eq.s32.totalorder %v3919, 0
      %vm4048 = vcmp.eq.s32.totalorder %v3920, 0
      %vm4049 = vcmp.eq.s32.totalorder %v3921, 0
      %vm4050 = vcmp.eq.s32.totalorder %v3922, 0
      %vm4051 = vcmp.eq.s32.totalorder %v3923, 0
      %vm4052 = vcmp.eq.s32.totalorder %v3924, 0
      %vm4053 = vcmp.eq.s32.totalorder %v3925, 0
      %vm4054 = vcmp.eq.s32.totalorder %v3926, 0
      %vm4055 = vcmp.eq.s32.totalorder %v3927, 0
      %vm4056 = vcmp.eq.s32.totalorder %v3928, 0
      %vm4057 = vcmp.eq.s32.totalorder %v3929, 0
      %vm4058 = vcmp.eq.s32.totalorder %v3930, 0
      %vm4059 = vcmp.eq.s32.totalorder %v3931, 0
      %vm4060 = vcmp.eq.s32.totalorder %v3932, 0
      %vm4061 = vcmp.eq.s32.totalorder %v3933, 0
      %vm4062 = vcmp.eq.s32.totalorder %v3934, 0
      %vm4063 = vcmp.eq.s32.totalorder %v3935, 0
      %vm4064 = vcmp.eq.s32.totalorder %v3936, 0
      %vm4065 = vcmp.eq.s32.totalorder %v3937, 0
      %vm4066 = vcmp.eq.s32.totalorder %v3938, 0
      %vm4067 = vcmp.eq.s32.totalorder %v3939, 0
      %vm4068 = vcmp.eq.s32.totalorder %v3940, 0
      %vm4069 = vcmp.eq.s32.totalorder %v3941, 0
      %vm4070 = vcmp.eq.s32.totalorder %v3942, 0
      %vm4071 = vcmp.eq.s32.totalorder %v3943, 0
      %vm4072 = vcmp.eq.s32.totalorder %v3944, 0
      %vm4073 = vcmp.eq.s32.totalorder %v3945, 0
      %vm4074 = vcmp.eq.s32.totalorder %v3946, 0
      %vm4075 = vcmp.eq.s32.totalorder %v3947, 0
      %vm4076 = vcmp.eq.s32.totalorder %v3948, 0
      %vm4077 = vcmp.eq.s32.totalorder %v3949, 0
      %vm4078 = vcmp.eq.s32.totalorder %v3950, 0
      %vm4079 = vcmp.eq.s32.totalorder %v3951, 0
      %vm4080 = vcmp.eq.s32.totalorder %v3952, 0
      %vm4081 = vcmp.eq.s32.totalorder %v3953, 0
      %vm4082 = vcmp.eq.s32.totalorder %v3954, 0
      %vm4083 = vcmp.eq.s32.totalorder %v3955, 0
      %vm4084 = vcmp.eq.s32.totalorder %v3956, 0
      %vm4085 = vcmp.eq.s32.totalorder %v3957, 0
      %vm4086 = vcmp.eq.s32.totalorder %v3958, 0
      %vm4087 = vcmp.eq.s32.totalorder %v3959, 0
      %vm4088 = vcmp.eq.s32.totalorder %v3960, 0
      %vm4089 = vcmp.eq.s32.totalorder %v3961, 0
      %vm4090 = vcmp.eq.s32.totalorder %v3962, 0
      %vm4091 = vcmp.eq.s32.totalorder %v3963, 0
      %vm4092 = vcmp.eq.s32.totalorder %v3964, 0
      %vm4093 = vcmp.eq.s32.totalorder %v3965, 0
      %vm4094 = vcmp.eq.s32.totalorder %v3966, 0
      %vm4095 = vcmp.eq.s32.totalorder %v3967, 0
      %vm4096 = vcmp.eq.s32.totalorder %v3968, 0
      %vm4097 = vcmp.eq.s32.totalorder %v3969, 0
      %vm4098 = vcmp.eq.s32.totalorder %v3970, 0
      %vm4099 = vcmp.eq.s32.totalorder %v3971, 0
      %vm4100 = vcmp.eq.s32.totalorder %v3972, 0
      %vm4101 = vcmp.eq.s32.totalorder %v3973, 0
      %vm4102 = vcmp.eq.s32.totalorder %v3974, 0
      %vm4103 = vcmp.eq.s32.totalorder %v3975, 0
      %vm4104 = vcmp.eq.s32.totalorder %v3976, 0
      %vm4105 = vcmp.eq.s32.totalorder %v3977, 0
      %vm4106 = vcmp.eq.s32.totalorder %v3978, 0
      %vm4107 = vcmp.eq.s32.totalorder %v3979, 0
      %vm4108 = vcmp.eq.s32.totalorder %v3980, 0
      %vm4109 = vcmp.eq.s32.totalorder %v3981, 0
      %vm4110 = vcmp.eq.s32.totalorder %v3982, 0
      %vm4111 = vcmp.eq.s32.totalorder %v3983, 0
      %vm4112 = vcmp.eq.s32.totalorder %v3984, 0
      %vm4113 = vcmp.eq.s32.totalorder %v3985, 0
      %vm4114 = vcmp.eq.s32.totalorder %v3986, 0
      %vm4115 = vcmp.eq.s32.totalorder %v3987, 0
      %vm4116 = vcmp.eq.s32.totalorder %v3988, 0
      %vm4117 = vcmp.eq.s32.totalorder %v3989, 0
      %vm4118 = vcmp.eq.s32.totalorder %v3990, 0
      %vm4119 = vcmp.eq.s32.totalorder %v3991, 0
      %vm4120 = vcmp.eq.s32.totalorder %v3992, 0
      %vm4121 = vcmp.eq.s32.totalorder %v3993, 0
      %vm4122 = vcmp.eq.s32.totalorder %v3994, 0
      %vm4123 = vcmp.eq.s32.totalorder %v3995, 0
      %vm4124 = vcmp.eq.s32.totalorder %v3996, 0
      %vm4125 = vcmp.eq.s32.totalorder %v3997, 0
      %vm4126 = vcmp.eq.s32.totalorder %v3998, 0
      %vm4127 = vcmp.eq.s32.totalorder %v3999, 0
      %vm4128 = vcmp.eq.s32.totalorder %v4000, 0
      %vm4129 = vcmp.eq.s32.totalorder %v4001, 0
      %vm4130 = vcmp.eq.s32.totalorder %v4002, 0
      %vm4131 = vcmp.eq.s32.totalorder %v4003, 0
      %vm4132 = vcmp.eq.s32.totalorder %v4004, 0
      %vm4133 = vcmp.eq.s32.totalorder %v4005, 0
      %vm4134 = vcmp.eq.s32.totalorder %v4006, 0
      %vm4135 = vcmp.eq.s32.totalorder %v4007, 0
      %vm4136 = vcmp.eq.s32.totalorder %v4008, 0
      %vm4137 = vcmp.eq.s32.totalorder %v4009, 0
      %v4138 = vsub.s32 %v3754, 127
      %v4139 = vsub.s32 %v3755, 127
      %v4140 = vsub.s32 %v3756, 127
      %v4141 = vsub.s32 %v3757, 127
      %v4142 = vsub.s32 %v3758, 127
      %v4143 = vsub.s32 %v3759, 127
      %v4144 = vsub.s32 %v3760, 127
      %v4145 = vsub.s32 %v3761, 127
      %v4146 = vsub.s32 %v3762, 127
      %v4147 = vsub.s32 %v3763, 127
      %v4148 = vsub.s32 %v3764, 127
      %v4149 = vsub.s32 %v3765, 127
      %v4150 = vsub.s32 %v3766, 127
      %v4151 = vsub.s32 %v3767, 127
      %v4152 = vsub.s32 %v3768, 127
      %v4153 = vsub.s32 %v3769, 127
      %v4154 = vsub.s32 %v3770, 127
      %v4155 = vsub.s32 %v3771, 127
      %v4156 = vsub.s32 %v3772, 127
      %v4157 = vsub.s32 %v3773, 127
      %v4158 = vsub.s32 %v3774, 127
      %v4159 = vsub.s32 %v3775, 127
      %v4160 = vsub.s32 %v3776, 127
      %v4161 = vsub.s32 %v3777, 127
      %v4162 = vsub.s32 %v3778, 127
      %v4163 = vsub.s32 %v3779, 127
      %v4164 = vsub.s32 %v3780, 127
      %v4165 = vsub.s32 %v3781, 127
      %v4166 = vsub.s32 %v3782, 127
      %v4167 = vsub.s32 %v3783, 127
      %v4168 = vsub.s32 %v3784, 127
      %v4169 = vsub.s32 %v3785, 127
      %v4170 = vsub.s32 %v3786, 127
      %v4171 = vsub.s32 %v3787, 127
      %v4172 = vsub.s32 %v3788, 127
      %v4173 = vsub.s32 %v3789, 127
      %v4174 = vsub.s32 %v3790, 127
      %v4175 = vsub.s32 %v3791, 127
      %v4176 = vsub.s32 %v3792, 127
      %v4177 = vsub.s32 %v3793, 127
      %v4178 = vsub.s32 %v3794, 127
      %v4179 = vsub.s32 %v3795, 127
      %v4180 = vsub.s32 %v3796, 127
      %v4181 = vsub.s32 %v3797, 127
      %v4182 = vsub.s32 %v3798, 127
      %v4183 = vsub.s32 %v3799, 127
      %v4184 = vsub.s32 %v3800, 127
      %v4185 = vsub.s32 %v3801, 127
      %v4186 = vsub.s32 %v3802, 127
      %v4187 = vsub.s32 %v3803, 127
      %v4188 = vsub.s32 %v3804, 127
      %v4189 = vsub.s32 %v3805, 127
      %v4190 = vsub.s32 %v3806, 127
      %v4191 = vsub.s32 %v3807, 127
      %v4192 = vsub.s32 %v3808, 127
      %v4193 = vsub.s32 %v3809, 127
      %v4194 = vsub.s32 %v3810, 127
      %v4195 = vsub.s32 %v3811, 127
      %v4196 = vsub.s32 %v3812, 127
      %v4197 = vsub.s32 %v3813, 127
      %v4198 = vsub.s32 %v3814, 127
      %v4199 = vsub.s32 %v3815, 127
      %v4200 = vsub.s32 %v3816, 127
      %v4201 = vsub.s32 %v3817, 127
      %v4202 = vsub.s32 %v3818, 127
      %v4203 = vsub.s32 %v3819, 127
      %v4204 = vsub.s32 %v3820, 127
      %v4205 = vsub.s32 %v3821, 127
      %v4206 = vsub.s32 %v3822, 127
      %v4207 = vsub.s32 %v3823, 127
      %v4208 = vsub.s32 %v3824, 127
      %v4209 = vsub.s32 %v3825, 127
      %v4210 = vsub.s32 %v3826, 127
      %v4211 = vsub.s32 %v3827, 127
      %v4212 = vsub.s32 %v3828, 127
      %v4213 = vsub.s32 %v3829, 127
      %v4214 = vsub.s32 %v3830, 127
      %v4215 = vsub.s32 %v3831, 127
      %v4216 = vsub.s32 %v3832, 127
      %v4217 = vsub.s32 %v3833, 127
      %v4218 = vsub.s32 %v3834, 127
      %v4219 = vsub.s32 %v3835, 127
      %v4220 = vsub.s32 %v3836, 127
      %v4221 = vsub.s32 %v3837, 127
      %v4222 = vsub.s32 %v3838, 127
      %v4223 = vsub.s32 %v3839, 127
      %v4224 = vsub.s32 %v3840, 127
      %v4225 = vsub.s32 %v3841, 127
      %v4226 = vsub.s32 %v3842, 127
      %v4227 = vsub.s32 %v3843, 127
      %v4228 = vsub.s32 %v3844, 127
      %v4229 = vsub.s32 %v3845, 127
      %v4230 = vsub.s32 %v3846, 127
      %v4231 = vsub.s32 %v3847, 127
      %v4232 = vsub.s32 %v3848, 127
      %v4233 = vsub.s32 %v3849, 127
      %v4234 = vsub.s32 %v3850, 127
      %v4235 = vsub.s32 %v3851, 127
      %v4236 = vsub.s32 %v3852, 127
      %v4237 = vsub.s32 %v3853, 127
      %v4238 = vsub.s32 %v3854, 127
      %v4239 = vsub.s32 %v3855, 127
      %v4240 = vsub.s32 %v3856, 127
      %v4241 = vsub.s32 %v3857, 127
      %v4242 = vsub.s32 %v3858, 127
      %v4243 = vsub.s32 %v3859, 127
      %v4244 = vsub.s32 %v3860, 127
      %v4245 = vsub.s32 %v3861, 127
      %v4246 = vsub.s32 %v3862, 127
      %v4247 = vsub.s32 %v3863, 127
      %v4248 = vsub.s32 %v3864, 127
      %v4249 = vsub.s32 %v3865, 127
      %v4250 = vsub.s32 %v3866, 127
      %v4251 = vsub.s32 %v3867, 127
      %v4252 = vsub.s32 %v3868, 127
      %v4253 = vsub.s32 %v3869, 127
      %v4254 = vsub.s32 %v3870, 127
      %v4255 = vsub.s32 %v3871, 127
      %v4256 = vsub.s32 %v3872, 127
      %v4257 = vsub.s32 %v3873, 127
      %v4258 = vsub.s32 %v3874, 127
      %v4259 = vsub.s32 %v3875, 127
      %v4260 = vsub.s32 %v3876, 127
      %v4261 = vsub.s32 %v3877, 127
      %v4262 = vsub.s32 %v3878, 127
      %v4263 = vsub.s32 %v3879, 127
      %v4264 = vsub.s32 %v3880, 127
      %v4265 = vsub.s32 %v3881, 127
      %v4266 = vsub.s32 %v3754, 126
      %v4267 = vsub.s32 %v3755, 126
      %v4268 = vsub.s32 %v3756, 126
      %v4269 = vsub.s32 %v3757, 126
      %v4270 = vsub.s32 %v3758, 126
      %v4271 = vsub.s32 %v3759, 126
      %v4272 = vsub.s32 %v3760, 126
      %v4273 = vsub.s32 %v3761, 126
      %v4274 = vsub.s32 %v3762, 126
      %v4275 = vsub.s32 %v3763, 126
      %v4276 = vsub.s32 %v3764, 126
      %v4277 = vsub.s32 %v3765, 126
      %v4278 = vsub.s32 %v3766, 126
      %v4279 = vsub.s32 %v3767, 126
      %v4280 = vsub.s32 %v3768, 126
      %v4281 = vsub.s32 %v3769, 126
      %v4282 = vsub.s32 %v3770, 126
      %v4283 = vsub.s32 %v3771, 126
      %v4284 = vsub.s32 %v3772, 126
      %v4285 = vsub.s32 %v3773, 126
      %v4286 = vsub.s32 %v3774, 126
      %v4287 = vsub.s32 %v3775, 126
      %v4288 = vsub.s32 %v3776, 126
      %v4289 = vsub.s32 %v3777, 126
      %v4290 = vsub.s32 %v3778, 126
      %v4291 = vsub.s32 %v3779, 126
      %v4292 = vsub.s32 %v3780, 126
      %v4293 = vsub.s32 %v3781, 126
      %v4294 = vsub.s32 %v3782, 126
      %v4295 = vsub.s32 %v3783, 126
      %v4296 = vsub.s32 %v3784, 126
      %v4297 = vsub.s32 %v3785, 126
      %v4298 = vsub.s32 %v3786, 126
      %v4299 = vsub.s32 %v3787, 126
      %v4300 = vsub.s32 %v3788, 126
      %v4301 = vsub.s32 %v3789, 126
      %v4302 = vsub.s32 %v3790, 126
      %v4303 = vsub.s32 %v3791, 126
      %v4304 = vsub.s32 %v3792, 126
      %v4305 = vsub.s32 %v3793, 126
      %v4306 = vsub.s32 %v3794, 126
      %v4307 = vsub.s32 %v3795, 126
      %v4308 = vsub.s32 %v3796, 126
      %v4309 = vsub.s32 %v3797, 126
      %v4310 = vsub.s32 %v3798, 126
      %v4311 = vsub.s32 %v3799, 126
      %v4312 = vsub.s32 %v3800, 126
      %v4313 = vsub.s32 %v3801, 126
      %v4314 = vsub.s32 %v3802, 126
      %v4315 = vsub.s32 %v3803, 126
      %v4316 = vsub.s32 %v3804, 126
      %v4317 = vsub.s32 %v3805, 126
      %v4318 = vsub.s32 %v3806, 126
      %v4319 = vsub.s32 %v3807, 126
      %v4320 = vsub.s32 %v3808, 126
      %v4321 = vsub.s32 %v3809, 126
      %v4322 = vsub.s32 %v3810, 126
      %v4323 = vsub.s32 %v3811, 126
      %v4324 = vsub.s32 %v3812, 126
      %v4325 = vsub.s32 %v3813, 126
      %v4326 = vsub.s32 %v3814, 126
      %v4327 = vsub.s32 %v3815, 126
      %v4328 = vsub.s32 %v3816, 126
      %v4329 = vsub.s32 %v3817, 126
      %v4330 = vsub.s32 %v3818, 126
      %v4331 = vsub.s32 %v3819, 126
      %v4332 = vsub.s32 %v3820, 126
      %v4333 = vsub.s32 %v3821, 126
      %v4334 = vsub.s32 %v3822, 126
      %v4335 = vsub.s32 %v3823, 126
      %v4336 = vsub.s32 %v3824, 126
      %v4337 = vsub.s32 %v3825, 126
      %v4338 = vsub.s32 %v3826, 126
      %v4339 = vsub.s32 %v3827, 126
      %v4340 = vsub.s32 %v3828, 126
      %v4341 = vsub.s32 %v3829, 126
      %v4342 = vsub.s32 %v3830, 126
      %v4343 = vsub.s32 %v3831, 126
      %v4344 = vsub.s32 %v3832, 126
      %v4345 = vsub.s32 %v3833, 126
      %v4346 = vsub.s32 %v3834, 126
      %v4347 = vsub.s32 %v3835, 126
      %v4348 = vsub.s32 %v3836, 126
      %v4349 = vsub.s32 %v3837, 126
      %v4350 = vsub.s32 %v3838, 126
      %v4351 = vsub.s32 %v3839, 126
      %v4352 = vsub.s32 %v3840, 126
      %v4353 = vsub.s32 %v3841, 126
      %v4354 = vsub.s32 %v3842, 126
      %v4355 = vsub.s32 %v3843, 126
      %v4356 = vsub.s32 %v3844, 126
      %v4357 = vsub.s32 %v3845, 126
      %v4358 = vsub.s32 %v3846, 126
      %v4359 = vsub.s32 %v3847, 126
      %v4360 = vsub.s32 %v3848, 126
      %v4361 = vsub.s32 %v3849, 126
      %v4362 = vsub.s32 %v3850, 126
      %v4363 = vsub.s32 %v3851, 126
      %v4364 = vsub.s32 %v3852, 126
      %v4365 = vsub.s32 %v3853, 126
      %v4366 = vsub.s32 %v3854, 126
      %v4367 = vsub.s32 %v3855, 126
      %v4368 = vsub.s32 %v3856, 126
      %v4369 = vsub.s32 %v3857, 126
      %v4370 = vsub.s32 %v3858, 126
      %v4371 = vsub.s32 %v3859, 126
      %v4372 = vsub.s32 %v3860, 126
      %v4373 = vsub.s32 %v3861, 126
      %v4374 = vsub.s32 %v3862, 126
      %v4375 = vsub.s32 %v3863, 126
      %v4376 = vsub.s32 %v3864, 126
      %v4377 = vsub.s32 %v3865, 126
      %v4378 = vsub.s32 %v3866, 126
      %v4379 = vsub.s32 %v3867, 126
      %v4380 = vsub.s32 %v3868, 126
      %v4381 = vsub.s32 %v3869, 126
      %v4382 = vsub.s32 %v3870, 126
      %v4383 = vsub.s32 %v3871, 126
      %v4384 = vsub.s32 %v3872, 126
      %v4385 = vsub.s32 %v3873, 126
      %v4386 = vsub.s32 %v3874, 126
      %v4387 = vsub.s32 %v3875, 126
      %v4388 = vsub.s32 %v3876, 126
      %v4389 = vsub.s32 %v3877, 126
      %v4390 = vsub.s32 %v3878, 126
      %v4391 = vsub.s32 %v3879, 126
      %v4392 = vsub.s32 %v3880, 126
      %v4393 = vsub.s32 %v3881, 126
      %v4394 = vsel %vm4010, %v4138, %v4266
      %v4395 = vsel %vm4011, %v4139, %v4267
      %v4396 = vsel %vm4012, %v4140, %v4268
      %v4397 = vsel %vm4013, %v4141, %v4269
      %v4398 = vsel %vm4014, %v4142, %v4270
      %v4399 = vsel %vm4015, %v4143, %v4271
      %v4400 = vsel %vm4016, %v4144, %v4272
      %v4401 = vsel %vm4017, %v4145, %v4273
      %v4402 = vsel %vm4018, %v4146, %v4274
      %v4403 = vsel %vm4019, %v4147, %v4275
      %v4404 = vsel %vm4020, %v4148, %v4276
      %v4405 = vsel %vm4021, %v4149, %v4277
      %v4406 = vsel %vm4022, %v4150, %v4278
      %v4407 = vsel %vm4023, %v4151, %v4279
      %v4408 = vsel %vm4024, %v4152, %v4280
      %v4409 = vsel %vm4025, %v4153, %v4281
      %v4410 = vsel %vm4026, %v4154, %v4282
      %v4411 = vsel %vm4027, %v4155, %v4283
      %v4412 = vsel %vm4028, %v4156, %v4284
      %v4413 = vsel %vm4029, %v4157, %v4285
      %v4414 = vsel %vm4030, %v4158, %v4286
      %v4415 = vsel %vm4031, %v4159, %v4287
      %v4416 = vsel %vm4032, %v4160, %v4288
      %v4417 = vsel %vm4033, %v4161, %v4289
      %v4418 = vsel %vm4034, %v4162, %v4290
      %v4419 = vsel %vm4035, %v4163, %v4291
      %v4420 = vsel %vm4036, %v4164, %v4292
      %v4421 = vsel %vm4037, %v4165, %v4293
      %v4422 = vsel %vm4038, %v4166, %v4294
      %v4423 = vsel %vm4039, %v4167, %v4295
      %v4424 = vsel %vm4040, %v4168, %v4296
      %v4425 = vsel %vm4041, %v4169, %v4297
      %v4426 = vsel %vm4042, %v4170, %v4298
      %v4427 = vsel %vm4043, %v4171, %v4299
      %v4428 = vsel %vm4044, %v4172, %v4300
      %v4429 = vsel %vm4045, %v4173, %v4301
      %v4430 = vsel %vm4046, %v4174, %v4302
      %v4431 = vsel %vm4047, %v4175, %v4303
      %v4432 = vsel %vm4048, %v4176, %v4304
      %v4433 = vsel %vm4049, %v4177, %v4305
      %v4434 = vsel %vm4050, %v4178, %v4306
      %v4435 = vsel %vm4051, %v4179, %v4307
      %v4436 = vsel %vm4052, %v4180, %v4308
      %v4437 = vsel %vm4053, %v4181, %v4309
      %v4438 = vsel %vm4054, %v4182, %v4310
      %v4439 = vsel %vm4055, %v4183, %v4311
      %v4440 = vsel %vm4056, %v4184, %v4312
      %v4441 = vsel %vm4057, %v4185, %v4313
      %v4442 = vsel %vm4058, %v4186, %v4314
      %v4443 = vsel %vm4059, %v4187, %v4315
      %v4444 = vsel %vm4060, %v4188, %v4316
      %v4445 = vsel %vm4061, %v4189, %v4317
      %v4446 = vsel %vm4062, %v4190, %v4318
      %v4447 = vsel %vm4063, %v4191, %v4319
      %v4448 = vsel %vm4064, %v4192, %v4320
      %v4449 = vsel %vm4065, %v4193, %v4321
      %v4450 = vsel %vm4066, %v4194, %v4322
      %v4451 = vsel %vm4067, %v4195, %v4323
      %v4452 = vsel %vm4068, %v4196, %v4324
      %v4453 = vsel %vm4069, %v4197, %v4325
      %v4454 = vsel %vm4070, %v4198, %v4326
      %v4455 = vsel %vm4071, %v4199, %v4327
      %v4456 = vsel %vm4072, %v4200, %v4328
      %v4457 = vsel %vm4073, %v4201, %v4329
      %v4458 = vsel %vm4074, %v4202, %v4330
      %v4459 = vsel %vm4075, %v4203, %v4331
      %v4460 = vsel %vm4076, %v4204, %v4332
      %v4461 = vsel %vm4077, %v4205, %v4333
      %v4462 = vsel %vm4078, %v4206, %v4334
      %v4463 = vsel %vm4079, %v4207, %v4335
      %v4464 = vsel %vm4080, %v4208, %v4336
      %v4465 = vsel %vm4081, %v4209, %v4337
      %v4466 = vsel %vm4082, %v4210, %v4338
      %v4467 = vsel %vm4083, %v4211, %v4339
      %v4468 = vsel %vm4084, %v4212, %v4340
      %v4469 = vsel %vm4085, %v4213, %v4341
      %v4470 = vsel %vm4086, %v4214, %v4342
      %v4471 = vsel %vm4087, %v4215, %v4343
      %v4472 = vsel %vm4088, %v4216, %v4344
      %v4473 = vsel %vm4089, %v4217, %v4345
      %v4474 = vsel %vm4090, %v4218, %v4346
      %v4475 = vsel %vm4091, %v4219, %v4347
      %v4476 = vsel %vm4092, %v4220, %v4348
      %v4477 = vsel %vm4093, %v4221, %v4349
      %v4478 = vsel %vm4094, %v4222, %v4350
      %v4479 = vsel %vm4095, %v4223, %v4351
      %v4480 = vsel %vm4096, %v4224, %v4352
      %v4481 = vsel %vm4097, %v4225, %v4353
      %v4482 = vsel %vm4098, %v4226, %v4354
      %v4483 = vsel %vm4099, %v4227, %v4355
      %v4484 = vsel %vm4100, %v4228, %v4356
      %v4485 = vsel %vm4101, %v4229, %v4357
      %v4486 = vsel %vm4102, %v4230, %v4358
      %v4487 = vsel %vm4103, %v4231, %v4359
      %v4488 = vsel %vm4104, %v4232, %v4360
      %v4489 = vsel %vm4105, %v4233, %v4361
      %v4490 = vsel %vm4106, %v4234, %v4362
      %v4491 = vsel %vm4107, %v4235, %v4363
      %v4492 = vsel %vm4108, %v4236, %v4364
      %v4493 = vsel %vm4109, %v4237, %v4365
      %v4494 = vsel %vm4110, %v4238, %v4366
      %v4495 = vsel %vm4111, %v4239, %v4367
      %v4496 = vsel %vm4112, %v4240, %v4368
      %v4497 = vsel %vm4113, %v4241, %v4369
      %v4498 = vsel %vm4114, %v4242, %v4370
      %v4499 = vsel %vm4115, %v4243, %v4371
      %v4500 = vsel %vm4116, %v4244, %v4372
      %v4501 = vsel %vm4117, %v4245, %v4373
      %v4502 = vsel %vm4118, %v4246, %v4374
      %v4503 = vsel %vm4119, %v4247, %v4375
      %v4504 = vsel %vm4120, %v4248, %v4376
      %v4505 = vsel %vm4121, %v4249, %v4377
      %v4506 = vsel %vm4122, %v4250, %v4378
      %v4507 = vsel %vm4123, %v4251, %v4379
      %v4508 = vsel %vm4124, %v4252, %v4380
      %v4509 = vsel %vm4125, %v4253, %v4381
      %v4510 = vsel %vm4126, %v4254, %v4382
      %v4511 = vsel %vm4127, %v4255, %v4383
      %v4512 = vsel %vm4128, %v4256, %v4384
      %v4513 = vsel %vm4129, %v4257, %v4385
      %v4514 = vsel %vm4130, %v4258, %v4386
      %v4515 = vsel %vm4131, %v4259, %v4387
      %v4516 = vsel %vm4132, %v4260, %v4388
      %v4517 = vsel %vm4133, %v4261, %v4389
      %v4518 = vsel %vm4134, %v4262, %v4390
      %v4519 = vsel %vm4135, %v4263, %v4391
      %v4520 = vsel %vm4136, %v4264, %v4392
      %v4521 = vsel %vm4137, %v4265, %v4393
      %vm4522 = vcmp.gt.s32.totalorder %v4394, 0
      %v4523 = vsel %vm4522, %v4394, 0
      %vm4524 = vcmp.gt.s32.totalorder %v4395, 0
      %v4525 = vsel %vm4524, %v4395, 0
      %vm4526 = vcmp.gt.s32.totalorder %v4396, 0
      %v4527 = vsel %vm4526, %v4396, 0
      %vm4528 = vcmp.gt.s32.totalorder %v4397, 0
      %v4529 = vsel %vm4528, %v4397, 0
      %vm4530 = vcmp.gt.s32.totalorder %v4398, 0
      %v4531 = vsel %vm4530, %v4398, 0
      %vm4532 = vcmp.gt.s32.totalorder %v4399, 0
      %v4533 = vsel %vm4532, %v4399, 0
      %vm4534 = vcmp.gt.s32.totalorder %v4400, 0
      %v4535 = vsel %vm4534, %v4400, 0
      %vm4536 = vcmp.gt.s32.totalorder %v4401, 0
      %v4537 = vsel %vm4536, %v4401, 0
      %vm4538 = vcmp.gt.s32.totalorder %v4402, 0
      %v4539 = vsel %vm4538, %v4402, 0
      %vm4540 = vcmp.gt.s32.totalorder %v4403, 0
      %v4541 = vsel %vm4540, %v4403, 0
      %vm4542 = vcmp.gt.s32.totalorder %v4404, 0
      %v4543 = vsel %vm4542, %v4404, 0
      %vm4544 = vcmp.gt.s32.totalorder %v4405, 0
      %v4545 = vsel %vm4544, %v4405, 0
      %vm4546 = vcmp.gt.s32.totalorder %v4406, 0
      %v4547 = vsel %vm4546, %v4406, 0
      %vm4548 = vcmp.gt.s32.totalorder %v4407, 0
      %v4549 = vsel %vm4548, %v4407, 0
      %vm4550 = vcmp.gt.s32.totalorder %v4408, 0
      %v4551 = vsel %vm4550, %v4408, 0
      %vm4552 = vcmp.gt.s32.totalorder %v4409, 0
      %v4553 = vsel %vm4552, %v4409, 0
      %vm4554 = vcmp.gt.s32.totalorder %v4410, 0
      %v4555 = vsel %vm4554, %v4410, 0
      %vm4556 = vcmp.gt.s32.totalorder %v4411, 0
      %v4557 = vsel %vm4556, %v4411, 0
      %vm4558 = vcmp.gt.s32.totalorder %v4412, 0
      %v4559 = vsel %vm4558, %v4412, 0
      %vm4560 = vcmp.gt.s32.totalorder %v4413, 0
      %v4561 = vsel %vm4560, %v4413, 0
      %vm4562 = vcmp.gt.s32.totalorder %v4414, 0
      %v4563 = vsel %vm4562, %v4414, 0
      %vm4564 = vcmp.gt.s32.totalorder %v4415, 0
      %v4565 = vsel %vm4564, %v4415, 0
      %vm4566 = vcmp.gt.s32.totalorder %v4416, 0
      %v4567 = vsel %vm4566, %v4416, 0
      %vm4568 = vcmp.gt.s32.totalorder %v4417, 0
      %v4569 = vsel %vm4568, %v4417, 0
      %vm4570 = vcmp.gt.s32.totalorder %v4418, 0
      %v4571 = vsel %vm4570, %v4418, 0
      %vm4572 = vcmp.gt.s32.totalorder %v4419, 0
      %v4573 = vsel %vm4572, %v4419, 0
      %vm4574 = vcmp.gt.s32.totalorder %v4420, 0
      %v4575 = vsel %vm4574, %v4420, 0
      %vm4576 = vcmp.gt.s32.totalorder %v4421, 0
      %v4577 = vsel %vm4576, %v4421, 0
      %vm4578 = vcmp.gt.s32.totalorder %v4422, 0
      %v4579 = vsel %vm4578, %v4422, 0
      %vm4580 = vcmp.gt.s32.totalorder %v4423, 0
      %v4581 = vsel %vm4580, %v4423, 0
      %vm4582 = vcmp.gt.s32.totalorder %v4424, 0
      %v4583 = vsel %vm4582, %v4424, 0
      %vm4584 = vcmp.gt.s32.totalorder %v4425, 0
      %v4585 = vsel %vm4584, %v4425, 0
      %vm4586 = vcmp.gt.s32.totalorder %v4426, 0
      %v4587 = vsel %vm4586, %v4426, 0
      %vm4588 = vcmp.gt.s32.totalorder %v4427, 0
      %v4589 = vsel %vm4588, %v4427, 0
      %vm4590 = vcmp.gt.s32.totalorder %v4428, 0
      %v4591 = vsel %vm4590, %v4428, 0
      %vm4592 = vcmp.gt.s32.totalorder %v4429, 0
      %v4593 = vsel %vm4592, %v4429, 0
      %vm4594 = vcmp.gt.s32.totalorder %v4430, 0
      %v4595 = vsel %vm4594, %v4430, 0
      %vm4596 = vcmp.gt.s32.totalorder %v4431, 0
      %v4597 = vsel %vm4596, %v4431, 0
      %vm4598 = vcmp.gt.s32.totalorder %v4432, 0
      %v4599 = vsel %vm4598, %v4432, 0
      %vm4600 = vcmp.gt.s32.totalorder %v4433, 0
      %v4601 = vsel %vm4600, %v4433, 0
      %vm4602 = vcmp.gt.s32.totalorder %v4434, 0
      %v4603 = vsel %vm4602, %v4434, 0
      %vm4604 = vcmp.gt.s32.totalorder %v4435, 0
      %v4605 = vsel %vm4604, %v4435, 0
      %vm4606 = vcmp.gt.s32.totalorder %v4436, 0
      %v4607 = vsel %vm4606, %v4436, 0
      %vm4608 = vcmp.gt.s32.totalorder %v4437, 0
      %v4609 = vsel %vm4608, %v4437, 0
      %vm4610 = vcmp.gt.s32.totalorder %v4438, 0
      %v4611 = vsel %vm4610, %v4438, 0
      %vm4612 = vcmp.gt.s32.totalorder %v4439, 0
      %v4613 = vsel %vm4612, %v4439, 0
      %vm4614 = vcmp.gt.s32.totalorder %v4440, 0
      %v4615 = vsel %vm4614, %v4440, 0
      %vm4616 = vcmp.gt.s32.totalorder %v4441, 0
      %v4617 = vsel %vm4616, %v4441, 0
      %vm4618 = vcmp.gt.s32.totalorder %v4442, 0
      %v4619 = vsel %vm4618, %v4442, 0
      %vm4620 = vcmp.gt.s32.totalorder %v4443, 0
      %v4621 = vsel %vm4620, %v4443, 0
      %vm4622 = vcmp.gt.s32.totalorder %v4444, 0
      %v4623 = vsel %vm4622, %v4444, 0
      %vm4624 = vcmp.gt.s32.totalorder %v4445, 0
      %v4625 = vsel %vm4624, %v4445, 0
      %vm4626 = vcmp.gt.s32.totalorder %v4446, 0
      %v4627 = vsel %vm4626, %v4446, 0
      %vm4628 = vcmp.gt.s32.totalorder %v4447, 0
      %v4629 = vsel %vm4628, %v4447, 0
      %vm4630 = vcmp.gt.s32.totalorder %v4448, 0
      %v4631 = vsel %vm4630, %v4448, 0
      %vm4632 = vcmp.gt.s32.totalorder %v4449, 0
      %v4633 = vsel %vm4632, %v4449, 0
      %vm4634 = vcmp.gt.s32.totalorder %v4450, 0
      %v4635 = vsel %vm4634, %v4450, 0
      %vm4636 = vcmp.gt.s32.totalorder %v4451, 0
      %v4637 = vsel %vm4636, %v4451, 0
      %vm4638 = vcmp.gt.s32.totalorder %v4452, 0
      %v4639 = vsel %vm4638, %v4452, 0
      %vm4640 = vcmp.gt.s32.totalorder %v4453, 0
      %v4641 = vsel %vm4640, %v4453, 0
      %vm4642 = vcmp.gt.s32.totalorder %v4454, 0
      %v4643 = vsel %vm4642, %v4454, 0
      %vm4644 = vcmp.gt.s32.totalorder %v4455, 0
      %v4645 = vsel %vm4644, %v4455, 0
      %vm4646 = vcmp.gt.s32.totalorder %v4456, 0
      %v4647 = vsel %vm4646, %v4456, 0
      %vm4648 = vcmp.gt.s32.totalorder %v4457, 0
      %v4649 = vsel %vm4648, %v4457, 0
      %vm4650 = vcmp.gt.s32.totalorder %v4458, 0
      %v4651 = vsel %vm4650, %v4458, 0
      %vm4652 = vcmp.gt.s32.totalorder %v4459, 0
      %v4653 = vsel %vm4652, %v4459, 0
      %vm4654 = vcmp.gt.s32.totalorder %v4460, 0
      %v4655 = vsel %vm4654, %v4460, 0
      %vm4656 = vcmp.gt.s32.totalorder %v4461, 0
      %v4657 = vsel %vm4656, %v4461, 0
      %vm4658 = vcmp.gt.s32.totalorder %v4462, 0
      %v4659 = vsel %vm4658, %v4462, 0
      %vm4660 = vcmp.gt.s32.totalorder %v4463, 0
      %v4661 = vsel %vm4660, %v4463, 0
      %vm4662 = vcmp.gt.s32.totalorder %v4464, 0
      %v4663 = vsel %vm4662, %v4464, 0
      %vm4664 = vcmp.gt.s32.totalorder %v4465, 0
      %v4665 = vsel %vm4664, %v4465, 0
      %vm4666 = vcmp.gt.s32.totalorder %v4466, 0
      %v4667 = vsel %vm4666, %v4466, 0
      %vm4668 = vcmp.gt.s32.totalorder %v4467, 0
      %v4669 = vsel %vm4668, %v4467, 0
      %vm4670 = vcmp.gt.s32.totalorder %v4468, 0
      %v4671 = vsel %vm4670, %v4468, 0
      %vm4672 = vcmp.gt.s32.totalorder %v4469, 0
      %v4673 = vsel %vm4672, %v4469, 0
      %vm4674 = vcmp.gt.s32.totalorder %v4470, 0
      %v4675 = vsel %vm4674, %v4470, 0
      %vm4676 = vcmp.gt.s32.totalorder %v4471, 0
      %v4677 = vsel %vm4676, %v4471, 0
      %vm4678 = vcmp.gt.s32.totalorder %v4472, 0
      %v4679 = vsel %vm4678, %v4472, 0
      %vm4680 = vcmp.gt.s32.totalorder %v4473, 0
      %v4681 = vsel %vm4680, %v4473, 0
      %vm4682 = vcmp.gt.s32.totalorder %v4474, 0
      %v4683 = vsel %vm4682, %v4474, 0
      %vm4684 = vcmp.gt.s32.totalorder %v4475, 0
      %v4685 = vsel %vm4684, %v4475, 0
      %vm4686 = vcmp.gt.s32.totalorder %v4476, 0
      %v4687 = vsel %vm4686, %v4476, 0
      %vm4688 = vcmp.gt.s32.totalorder %v4477, 0
      %v4689 = vsel %vm4688, %v4477, 0
      %vm4690 = vcmp.gt.s32.totalorder %v4478, 0
      %v4691 = vsel %vm4690, %v4478, 0
      %vm4692 = vcmp.gt.s32.totalorder %v4479, 0
      %v4693 = vsel %vm4692, %v4479, 0
      %vm4694 = vcmp.gt.s32.totalorder %v4480, 0
      %v4695 = vsel %vm4694, %v4480, 0
      %vm4696 = vcmp.gt.s32.totalorder %v4481, 0
      %v4697 = vsel %vm4696, %v4481, 0
      %vm4698 = vcmp.gt.s32.totalorder %v4482, 0
      %v4699 = vsel %vm4698, %v4482, 0
      %vm4700 = vcmp.gt.s32.totalorder %v4483, 0
      %v4701 = vsel %vm4700, %v4483, 0
      %vm4702 = vcmp.gt.s32.totalorder %v4484, 0
      %v4703 = vsel %vm4702, %v4484, 0
      %vm4704 = vcmp.gt.s32.totalorder %v4485, 0
      %v4705 = vsel %vm4704, %v4485, 0
      %vm4706 = vcmp.gt.s32.totalorder %v4486, 0
      %v4707 = vsel %vm4706, %v4486, 0
      %vm4708 = vcmp.gt.s32.totalorder %v4487, 0
      %v4709 = vsel %vm4708, %v4487, 0
      %vm4710 = vcmp.gt.s32.totalorder %v4488, 0
      %v4711 = vsel %vm4710, %v4488, 0
      %vm4712 = vcmp.gt.s32.totalorder %v4489, 0
      %v4713 = vsel %vm4712, %v4489, 0
      %vm4714 = vcmp.gt.s32.totalorder %v4490, 0
      %v4715 = vsel %vm4714, %v4490, 0
      %vm4716 = vcmp.gt.s32.totalorder %v4491, 0
      %v4717 = vsel %vm4716, %v4491, 0
      %vm4718 = vcmp.gt.s32.totalorder %v4492, 0
      %v4719 = vsel %vm4718, %v4492, 0
      %vm4720 = vcmp.gt.s32.totalorder %v4493, 0
      %v4721 = vsel %vm4720, %v4493, 0
      %vm4722 = vcmp.gt.s32.totalorder %v4494, 0
      %v4723 = vsel %vm4722, %v4494, 0
      %vm4724 = vcmp.gt.s32.totalorder %v4495, 0
      %v4725 = vsel %vm4724, %v4495, 0
      %vm4726 = vcmp.gt.s32.totalorder %v4496, 0
      %v4727 = vsel %vm4726, %v4496, 0
      %vm4728 = vcmp.gt.s32.totalorder %v4497, 0
      %v4729 = vsel %vm4728, %v4497, 0
      %vm4730 = vcmp.gt.s32.totalorder %v4498, 0
      %v4731 = vsel %vm4730, %v4498, 0
      %vm4732 = vcmp.gt.s32.totalorder %v4499, 0
      %v4733 = vsel %vm4732, %v4499, 0
      %vm4734 = vcmp.gt.s32.totalorder %v4500, 0
      %v4735 = vsel %vm4734, %v4500, 0
      %vm4736 = vcmp.gt.s32.totalorder %v4501, 0
      %v4737 = vsel %vm4736, %v4501, 0
      %vm4738 = vcmp.gt.s32.totalorder %v4502, 0
      %v4739 = vsel %vm4738, %v4502, 0
      %vm4740 = vcmp.gt.s32.totalorder %v4503, 0
      %v4741 = vsel %vm4740, %v4503, 0
      %vm4742 = vcmp.gt.s32.totalorder %v4504, 0
      %v4743 = vsel %vm4742, %v4504, 0
      %vm4744 = vcmp.gt.s32.totalorder %v4505, 0
      %v4745 = vsel %vm4744, %v4505, 0
      %vm4746 = vcmp.gt.s32.totalorder %v4506, 0
      %v4747 = vsel %vm4746, %v4506, 0
      %vm4748 = vcmp.gt.s32.totalorder %v4507, 0
      %v4749 = vsel %vm4748, %v4507, 0
      %vm4750 = vcmp.gt.s32.totalorder %v4508, 0
      %v4751 = vsel %vm4750, %v4508, 0
      %vm4752 = vcmp.gt.s32.totalorder %v4509, 0
      %v4753 = vsel %vm4752, %v4509, 0
      %vm4754 = vcmp.gt.s32.totalorder %v4510, 0
      %v4755 = vsel %vm4754, %v4510, 0
      %vm4756 = vcmp.gt.s32.totalorder %v4511, 0
      %v4757 = vsel %vm4756, %v4511, 0
      %vm4758 = vcmp.gt.s32.totalorder %v4512, 0
      %v4759 = vsel %vm4758, %v4512, 0
      %vm4760 = vcmp.gt.s32.totalorder %v4513, 0
      %v4761 = vsel %vm4760, %v4513, 0
      %vm4762 = vcmp.gt.s32.totalorder %v4514, 0
      %v4763 = vsel %vm4762, %v4514, 0
      %vm4764 = vcmp.gt.s32.totalorder %v4515, 0
      %v4765 = vsel %vm4764, %v4515, 0
      %vm4766 = vcmp.gt.s32.totalorder %v4516, 0
      %v4767 = vsel %vm4766, %v4516, 0
      %vm4768 = vcmp.gt.s32.totalorder %v4517, 0
      %v4769 = vsel %vm4768, %v4517, 0
      %vm4770 = vcmp.gt.s32.totalorder %v4518, 0
      %v4771 = vsel %vm4770, %v4518, 0
      %vm4772 = vcmp.gt.s32.totalorder %v4519, 0
      %v4773 = vsel %vm4772, %v4519, 0
      %vm4774 = vcmp.gt.s32.totalorder %v4520, 0
      %v4775 = vsel %vm4774, %v4520, 0
      %vm4776 = vcmp.gt.s32.totalorder %v4521, 0
      %v4777 = vsel %vm4776, %v4521, 0
      %vm4778 = vcmp.lt.s32.totalorder %v4523, 126
      %v4779 = vsel %vm4778, %v4523, 126
      %vm4780 = vcmp.lt.s32.totalorder %v4525, 126
      %v4781 = vsel %vm4780, %v4525, 126
      %vm4782 = vcmp.lt.s32.totalorder %v4527, 126
      %v4783 = vsel %vm4782, %v4527, 126
      %vm4784 = vcmp.lt.s32.totalorder %v4529, 126
      %v4785 = vsel %vm4784, %v4529, 126
      %vm4786 = vcmp.lt.s32.totalorder %v4531, 126
      %v4787 = vsel %vm4786, %v4531, 126
      %vm4788 = vcmp.lt.s32.totalorder %v4533, 126
      %v4789 = vsel %vm4788, %v4533, 126
      %vm4790 = vcmp.lt.s32.totalorder %v4535, 126
      %v4791 = vsel %vm4790, %v4535, 126
      %vm4792 = vcmp.lt.s32.totalorder %v4537, 126
      %v4793 = vsel %vm4792, %v4537, 126
      %vm4794 = vcmp.lt.s32.totalorder %v4539, 126
      %v4795 = vsel %vm4794, %v4539, 126
      %vm4796 = vcmp.lt.s32.totalorder %v4541, 126
      %v4797 = vsel %vm4796, %v4541, 126
      %vm4798 = vcmp.lt.s32.totalorder %v4543, 126
      %v4799 = vsel %vm4798, %v4543, 126
      %vm4800 = vcmp.lt.s32.totalorder %v4545, 126
      %v4801 = vsel %vm4800, %v4545, 126
      %vm4802 = vcmp.lt.s32.totalorder %v4547, 126
      %v4803 = vsel %vm4802, %v4547, 126
      %vm4804 = vcmp.lt.s32.totalorder %v4549, 126
      %v4805 = vsel %vm4804, %v4549, 126
      %vm4806 = vcmp.lt.s32.totalorder %v4551, 126
      %v4807 = vsel %vm4806, %v4551, 126
      %vm4808 = vcmp.lt.s32.totalorder %v4553, 126
      %v4809 = vsel %vm4808, %v4553, 126
      %vm4810 = vcmp.lt.s32.totalorder %v4555, 126
      %v4811 = vsel %vm4810, %v4555, 126
      %vm4812 = vcmp.lt.s32.totalorder %v4557, 126
      %v4813 = vsel %vm4812, %v4557, 126
      %vm4814 = vcmp.lt.s32.totalorder %v4559, 126
      %v4815 = vsel %vm4814, %v4559, 126
      %vm4816 = vcmp.lt.s32.totalorder %v4561, 126
      %v4817 = vsel %vm4816, %v4561, 126
      %vm4818 = vcmp.lt.s32.totalorder %v4563, 126
      %v4819 = vsel %vm4818, %v4563, 126
      %vm4820 = vcmp.lt.s32.totalorder %v4565, 126
      %v4821 = vsel %vm4820, %v4565, 126
      %vm4822 = vcmp.lt.s32.totalorder %v4567, 126
      %v4823 = vsel %vm4822, %v4567, 126
      %vm4824 = vcmp.lt.s32.totalorder %v4569, 126
      %v4825 = vsel %vm4824, %v4569, 126
      %vm4826 = vcmp.lt.s32.totalorder %v4571, 126
      %v4827 = vsel %vm4826, %v4571, 126
      %vm4828 = vcmp.lt.s32.totalorder %v4573, 126
      %v4829 = vsel %vm4828, %v4573, 126
      %vm4830 = vcmp.lt.s32.totalorder %v4575, 126
      %v4831 = vsel %vm4830, %v4575, 126
      %vm4832 = vcmp.lt.s32.totalorder %v4577, 126
      %v4833 = vsel %vm4832, %v4577, 126
      %vm4834 = vcmp.lt.s32.totalorder %v4579, 126
      %v4835 = vsel %vm4834, %v4579, 126
      %vm4836 = vcmp.lt.s32.totalorder %v4581, 126
      %v4837 = vsel %vm4836, %v4581, 126
      %vm4838 = vcmp.lt.s32.totalorder %v4583, 126
      %v4839 = vsel %vm4838, %v4583, 126
      %vm4840 = vcmp.lt.s32.totalorder %v4585, 126
      %v4841 = vsel %vm4840, %v4585, 126
      %vm4842 = vcmp.lt.s32.totalorder %v4587, 126
      %v4843 = vsel %vm4842, %v4587, 126
      %vm4844 = vcmp.lt.s32.totalorder %v4589, 126
      %v4845 = vsel %vm4844, %v4589, 126
      %vm4846 = vcmp.lt.s32.totalorder %v4591, 126
      %v4847 = vsel %vm4846, %v4591, 126
      %vm4848 = vcmp.lt.s32.totalorder %v4593, 126
      %v4849 = vsel %vm4848, %v4593, 126
      %vm4850 = vcmp.lt.s32.totalorder %v4595, 126
      %v4851 = vsel %vm4850, %v4595, 126
      %vm4852 = vcmp.lt.s32.totalorder %v4597, 126
      %v4853 = vsel %vm4852, %v4597, 126
      %vm4854 = vcmp.lt.s32.totalorder %v4599, 126
      %v4855 = vsel %vm4854, %v4599, 126
      %vm4856 = vcmp.lt.s32.totalorder %v4601, 126
      %v4857 = vsel %vm4856, %v4601, 126
      %vm4858 = vcmp.lt.s32.totalorder %v4603, 126
      %v4859 = vsel %vm4858, %v4603, 126
      %vm4860 = vcmp.lt.s32.totalorder %v4605, 126
      %v4861 = vsel %vm4860, %v4605, 126
      %vm4862 = vcmp.lt.s32.totalorder %v4607, 126
      %v4863 = vsel %vm4862, %v4607, 126
      %vm4864 = vcmp.lt.s32.totalorder %v4609, 126
      %v4865 = vsel %vm4864, %v4609, 126
      %vm4866 = vcmp.lt.s32.totalorder %v4611, 126
      %v4867 = vsel %vm4866, %v4611, 126
      %vm4868 = vcmp.lt.s32.totalorder %v4613, 126
      %v4869 = vsel %vm4868, %v4613, 126
      %vm4870 = vcmp.lt.s32.totalorder %v4615, 126
      %v4871 = vsel %vm4870, %v4615, 126
      %vm4872 = vcmp.lt.s32.totalorder %v4617, 126
      %v4873 = vsel %vm4872, %v4617, 126
      %vm4874 = vcmp.lt.s32.totalorder %v4619, 126
      %v4875 = vsel %vm4874, %v4619, 126
      %vm4876 = vcmp.lt.s32.totalorder %v4621, 126
      %v4877 = vsel %vm4876, %v4621, 126
      %vm4878 = vcmp.lt.s32.totalorder %v4623, 126
      %v4879 = vsel %vm4878, %v4623, 126
      %vm4880 = vcmp.lt.s32.totalorder %v4625, 126
      %v4881 = vsel %vm4880, %v4625, 126
      %vm4882 = vcmp.lt.s32.totalorder %v4627, 126
      %v4883 = vsel %vm4882, %v4627, 126
      %vm4884 = vcmp.lt.s32.totalorder %v4629, 126
      %v4885 = vsel %vm4884, %v4629, 126
      %vm4886 = vcmp.lt.s32.totalorder %v4631, 126
      %v4887 = vsel %vm4886, %v4631, 126
      %vm4888 = vcmp.lt.s32.totalorder %v4633, 126
      %v4889 = vsel %vm4888, %v4633, 126
      %vm4890 = vcmp.lt.s32.totalorder %v4635, 126
      %v4891 = vsel %vm4890, %v4635, 126
      %vm4892 = vcmp.lt.s32.totalorder %v4637, 126
      %v4893 = vsel %vm4892, %v4637, 126
      %vm4894 = vcmp.lt.s32.totalorder %v4639, 126
      %v4895 = vsel %vm4894, %v4639, 126
      %vm4896 = vcmp.lt.s32.totalorder %v4641, 126
      %v4897 = vsel %vm4896, %v4641, 126
      %vm4898 = vcmp.lt.s32.totalorder %v4643, 126
      %v4899 = vsel %vm4898, %v4643, 126
      %vm4900 = vcmp.lt.s32.totalorder %v4645, 126
      %v4901 = vsel %vm4900, %v4645, 126
      %vm4902 = vcmp.lt.s32.totalorder %v4647, 126
      %v4903 = vsel %vm4902, %v4647, 126
      %vm4904 = vcmp.lt.s32.totalorder %v4649, 126
      %v4905 = vsel %vm4904, %v4649, 126
      %vm4906 = vcmp.lt.s32.totalorder %v4651, 126
      %v4907 = vsel %vm4906, %v4651, 126
      %vm4908 = vcmp.lt.s32.totalorder %v4653, 126
      %v4909 = vsel %vm4908, %v4653, 126
      %vm4910 = vcmp.lt.s32.totalorder %v4655, 126
      %v4911 = vsel %vm4910, %v4655, 126
      %vm4912 = vcmp.lt.s32.totalorder %v4657, 126
      %v4913 = vsel %vm4912, %v4657, 126
      %vm4914 = vcmp.lt.s32.totalorder %v4659, 126
      %v4915 = vsel %vm4914, %v4659, 126
      %vm4916 = vcmp.lt.s32.totalorder %v4661, 126
      %v4917 = vsel %vm4916, %v4661, 126
      %vm4918 = vcmp.lt.s32.totalorder %v4663, 126
      %v4919 = vsel %vm4918, %v4663, 126
      %vm4920 = vcmp.lt.s32.totalorder %v4665, 126
      %v4921 = vsel %vm4920, %v4665, 126
      %vm4922 = vcmp.lt.s32.totalorder %v4667, 126
      %v4923 = vsel %vm4922, %v4667, 126
      %vm4924 = vcmp.lt.s32.totalorder %v4669, 126
      %v4925 = vsel %vm4924, %v4669, 126
      %vm4926 = vcmp.lt.s32.totalorder %v4671, 126
      %v4927 = vsel %vm4926, %v4671, 126
      %vm4928 = vcmp.lt.s32.totalorder %v4673, 126
      %v4929 = vsel %vm4928, %v4673, 126
      %vm4930 = vcmp.lt.s32.totalorder %v4675, 126
      %v4931 = vsel %vm4930, %v4675, 126
      %vm4932 = vcmp.lt.s32.totalorder %v4677, 126
      %v4933 = vsel %vm4932, %v4677, 126
      %vm4934 = vcmp.lt.s32.totalorder %v4679, 126
      %v4935 = vsel %vm4934, %v4679, 126
      %vm4936 = vcmp.lt.s32.totalorder %v4681, 126
      %v4937 = vsel %vm4936, %v4681, 126
      %vm4938 = vcmp.lt.s32.totalorder %v4683, 126
      %v4939 = vsel %vm4938, %v4683, 126
      %vm4940 = vcmp.lt.s32.totalorder %v4685, 126
      %v4941 = vsel %vm4940, %v4685, 126
      %vm4942 = vcmp.lt.s32.totalorder %v4687, 126
      %v4943 = vsel %vm4942, %v4687, 126
      %vm4944 = vcmp.lt.s32.totalorder %v4689, 126
      %v4945 = vsel %vm4944, %v4689, 126
      %vm4946 = vcmp.lt.s32.totalorder %v4691, 126
      %v4947 = vsel %vm4946, %v4691, 126
      %vm4948 = vcmp.lt.s32.totalorder %v4693, 126
      %v4949 = vsel %vm4948, %v4693, 126
      %vm4950 = vcmp.lt.s32.totalorder %v4695, 126
      %v4951 = vsel %vm4950, %v4695, 126
      %vm4952 = vcmp.lt.s32.totalorder %v4697, 126
      %v4953 = vsel %vm4952, %v4697, 126
      %vm4954 = vcmp.lt.s32.totalorder %v4699, 126
      %v4955 = vsel %vm4954, %v4699, 126
      %vm4956 = vcmp.lt.s32.totalorder %v4701, 126
      %v4957 = vsel %vm4956, %v4701, 126
      %vm4958 = vcmp.lt.s32.totalorder %v4703, 126
      %v4959 = vsel %vm4958, %v4703, 126
      %vm4960 = vcmp.lt.s32.totalorder %v4705, 126
      %v4961 = vsel %vm4960, %v4705, 126
      %vm4962 = vcmp.lt.s32.totalorder %v4707, 126
      %v4963 = vsel %vm4962, %v4707, 126
      %vm4964 = vcmp.lt.s32.totalorder %v4709, 126
      %v4965 = vsel %vm4964, %v4709, 126
      %vm4966 = vcmp.lt.s32.totalorder %v4711, 126
      %v4967 = vsel %vm4966, %v4711, 126
      %vm4968 = vcmp.lt.s32.totalorder %v4713, 126
      %v4969 = vsel %vm4968, %v4713, 126
      %vm4970 = vcmp.lt.s32.totalorder %v4715, 126
      %v4971 = vsel %vm4970, %v4715, 126
      %vm4972 = vcmp.lt.s32.totalorder %v4717, 126
      %v4973 = vsel %vm4972, %v4717, 126
      %vm4974 = vcmp.lt.s32.totalorder %v4719, 126
      %v4975 = vsel %vm4974, %v4719, 126
      %vm4976 = vcmp.lt.s32.totalorder %v4721, 126
      %v4977 = vsel %vm4976, %v4721, 126
      %vm4978 = vcmp.lt.s32.totalorder %v4723, 126
      %v4979 = vsel %vm4978, %v4723, 126
      %vm4980 = vcmp.lt.s32.totalorder %v4725, 126
      %v4981 = vsel %vm4980, %v4725, 126
      %vm4982 = vcmp.lt.s32.totalorder %v4727, 126
      %v4983 = vsel %vm4982, %v4727, 126
      %vm4984 = vcmp.lt.s32.totalorder %v4729, 126
      %v4985 = vsel %vm4984, %v4729, 126
      %vm4986 = vcmp.lt.s32.totalorder %v4731, 126
      %v4987 = vsel %vm4986, %v4731, 126
      %vm4988 = vcmp.lt.s32.totalorder %v4733, 126
      %v4989 = vsel %vm4988, %v4733, 126
      %vm4990 = vcmp.lt.s32.totalorder %v4735, 126
      %v4991 = vsel %vm4990, %v4735, 126
      %vm4992 = vcmp.lt.s32.totalorder %v4737, 126
      %v4993 = vsel %vm4992, %v4737, 126
      %vm4994 = vcmp.lt.s32.totalorder %v4739, 126
      %v4995 = vsel %vm4994, %v4739, 126
      %vm4996 = vcmp.lt.s32.totalorder %v4741, 126
      %v4997 = vsel %vm4996, %v4741, 126
      %vm4998 = vcmp.lt.s32.totalorder %v4743, 126
      %v4999 = vsel %vm4998, %v4743, 126
      %vm5000 = vcmp.lt.s32.totalorder %v4745, 126
      %v5001 = vsel %vm5000, %v4745, 126
      %vm5002 = vcmp.lt.s32.totalorder %v4747, 126
      %v5003 = vsel %vm5002, %v4747, 126
      %vm5004 = vcmp.lt.s32.totalorder %v4749, 126
      %v5005 = vsel %vm5004, %v4749, 126
      %vm5006 = vcmp.lt.s32.totalorder %v4751, 126
      %v5007 = vsel %vm5006, %v4751, 126
      %vm5008 = vcmp.lt.s32.totalorder %v4753, 126
      %v5009 = vsel %vm5008, %v4753, 126
      %vm5010 = vcmp.lt.s32.totalorder %v4755, 126
      %v5011 = vsel %vm5010, %v4755, 126
      %vm5012 = vcmp.lt.s32.totalorder %v4757, 126
      %v5013 = vsel %vm5012, %v4757, 126
      %vm5014 = vcmp.lt.s32.totalorder %v4759, 126
      %v5015 = vsel %vm5014, %v4759, 126
      %vm5016 = vcmp.lt.s32.totalorder %v4761, 126
      %v5017 = vsel %vm5016, %v4761, 126
      %vm5018 = vcmp.lt.s32.totalorder %v4763, 126
      %v5019 = vsel %vm5018, %v4763, 126
      %vm5020 = vcmp.lt.s32.totalorder %v4765, 126
      %v5021 = vsel %vm5020, %v4765, 126
      %vm5022 = vcmp.lt.s32.totalorder %v4767, 126
      %v5023 = vsel %vm5022, %v4767, 126
      %vm5024 = vcmp.lt.s32.totalorder %v4769, 126
      %v5025 = vsel %vm5024, %v4769, 126
      %vm5026 = vcmp.lt.s32.totalorder %v4771, 126
      %v5027 = vsel %vm5026, %v4771, 126
      %vm5028 = vcmp.lt.s32.totalorder %v4773, 126
      %v5029 = vsel %vm5028, %v4773, 126
      %vm5030 = vcmp.lt.s32.totalorder %v4775, 126
      %v5031 = vsel %vm5030, %v4775, 126
      %vm5032 = vcmp.lt.s32.totalorder %v4777, 126
      %v5033 = vsel %vm5032, %v4777, 126
      %v5034 = vsub.s32 127, %v4779
      %v5035 = vsub.s32 127, %v4781
      %v5036 = vsub.s32 127, %v4783
      %v5037 = vsub.s32 127, %v4785
      %v5038 = vsub.s32 127, %v4787
      %v5039 = vsub.s32 127, %v4789
      %v5040 = vsub.s32 127, %v4791
      %v5041 = vsub.s32 127, %v4793
      %v5042 = vsub.s32 127, %v4795
      %v5043 = vsub.s32 127, %v4797
      %v5044 = vsub.s32 127, %v4799
      %v5045 = vsub.s32 127, %v4801
      %v5046 = vsub.s32 127, %v4803
      %v5047 = vsub.s32 127, %v4805
      %v5048 = vsub.s32 127, %v4807
      %v5049 = vsub.s32 127, %v4809
      %v5050 = vsub.s32 127, %v4811
      %v5051 = vsub.s32 127, %v4813
      %v5052 = vsub.s32 127, %v4815
      %v5053 = vsub.s32 127, %v4817
      %v5054 = vsub.s32 127, %v4819
      %v5055 = vsub.s32 127, %v4821
      %v5056 = vsub.s32 127, %v4823
      %v5057 = vsub.s32 127, %v4825
      %v5058 = vsub.s32 127, %v4827
      %v5059 = vsub.s32 127, %v4829
      %v5060 = vsub.s32 127, %v4831
      %v5061 = vsub.s32 127, %v4833
      %v5062 = vsub.s32 127, %v4835
      %v5063 = vsub.s32 127, %v4837
      %v5064 = vsub.s32 127, %v4839
      %v5065 = vsub.s32 127, %v4841
      %v5066 = vsub.s32 127, %v4843
      %v5067 = vsub.s32 127, %v4845
      %v5068 = vsub.s32 127, %v4847
      %v5069 = vsub.s32 127, %v4849
      %v5070 = vsub.s32 127, %v4851
      %v5071 = vsub.s32 127, %v4853
      %v5072 = vsub.s32 127, %v4855
      %v5073 = vsub.s32 127, %v4857
      %v5074 = vsub.s32 127, %v4859
      %v5075 = vsub.s32 127, %v4861
      %v5076 = vsub.s32 127, %v4863
      %v5077 = vsub.s32 127, %v4865
      %v5078 = vsub.s32 127, %v4867
      %v5079 = vsub.s32 127, %v4869
      %v5080 = vsub.s32 127, %v4871
      %v5081 = vsub.s32 127, %v4873
      %v5082 = vsub.s32 127, %v4875
      %v5083 = vsub.s32 127, %v4877
      %v5084 = vsub.s32 127, %v4879
      %v5085 = vsub.s32 127, %v4881
      %v5086 = vsub.s32 127, %v4883
      %v5087 = vsub.s32 127, %v4885
      %v5088 = vsub.s32 127, %v4887
      %v5089 = vsub.s32 127, %v4889
      %v5090 = vsub.s32 127, %v4891
      %v5091 = vsub.s32 127, %v4893
      %v5092 = vsub.s32 127, %v4895
      %v5093 = vsub.s32 127, %v4897
      %v5094 = vsub.s32 127, %v4899
      %v5095 = vsub.s32 127, %v4901
      %v5096 = vsub.s32 127, %v4903
      %v5097 = vsub.s32 127, %v4905
      %v5098 = vsub.s32 127, %v4907
      %v5099 = vsub.s32 127, %v4909
      %v5100 = vsub.s32 127, %v4911
      %v5101 = vsub.s32 127, %v4913
      %v5102 = vsub.s32 127, %v4915
      %v5103 = vsub.s32 127, %v4917
      %v5104 = vsub.s32 127, %v4919
      %v5105 = vsub.s32 127, %v4921
      %v5106 = vsub.s32 127, %v4923
      %v5107 = vsub.s32 127, %v4925
      %v5108 = vsub.s32 127, %v4927
      %v5109 = vsub.s32 127, %v4929
      %v5110 = vsub.s32 127, %v4931
      %v5111 = vsub.s32 127, %v4933
      %v5112 = vsub.s32 127, %v4935
      %v5113 = vsub.s32 127, %v4937
      %v5114 = vsub.s32 127, %v4939
      %v5115 = vsub.s32 127, %v4941
      %v5116 = vsub.s32 127, %v4943
      %v5117 = vsub.s32 127, %v4945
      %v5118 = vsub.s32 127, %v4947
      %v5119 = vsub.s32 127, %v4949
      %v5120 = vsub.s32 127, %v4951
      %v5121 = vsub.s32 127, %v4953
      %v5122 = vsub.s32 127, %v4955
      %v5123 = vsub.s32 127, %v4957
      %v5124 = vsub.s32 127, %v4959
      %v5125 = vsub.s32 127, %v4961
      %v5126 = vsub.s32 127, %v4963
      %v5127 = vsub.s32 127, %v4965
      %v5128 = vsub.s32 127, %v4967
      %v5129 = vsub.s32 127, %v4969
      %v5130 = vsub.s32 127, %v4971
      %v5131 = vsub.s32 127, %v4973
      %v5132 = vsub.s32 127, %v4975
      %v5133 = vsub.s32 127, %v4977
      %v5134 = vsub.s32 127, %v4979
      %v5135 = vsub.s32 127, %v4981
      %v5136 = vsub.s32 127, %v4983
      %v5137 = vsub.s32 127, %v4985
      %v5138 = vsub.s32 127, %v4987
      %v5139 = vsub.s32 127, %v4989
      %v5140 = vsub.s32 127, %v4991
      %v5141 = vsub.s32 127, %v4993
      %v5142 = vsub.s32 127, %v4995
      %v5143 = vsub.s32 127, %v4997
      %v5144 = vsub.s32 127, %v4999
      %v5145 = vsub.s32 127, %v5001
      %v5146 = vsub.s32 127, %v5003
      %v5147 = vsub.s32 127, %v5005
      %v5148 = vsub.s32 127, %v5007
      %v5149 = vsub.s32 127, %v5009
      %v5150 = vsub.s32 127, %v5011
      %v5151 = vsub.s32 127, %v5013
      %v5152 = vsub.s32 127, %v5015
      %v5153 = vsub.s32 127, %v5017
      %v5154 = vsub.s32 127, %v5019
      %v5155 = vsub.s32 127, %v5021
      %v5156 = vsub.s32 127, %v5023
      %v5157 = vsub.s32 127, %v5025
      %v5158 = vsub.s32 127, %v5027
      %v5159 = vsub.s32 127, %v5029
      %v5160 = vsub.s32 127, %v5031
      %v5161 = vsub.s32 127, %v5033
      %v5162 = vshll.u32 %v5034, 23
      %v5163 = vshll.u32 %v5035, 23
      %v5164 = vshll.u32 %v5036, 23
      %v5165 = vshll.u32 %v5037, 23
      %v5166 = vshll.u32 %v5038, 23
      %v5167 = vshll.u32 %v5039, 23
      %v5168 = vshll.u32 %v5040, 23
      %v5169 = vshll.u32 %v5041, 23
      %v5170 = vshll.u32 %v5042, 23
      %v5171 = vshll.u32 %v5043, 23
      %v5172 = vshll.u32 %v5044, 23
      %v5173 = vshll.u32 %v5045, 23
      %v5174 = vshll.u32 %v5046, 23
      %v5175 = vshll.u32 %v5047, 23
      %v5176 = vshll.u32 %v5048, 23
      %v5177 = vshll.u32 %v5049, 23
      %v5178 = vshll.u32 %v5050, 23
      %v5179 = vshll.u32 %v5051, 23
      %v5180 = vshll.u32 %v5052, 23
      %v5181 = vshll.u32 %v5053, 23
      %v5182 = vshll.u32 %v5054, 23
      %v5183 = vshll.u32 %v5055, 23
      %v5184 = vshll.u32 %v5056, 23
      %v5185 = vshll.u32 %v5057, 23
      %v5186 = vshll.u32 %v5058, 23
      %v5187 = vshll.u32 %v5059, 23
      %v5188 = vshll.u32 %v5060, 23
      %v5189 = vshll.u32 %v5061, 23
      %v5190 = vshll.u32 %v5062, 23
      %v5191 = vshll.u32 %v5063, 23
      %v5192 = vshll.u32 %v5064, 23
      %v5193 = vshll.u32 %v5065, 23
      %v5194 = vshll.u32 %v5066, 23
      %v5195 = vshll.u32 %v5067, 23
      %v5196 = vshll.u32 %v5068, 23
      %v5197 = vshll.u32 %v5069, 23
      %v5198 = vshll.u32 %v5070, 23
      %v5199 = vshll.u32 %v5071, 23
      %v5200 = vshll.u32 %v5072, 23
      %v5201 = vshll.u32 %v5073, 23
      %v5202 = vshll.u32 %v5074, 23
      %v5203 = vshll.u32 %v5075, 23
      %v5204 = vshll.u32 %v5076, 23
      %v5205 = vshll.u32 %v5077, 23
      %v5206 = vshll.u32 %v5078, 23
      %v5207 = vshll.u32 %v5079, 23
      %v5208 = vshll.u32 %v5080, 23
      %v5209 = vshll.u32 %v5081, 23
      %v5210 = vshll.u32 %v5082, 23
      %v5211 = vshll.u32 %v5083, 23
      %v5212 = vshll.u32 %v5084, 23
      %v5213 = vshll.u32 %v5085, 23
      %v5214 = vshll.u32 %v5086, 23
      %v5215 = vshll.u32 %v5087, 23
      %v5216 = vshll.u32 %v5088, 23
      %v5217 = vshll.u32 %v5089, 23
      %v5218 = vshll.u32 %v5090, 23
      %v5219 = vshll.u32 %v5091, 23
      %v5220 = vshll.u32 %v5092, 23
      %v5221 = vshll.u32 %v5093, 23
      %v5222 = vshll.u32 %v5094, 23
      %v5223 = vshll.u32 %v5095, 23
      %v5224 = vshll.u32 %v5096, 23
      %v5225 = vshll.u32 %v5097, 23
      %v5226 = vshll.u32 %v5098, 23
      %v5227 = vshll.u32 %v5099, 23
      %v5228 = vshll.u32 %v5100, 23
      %v5229 = vshll.u32 %v5101, 23
      %v5230 = vshll.u32 %v5102, 23
      %v5231 = vshll.u32 %v5103, 23
      %v5232 = vshll.u32 %v5104, 23
      %v5233 = vshll.u32 %v5105, 23
      %v5234 = vshll.u32 %v5106, 23
      %v5235 = vshll.u32 %v5107, 23
      %v5236 = vshll.u32 %v5108, 23
      %v5237 = vshll.u32 %v5109, 23
      %v5238 = vshll.u32 %v5110, 23
      %v5239 = vshll.u32 %v5111, 23
      %v5240 = vshll.u32 %v5112, 23
      %v5241 = vshll.u32 %v5113, 23
      %v5242 = vshll.u32 %v5114, 23
      %v5243 = vshll.u32 %v5115, 23
      %v5244 = vshll.u32 %v5116, 23
      %v5245 = vshll.u32 %v5117, 23
      %v5246 = vshll.u32 %v5118, 23
      %v5247 = vshll.u32 %v5119, 23
      %v5248 = vshll.u32 %v5120, 23
      %v5249 = vshll.u32 %v5121, 23
      %v5250 = vshll.u32 %v5122, 23
      %v5251 = vshll.u32 %v5123, 23
      %v5252 = vshll.u32 %v5124, 23
      %v5253 = vshll.u32 %v5125, 23
      %v5254 = vshll.u32 %v5126, 23
      %v5255 = vshll.u32 %v5127, 23
      %v5256 = vshll.u32 %v5128, 23
      %v5257 = vshll.u32 %v5129, 23
      %v5258 = vshll.u32 %v5130, 23
      %v5259 = vshll.u32 %v5131, 23
      %v5260 = vshll.u32 %v5132, 23
      %v5261 = vshll.u32 %v5133, 23
      %v5262 = vshll.u32 %v5134, 23
      %v5263 = vshll.u32 %v5135, 23
      %v5264 = vshll.u32 %v5136, 23
      %v5265 = vshll.u32 %v5137, 23
      %v5266 = vshll.u32 %v5138, 23
      %v5267 = vshll.u32 %v5139, 23
      %v5268 = vshll.u32 %v5140, 23
      %v5269 = vshll.u32 %v5141, 23
      %v5270 = vshll.u32 %v5142, 23
      %v5271 = vshll.u32 %v5143, 23
      %v5272 = vshll.u32 %v5144, 23
      %v5273 = vshll.u32 %v5145, 23
      %v5274 = vshll.u32 %v5146, 23
      %v5275 = vshll.u32 %v5147, 23
      %v5276 = vshll.u32 %v5148, 23
      %v5277 = vshll.u32 %v5149, 23
      %v5278 = vshll.u32 %v5150, 23
      %v5279 = vshll.u32 %v5151, 23
      %v5280 = vshll.u32 %v5152, 23
      %v5281 = vshll.u32 %v5153, 23
      %v5282 = vshll.u32 %v5154, 23
      %v5283 = vshll.u32 %v5155, 23
      %v5284 = vshll.u32 %v5156, 23
      %v5285 = vshll.u32 %v5157, 23
      %v5286 = vshll.u32 %v5158, 23
      %v5287 = vshll.u32 %v5159, 23
      %v5288 = vshll.u32 %v5160, 23
      %v5289 = vshll.u32 %v5161, 23
      %v5418 = vmul.f32 %v3116, %v5162
      %v5419 = vmul.f32 %v3119, %v5163
      %v5420 = vmul.f32 %v3122, %v5164
      %v5421 = vmul.f32 %v3125, %v5165
      %v5422 = vmul.f32 %v3128, %v5166
      %v5423 = vmul.f32 %v3131, %v5167
      %v5424 = vmul.f32 %v3134, %v5168
      %v5425 = vmul.f32 %v3137, %v5169
      %v5426 = vmul.f32 %v3140, %v5170
      %v5427 = vmul.f32 %v3143, %v5171
      %v5428 = vmul.f32 %v3146, %v5172
      %v5429 = vmul.f32 %v3149, %v5173
      %v5430 = vmul.f32 %v3152, %v5174
      %v5431 = vmul.f32 %v3155, %v5175
      %v5432 = vmul.f32 %v3158, %v5176
      %v5433 = vmul.f32 %v3161, %v5177
      %v5434 = vmul.f32 %v3164, %v5178
      %v5435 = vmul.f32 %v3167, %v5179
      %v5436 = vmul.f32 %v3170, %v5180
      %v5437 = vmul.f32 %v3173, %v5181
      %v5438 = vmul.f32 %v3176, %v5182
      %v5439 = vmul.f32 %v3179, %v5183
      %v5440 = vmul.f32 %v3182, %v5184
      %v5441 = vmul.f32 %v3185, %v5185
      %v5442 = vmul.f32 %v3188, %v5186
      %v5443 = vmul.f32 %v3191, %v5187
      %v5444 = vmul.f32 %v3194, %v5188
      %v5445 = vmul.f32 %v3197, %v5189
      %v5446 = vmul.f32 %v3200, %v5190
      %v5447 = vmul.f32 %v3203, %v5191
      %v5448 = vmul.f32 %v3206, %v5192
      %v5449 = vmul.f32 %v3209, %v5193
      %v5450 = vmul.f32 %v3212, %v5194
      %v5451 = vmul.f32 %v3215, %v5195
      %v5452 = vmul.f32 %v3218, %v5196
      %v5453 = vmul.f32 %v3221, %v5197
      %v5454 = vmul.f32 %v3224, %v5198
      %v5455 = vmul.f32 %v3227, %v5199
      %v5456 = vmul.f32 %v3230, %v5200
      %v5457 = vmul.f32 %v3233, %v5201
      %v5458 = vmul.f32 %v3236, %v5202
      %v5459 = vmul.f32 %v3239, %v5203
      %v5460 = vmul.f32 %v3242, %v5204
      %v5461 = vmul.f32 %v3245, %v5205
      %v5462 = vmul.f32 %v3248, %v5206
      %v5463 = vmul.f32 %v3251, %v5207
      %v5464 = vmul.f32 %v3254, %v5208
      %v5465 = vmul.f32 %v3257, %v5209
      %v5466 = vmul.f32 %v3260, %v5210
      %v5467 = vmul.f32 %v3263, %v5211
      %v5468 = vmul.f32 %v3266, %v5212
      %v5469 = vmul.f32 %v3269, %v5213
      %v5470 = vmul.f32 %v3272, %v5214
      %v5471 = vmul.f32 %v3275, %v5215
      %v5472 = vmul.f32 %v3278, %v5216
      %v5473 = vmul.f32 %v3281, %v5217
      %v5474 = vmul.f32 %v3284, %v5218
      %v5475 = vmul.f32 %v3287, %v5219
      %v5476 = vmul.f32 %v3290, %v5220
      %v5477 = vmul.f32 %v3293, %v5221
      %v5478 = vmul.f32 %v3296, %v5222
      %v5479 = vmul.f32 %v3299, %v5223
      %v5480 = vmul.f32 %v3302, %v5224
      %v5481 = vmul.f32 %v3305, %v5225
      %v5482 = vmul.f32 %v3308, %v5226
      %v5483 = vmul.f32 %v3311, %v5227
      %v5484 = vmul.f32 %v3314, %v5228
      %v5485 = vmul.f32 %v3317, %v5229
      %v5486 = vmul.f32 %v3320, %v5230
      %v5487 = vmul.f32 %v3323, %v5231
      %v5488 = vmul.f32 %v3326, %v5232
      %v5489 = vmul.f32 %v3329, %v5233
      %v5490 = vmul.f32 %v3332, %v5234
      %v5491 = vmul.f32 %v3335, %v5235
      %v5492 = vmul.f32 %v3338, %v5236
      %v5493 = vmul.f32 %v3341, %v5237
      %v5494 = vmul.f32 %v3344, %v5238
      %v5495 = vmul.f32 %v3347, %v5239
      %v5496 = vmul.f32 %v3350, %v5240
      %v5497 = vmul.f32 %v3353, %v5241
      %v5498 = vmul.f32 %v3356, %v5242
      %v5499 = vmul.f32 %v3359, %v5243
      %v5500 = vmul.f32 %v3362, %v5244
      %v5501 = vmul.f32 %v3365, %v5245
      %v5502 = vmul.f32 %v3368, %v5246
      %v5503 = vmul.f32 %v3371, %v5247
      %v5504 = vmul.f32 %v3374, %v5248
      %v5505 = vmul.f32 %v3377, %v5249
      %v5506 = vmul.f32 %v3380, %v5250
      %v5507 = vmul.f32 %v3383, %v5251
      %v5508 = vmul.f32 %v3386, %v5252
      %v5509 = vmul.f32 %v3389, %v5253
      %v5510 = vmul.f32 %v3392, %v5254
      %v5511 = vmul.f32 %v3395, %v5255
      %v5512 = vmul.f32 %v3398, %v5256
      %v5513 = vmul.f32 %v3401, %v5257
      %v5514 = vmul.f32 %v3404, %v5258
      %v5515 = vmul.f32 %v3407, %v5259
      %v5516 = vmul.f32 %v3410, %v5260
      %v5517 = vmul.f32 %v3413, %v5261
      %v5518 = vmul.f32 %v3416, %v5262
      %v5519 = vmul.f32 %v3419, %v5263
      %v5520 = vmul.f32 %v3422, %v5264
      %v5521 = vmul.f32 %v3425, %v5265
      %v5522 = vmul.f32 %v3428, %v5266
      %v5523 = vmul.f32 %v3431, %v5267
      %v5524 = vmul.f32 %v3434, %v5268
      %v5525 = vmul.f32 %v3437, %v5269
      %v5526 = vmul.f32 %v3440, %v5270
      %v5527 = vmul.f32 %v3443, %v5271
      %v5528 = vmul.f32 %v3446, %v5272
      %v5529 = vmul.f32 %v3449, %v5273
      %v5530 = vmul.f32 %v3452, %v5274
      %v5531 = vmul.f32 %v3455, %v5275
      %v5532 = vmul.f32 %v3458, %v5276
      %v5533 = vmul.f32 %v3461, %v5277
      %v5534 = vmul.f32 %v3464, %v5278
      %v5535 = vmul.f32 %v3467, %v5279
      %v5536 = vmul.f32 %v3470, %v5280
      %v5537 = vmul.f32 %v3473, %v5281
      %v5538 = vmul.f32 %v3476, %v5282
      %v5539 = vmul.f32 %v3479, %v5283
      %v5540 = vmul.f32 %v3482, %v5284
      %v5541 = vmul.f32 %v3485, %v5285
      %v5542 = vmul.f32 %v3488, %v5286
      %v5543 = vmul.f32 %v3491, %v5287
      %v5544 = vmul.f32 %v3494, %v5288
      %v5545 = vmul.f32 %v3497, %v5289
      %vm5546 = vcmask 7168
      %5547 = vst.msk [vmem:[%s145] sm:$0xff] %vm5546, %v5418
      %5548 = vst.msk [vmem:[%s145 + $0x8] sm:$0xff] %vm5546, %v5419
      %5549 = vst.msk [vmem:[%s145 + $0x10] sm:$0xff] %vm5546, %v5420
      %5550 = vst.msk [vmem:[%s145 + $0x18] sm:$0xff] %vm5546, %v5421
      %5551 = vst.msk [vmem:[%s145 + $0x20] sm:$0xff] %vm5546, %v5422
      %5552 = vst.msk [vmem:[%s145 + $0x28] sm:$0xff] %vm5546, %v5423
      %5553 = vst.msk [vmem:[%s145 + $0x30] sm:$0xff] %vm5546, %v5424
      %5554 = vst.msk [vmem:[%s145 + $0x38] sm:$0xff] %vm5546, %v5425
      %5555 = vst.msk [vmem:[%s145 + $0x40] sm:$0xff] %vm5546, %v5426
      %5556 = vst.msk [vmem:[%s145 + $0x48] sm:$0xff] %vm5546, %v5427
      %5557 = vst.msk [vmem:[%s145 + $0x50] sm:$0xff] %vm5546, %v5428
      %5558 = vst.msk [vmem:[%s145 + $0x58] sm:$0xff] %vm5546, %v5429
      %5559 = vst.msk [vmem:[%s145 + $0x60] sm:$0xff] %vm5546, %v5430
      %5560 = vst.msk [vmem:[%s145 + $0x68] sm:$0xff] %vm5546, %v5431
      %5561 = vst.msk [vmem:[%s145 + $0x70] sm:$0xff] %vm5546, %v5432
      %5562 = vst.msk [vmem:[%s145 + $0x78] sm:$0xff] %vm5546, %v5433
      %5563 = vst.msk [vmem:[%s145 + $0x80] sm:$0xff] %vm5546, %v5434
      %5564 = vst.msk [vmem:[%s145 + $0x88] sm:$0xff] %vm5546, %v5435
      %5565 = vst.msk [vmem:[%s145 + $0x90] sm:$0xff] %vm5546, %v5436
      %5566 = vst.msk [vmem:[%s145 + $0x98] sm:$0xff] %vm5546, %v5437
      %5567 = vst.msk [vmem:[%s145 + $0xa0] sm:$0xff] %vm5546, %v5438
      %5568 = vst.msk [vmem:[%s145 + $0xa8] sm:$0xff] %vm5546, %v5439
      %5569 = vst.msk [vmem:[%s145 + $0xb0] sm:$0xff] %vm5546, %v5440
      %5570 = vst.msk [vmem:[%s145 + $0xb8] sm:$0xff] %vm5546, %v5441
      %5571 = vst.msk [vmem:[%s145 + $0xc0] sm:$0xff] %vm5546, %v5442
      %5572 = vst.msk [vmem:[%s145 + $0xc8] sm:$0xff] %vm5546, %v5443
      %5573 = vst.msk [vmem:[%s145 + $0xd0] sm:$0xff] %vm5546, %v5444
      %5574 = vst.msk [vmem:[%s145 + $0xd8] sm:$0xff] %vm5546, %v5445
      %5575 = vst.msk [vmem:[%s145 + $0xe0] sm:$0xff] %vm5546, %v5446
      %5576 = vst.msk [vmem:[%s145 + $0xe8] sm:$0xff] %vm5546, %v5447
      %5577 = vst.msk [vmem:[%s145 + $0xf0] sm:$0xff] %vm5546, %v5448
      %5578 = vst.msk [vmem:[%s145 + $0xf8] sm:$0xff] %vm5546, %v5449
      %5579 = vst.msk [vmem:[%s145 + $0x100] sm:$0xff] %vm5546, %v5450
      %5580 = vst.msk [vmem:[%s145 + $0x108] sm:$0xff] %vm5546, %v5451
      %5581 = vst.msk [vmem:[%s145 + $0x110] sm:$0xff] %vm5546, %v5452
      %5582 = vst.msk [vmem:[%s145 + $0x118] sm:$0xff] %vm5546, %v5453
      %5583 = vst.msk [vmem:[%s145 + $0x120] sm:$0xff] %vm5546, %v5454
      %5584 = vst.msk [vmem:[%s145 + $0x128] sm:$0xff] %vm5546, %v5455
      %5585 = vst.msk [vmem:[%s145 + $0x130] sm:$0xff] %vm5546, %v5456
      %5586 = vst.msk [vmem:[%s145 + $0x138] sm:$0xff] %vm5546, %v5457
      %5587 = vst.msk [vmem:[%s145 + $0x140] sm:$0xff] %vm5546, %v5458
      %5588 = vst.msk [vmem:[%s145 + $0x148] sm:$0xff] %vm5546, %v5459
      %5589 = vst.msk [vmem:[%s145 + $0x150] sm:$0xff] %vm5546, %v5460
      %5590 = vst.msk [vmem:[%s145 + $0x158] sm:$0xff] %vm5546, %v5461
      %5591 = vst.msk [vmem:[%s145 + $0x160] sm:$0xff] %vm5546, %v5462
      %5592 = vst.msk [vmem:[%s145 + $0x168] sm:$0xff] %vm5546, %v5463
      %5593 = vst.msk [vmem:[%s145 + $0x170] sm:$0xff] %vm5546, %v5464
      %5594 = vst.msk [vmem:[%s145 + $0x178] sm:$0xff] %vm5546, %v5465
      %5595 = vst.msk [vmem:[%s145 + $0x180] sm:$0xff] %vm5546, %v5466
      %5596 = vst.msk [vmem:[%s145 + $0x188] sm:$0xff] %vm5546, %v5467
      %5597 = vst.msk [vmem:[%s145 + $0x190] sm:$0xff] %vm5546, %v5468
      %5598 = vst.msk [vmem:[%s145 + $0x198] sm:$0xff] %vm5546, %v5469
      %5599 = vst.msk [vmem:[%s145 + $0x1a0] sm:$0xff] %vm5546, %v5470
      %5600 = vst.msk [vmem:[%s145 + $0x1a8] sm:$0xff] %vm5546, %v5471
      %5601 = vst.msk [vmem:[%s145 + $0x1b0] sm:$0xff] %vm5546, %v5472
      %5602 = vst.msk [vmem:[%s145 + $0x1b8] sm:$0xff] %vm5546, %v5473
      %5603 = vst.msk [vmem:[%s145 + $0x1c0] sm:$0xff] %vm5546, %v5474
      %5604 = vst.msk [vmem:[%s145 + $0x1c8] sm:$0xff] %vm5546, %v5475
      %5605 = vst.msk [vmem:[%s145 + $0x1d0] sm:$0xff] %vm5546, %v5476
      %5606 = vst.msk [vmem:[%s145 + $0x1d8] sm:$0xff] %vm5546, %v5477
      %5607 = vst.msk [vmem:[%s145 + $0x1e0] sm:$0xff] %vm5546, %v5478
      %5608 = vst.msk [vmem:[%s145 + $0x1e8] sm:$0xff] %vm5546, %v5479
      %5609 = vst.msk [vmem:[%s145 + $0x1f0] sm:$0xff] %vm5546, %v5480
      %5610 = vst.msk [vmem:[%s145 + $0x1f8] sm:$0xff] %vm5546, %v5481
      %5611 = vst.msk [vmem:[%s145 + $0x200] sm:$0xff] %vm5546, %v5482
      %5612 = vst.msk [vmem:[%s145 + $0x208] sm:$0xff] %vm5546, %v5483
      %5613 = vst.msk [vmem:[%s145 + $0x210] sm:$0xff] %vm5546, %v5484
      %5614 = vst.msk [vmem:[%s145 + $0x218] sm:$0xff] %vm5546, %v5485
      %5615 = vst.msk [vmem:[%s145 + $0x220] sm:$0xff] %vm5546, %v5486
      %5616 = vst.msk [vmem:[%s145 + $0x228] sm:$0xff] %vm5546, %v5487
      %5617 = vst.msk [vmem:[%s145 + $0x230] sm:$0xff] %vm5546, %v5488
      %5618 = vst.msk [vmem:[%s145 + $0x238] sm:$0xff] %vm5546, %v5489
      %5619 = vst.msk [vmem:[%s145 + $0x240] sm:$0xff] %vm5546, %v5490
      %5620 = vst.msk [vmem:[%s145 + $0x248] sm:$0xff] %vm5546, %v5491
      %5621 = vst.msk [vmem:[%s145 + $0x250] sm:$0xff] %vm5546, %v5492
      %5622 = vst.msk [vmem:[%s145 + $0x258] sm:$0xff] %vm5546, %v5493
      %5623 = vst.msk [vmem:[%s145 + $0x260] sm:$0xff] %vm5546, %v5494
      %5624 = vst.msk [vmem:[%s145 + $0x268] sm:$0xff] %vm5546, %v5495
      %5625 = vst.msk [vmem:[%s145 + $0x270] sm:$0xff] %vm5546, %v5496
      %5626 = vst.msk [vmem:[%s145 + $0x278] sm:$0xff] %vm5546, %v5497
      %5627 = vst.msk [vmem:[%s145 + $0x280] sm:$0xff] %vm5546, %v5498
      %5628 = vst.msk [vmem:[%s145 + $0x288] sm:$0xff] %vm5546, %v5499
      %5629 = vst.msk [vmem:[%s145 + $0x290] sm:$0xff] %vm5546, %v5500
      %5630 = vst.msk [vmem:[%s145 + $0x298] sm:$0xff] %vm5546, %v5501
      %5631 = vst.msk [vmem:[%s145 + $0x2a0] sm:$0xff] %vm5546, %v5502
      %5632 = vst.msk [vmem:[%s145 + $0x2a8] sm:$0xff] %vm5546, %v5503
      %5633 = vst.msk [vmem:[%s145 + $0x2b0] sm:$0xff] %vm5546, %v5504
      %5634 = vst.msk [vmem:[%s145 + $0x2b8] sm:$0xff] %vm5546, %v5505
      %5635 = vst.msk [vmem:[%s145 + $0x2c0] sm:$0xff] %vm5546, %v5506
      %5636 = vst.msk [vmem:[%s145 + $0x2c8] sm:$0xff] %vm5546, %v5507
      %5637 = vst.msk [vmem:[%s145 + $0x2d0] sm:$0xff] %vm5546, %v5508
      %5638 = vst.msk [vmem:[%s145 + $0x2d8] sm:$0xff] %vm5546, %v5509
      %5639 = vst.msk [vmem:[%s145 + $0x2e0] sm:$0xff] %vm5546, %v5510
      %5640 = vst.msk [vmem:[%s145 + $0x2e8] sm:$0xff] %vm5546, %v5511
      %5641 = vst.msk [vmem:[%s145 + $0x2f0] sm:$0xff] %vm5546, %v5512
      %5642 = vst.msk [vmem:[%s145 + $0x2f8] sm:$0xff] %vm5546, %v5513
      %5643 = vst.msk [vmem:[%s145 + $0x300] sm:$0xff] %vm5546, %v5514
      %5644 = vst.msk [vmem:[%s145 + $0x308] sm:$0xff] %vm5546, %v5515
      %5645 = vst.msk [vmem:[%s145 + $0x310] sm:$0xff] %vm5546, %v5516
      %5646 = vst.msk [vmem:[%s145 + $0x318] sm:$0xff] %vm5546, %v5517
      %5647 = vst.msk [vmem:[%s145 + $0x320] sm:$0xff] %vm5546, %v5518
      %5648 = vst.msk [vmem:[%s145 + $0x328] sm:$0xff] %vm5546, %v5519
      %5649 = vst.msk [vmem:[%s145 + $0x330] sm:$0xff] %vm5546, %v5520
      %5650 = vst.msk [vmem:[%s145 + $0x338] sm:$0xff] %vm5546, %v5521
      %5651 = vst.msk [vmem:[%s145 + $0x340] sm:$0xff] %vm5546, %v5522
      %5652 = vst.msk [vmem:[%s145 + $0x348] sm:$0xff] %vm5546, %v5523
      %5653 = vst.msk [vmem:[%s145 + $0x350] sm:$0xff] %vm5546, %v5524
      %5654 = vst.msk [vmem:[%s145 + $0x358] sm:$0xff] %vm5546, %v5525
      %5655 = vst.msk [vmem:[%s145 + $0x360] sm:$0xff] %vm5546, %v5526
      %5656 = vst.msk [vmem:[%s145 + $0x368] sm:$0xff] %vm5546, %v5527
      %5657 = vst.msk [vmem:[%s145 + $0x370] sm:$0xff] %vm5546, %v5528
      %5658 = vst.msk [vmem:[%s145 + $0x378] sm:$0xff] %vm5546, %v5529
      %5659 = vst.msk [vmem:[%s145 + $0x380] sm:$0xff] %vm5546, %v5530
      %5660 = vst.msk [vmem:[%s145 + $0x388] sm:$0xff] %vm5546, %v5531
      %5661 = vst.msk [vmem:[%s145 + $0x390] sm:$0xff] %vm5546, %v5532
      %5662 = vst.msk [vmem:[%s145 + $0x398] sm:$0xff] %vm5546, %v5533
      %5663 = vst.msk [vmem:[%s145 + $0x3a0] sm:$0xff] %vm5546, %v5534
      %5664 = vst.msk [vmem:[%s145 + $0x3a8] sm:$0xff] %vm5546, %v5535
      %5665 = vst.msk [vmem:[%s145 + $0x3b0] sm:$0xff] %vm5546, %v5536
      %5666 = vst.msk [vmem:[%s145 + $0x3b8] sm:$0xff] %vm5546, %v5537
      %5667 = vst.msk [vmem:[%s145 + $0x3c0] sm:$0xff] %vm5546, %v5538
      %5668 = vst.msk [vmem:[%s145 + $0x3c8] sm:$0xff] %vm5546, %v5539
      %5669 = vst.msk [vmem:[%s145 + $0x3d0] sm:$0xff] %vm5546, %v5540
      %5670 = vst.msk [vmem:[%s145 + $0x3d8] sm:$0xff] %vm5546, %v5541
      %5671 = vst.msk [vmem:[%s145 + $0x3e0] sm:$0xff] %vm5546, %v5542
      %5672 = vst.msk [vmem:[%s145 + $0x3e8] sm:$0xff] %vm5546, %v5543
      %5673 = vst.msk [vmem:[%s145 + $0x3f0] sm:$0xff] %vm5546, %v5544
      %5674 = vst.msk [vmem:[%s145 + $0x3f8] sm:$0xff] %vm5546, %v5545
      %s5675 = smul.u32 128, %s13
      %p5676 = scmp.lt.s32.totalorder %s5675, 255
      %s5677 = scalar_select %p5676, %s5675, 255
      %s5678 = smul.addr %s5677, 8
      %s5679 = scalar_lea.vmem %s2, %s5678
      // Predicated region
      $region29: #{fixed_hidden_mlp_batched.1} parent=27 // pred_check
        %p5680 = pneg %p78
      $region30: #{fixed_hidden_mlp_batched.1} parent=27 // pred_check_branch
        %5682 = sbr.rel (%p5680) target = $region32
      $region31: #{fixed_hidden_mlp_batched.1} parent=27 // pred_region
        %s5683 = smul.u32 128, %s13
      $region32: #{fixed_hidden_mlp_batched.1} parent=27 // pred_fallthru
        _
    $region28: #{fixed_hidden_mlp_batched.1} parent=5 // pred_fallthru
      _
    %p5684 = scmp.le.s32.totalorder 2, %s8
    // Predicated region
    $region33: #{fixed_hidden_mlp_batched.1} parent=5 // pred_check
      %p5685 = pneg %p5684
    $region34: #{fixed_hidden_mlp_batched.1} parent=5 // pred_check_branch
      %5687 = sbr.rel (%p5685) target = $region36
    $region35: #{fixed_hidden_mlp_batched.1} parent=5 // pred_region
      %s5688 = ssub.s32 %s8, 2
      // Predicated region
      $region37: #{fixed_hidden_mlp_batched.1} parent=35 // pred_check
        %p5689 = pneg %p84
      $region38: #{fixed_hidden_mlp_batched.1} parent=35 // pred_check_branch
        %5691 = sbr.rel (%p5689) target = $region40
      $region39: #{fixed_hidden_mlp_batched.1} parent=35 // pred_region
        %s5692 = smul.u32 128, %s14
        %p5693 = scmp.lt.s32.totalorder %s5692, 255
        %s5694 = scalar_select %p5693, %s5692, 255
        %s5695 = smul.addr %s5694, 8
        %s5696 = scalar_lea.vmem %s2, %s5695
      $region40: #{fixed_hidden_mlp_batched.1} parent=35 // pred_fallthru
        _
    $region36: #{fixed_hidden_mlp_batched.1} parent=5 // pred_fallthru
      _
  $region6: #{fixed_hidden_mlp_batched.1} parent=0 // loop_footer
    %s12 = sadd.s32 1, %s8
  $region7: #{fixed_hidden_mlp_batched.1} parent=0 // loop_footer_branch
    %7 = sbr.rel target = $region3
  $region8: #{fixed_hidden_mlp_batched.1} parent=0 // loop_exit
    _

</llo_original>
